<compile_context>
chip_gen: v6e
topology: v6e:2x2x1
jax: 0.10.0
libtpu: 0.0.40
codegen_flags: <defaults>
</compile_context>

<pallas_src>
import functools

import jax
import jax.numpy as jnp
from jax import lax
from jax.experimental import pallas as pl
from jax.experimental.pallas import tpu as pltpu


# ----------------------------- fused Pallas kernel -----------------------------

def _hg_block_kernel(*refs, layer_num, identity, H, W):
    # refs = [x, (w_l, b_l) * layer_num, agg_w, agg_b, ese_w, ese_b, out, pad_scratch]
    x_ref = refs[0]
    layer_refs = refs[1:1 + 2 * layer_num]
    agg_w_ref, agg_b_ref, ese_w_ref, ese_b_ref = refs[1 + 2 * layer_num:5 + 2 * layer_num]
    o_ref = refs[5 + 2 * layer_num]
    pad_ref = refs[6 + 2 * layer_num]          # (NB, H+2, W+2, Cmax) f32 VMEM scratch

    NB, _, _, Cin = x_ref.shape
    M = NB * H * W
    bf16 = jnp.bfloat16

    x = x_ref[...]                              # (NB, H, W, Cin) f32

    # Zero the halo ring once per grid step, then write the interior with the input.
    pad_ref[...] = jnp.zeros(pad_ref.shape, pad_ref.dtype)
    pad_ref[:, 1:H + 1, 1:W + 1, :Cin] = x

    # Channel segments feeding the 1x1 aggregation conv (kept in VMEM, no HBM concat).
    segs = [x.reshape(M, Cin).astype(bf16)]

    c_prev = Cin
    for l in range(layer_num):
        w_ref = layer_refs[2 * l]               # (9*c_prev, Cmid)  bf16 (BN folded)
        b_ref = layer_refs[2 * l + 1]           # (1, Cmid)         f32
        Cmid = w_ref.shape[1]

        # im2col: one (M, 9*c_prev) patch matrix -> single MXU dot per layer.
        xp = pad_ref[...]                       # (NB, H+2, W+2, Cmax) f32
        taps = []
        for dy in range(3):
            for dx in range(3):
                taps.append(xp[:, dy:dy + H, dx:dx + W, :c_prev].reshape(M, c_prev))
        patches = jnp.concatenate(taps, axis=-1).astype(bf16)   # (M, 9*c_prev)

        h = jnp.dot(patches, w_ref[...], preferred_element_type=jnp.float32)
        h = jnp.maximum(h + b_ref[...], 0.0)    # (M, Cmid) f32  (bias + ReLU fused)

        segs.append(h.astype(bf16))
        if l + 1 < layer_num:                   # re-pad for the next 3x3 layer
            pad_ref[:, 1:H + 1, 1:W + 1, :Cmid] = h.reshape(NB, H, W, Cmid)
        c_prev = Cmid

    # 1x1 aggregation ConvBNAct over the VMEM-resident channel concat: one K=Ctot dot.
    cat = jnp.concatenate(segs, axis=-1)        # (M, Ctot) bf16
    agg = jnp.dot(cat, agg_w_ref[...], preferred_element_type=jnp.float32)
    agg = jnp.maximum(agg + agg_b_ref[...], 0.0)   # (M, Cout) f32
    Cout = agg.shape[1]

    # ESE: per-sample global average pool, 1x1 conv + bias, sigmoid, channel rescale.
    agg3 = agg.reshape(NB, H * W, Cout)
    avg = jnp.mean(agg3, axis=1)                # (NB, Cout)
    att = jax.nn.sigmoid(
        jnp.dot(avg, ese_w_ref[...], preferred_element_type=jnp.float32) + ese_b_ref[...])
    y = agg3 * att[:, None, :]                  # (NB, H*W, Cout)
    if identity:                                # residual add (requires Cin == Cout)
        y = y + x.reshape(NB, H * W, Cin)
    o_ref[...] = y.reshape(NB, H, W, Cout).astype(o_ref.dtype)


# ----------------------------- wrapper -----------------------------

def hg_block_forward(x, params, *, identity=False, batch_tile=None):
    # x: (N, H, W, in_channels) NHWC, f32
    N, H, W, Cin = x.shape
    layer_num = len(params["layers"])
    HW = H * W

    # Merge batch elements per grid step so M = batch_tile * H * W ~ MXU-native rows.
    if batch_tile is None:
        batch_tile = 1
        for cand in range(1, N + 1):
            if N % cand == 0 and cand * HW <= 256:
                batch_tile = cand
    NB = batch_tile
    assert N % NB == 0

    bf16 = jnp.bfloat16
    inputs = [x]
    in_specs = [pl.BlockSpec((NB, H, W, Cin), lambda n: (n, 0, 0, 0))]

    cmax = Cin
    cprev = Cin
    for (w9, b) in params["layers"]:
        _, cin_l, cout_l = w9.shape
        assert cin_l == cprev
        w_flat = w9.reshape(9 * cin_l, cout_l).astype(bf16)   # (9*Cin, Cout), tap-major K
        inputs += [w_flat, b.reshape(1, cout_l)]
        in_specs += [pl.BlockSpec((9 * cin_l, cout_l), lambda n: (0, 0)),
                     pl.BlockSpec((1, cout_l), lambda n: (0, 0))]
        cmax = max(cmax, cout_l)
        cprev = cout_l

    agg_w = params["agg_w"].astype(bf16)
    Ctot, Cout = agg_w.shape
    inputs += [agg_w, params["agg_b"].reshape(1, Cout),
               params["ese_w"], params["ese_b"].reshape(1, Cout)]
    in_specs += [pl.BlockSpec((Ctot, Cout), lambda n: (0, 0)),
                 pl.BlockSpec((1, Cout), lambda n: (0, 0)),
                 pl.BlockSpec((Cout, Cout), lambda n: (0, 0)),
                 pl.BlockSpec((1, Cout), lambda n: (0, 0))]

    if identity:
        assert Cin == Cout, "identity residual requires in_channels == out_channels"

    kernel = functools.partial(_hg_block_kernel, layer_num=layer_num,
                               identity=identity, H=H, W=W)

    return pl.pallas_call(
        kernel,
        out_shape=jax.ShapeDtypeStruct((N, H, W, Cout), jnp.float32),
        grid=(N // NB,),
        in_specs=in_specs,
        out_specs=pl.BlockSpec((NB, H, W, Cout), lambda n: (n, 0, 0, 0)),
        scratch_shapes=[pltpu.VMEM((NB, H + 2, W + 2, cmax), jnp.float32)],
        compiler_params=pltpu.CompilerParams(dimension_semantics=("parallel",)),
    )(*inputs)


# ----------------------------- params (deterministic, BN folded) -----------------------------

_BN_EPS = 1e-5


def _fold_conv_bn(key, cin, cout, ksize):
    ks = jax.random.split(key, 5)
    w = jax.random.normal(ks[0], (cout, cin, ksize, ksize), jnp.float32) * 0.1   # torch (O,I,kH,kW)
    gamma = jax.random.uniform(ks[1], (cout,), jnp.float32, 0.8, 1.2)
    beta = jax.random.normal(ks[2], (cout,), jnp.float32) * 0.1
    mean = jax.random.normal(ks[3], (cout,), jnp.float32) * 0.1
    var = jax.random.uniform(ks[4], (cout,), jnp.float32, 0.5, 1.5)
    scale = gamma / jnp.sqrt(var + _BN_EPS)
    w_hwio = jnp.transpose(w, (2, 3, 1, 0)) * scale[None, None, None, :]         # (kH,kW,Cin,Cout)
    bias = beta - mean * scale
    return w_hwio, bias


def init_hg_block_params(key, in_c, mid_c, out_c, layer_num):
    keys = jax.random.split(key, layer_num + 2)
    layers = []
    cin = in_c
    for i in range(layer_num):
        w_hwio, b = _fold_conv_bn(keys[i], cin, mid_c, 3)
        layers.append((w_hwio.reshape(9, cin, mid_c), b))
        cin = mid_c
    total_c = in_c + layer_num * mid_c
    agg_hwio, agg_b = _fold_conv_bn(keys[layer_num], total_c, out_c, 1)
    agg_w = agg_hwio.reshape(total_c, out_c)
    ks = jax.random.split(keys[layer_num + 1], 2)
    ese_w_oihw = jax.random.normal(ks[0], (out_c, out_c, 1, 1), jnp.float32) * 0.1
    ese_b = jax.random.normal(ks[1], (out_c,), jnp.float32) * 0.1
    ese_w = jnp.transpose(ese_w_oihw[:, :, 0, 0], (1, 0))                         # (Cin, Cout)
    return {"layers": layers, "agg_w": agg_w, "agg_b": agg_b,
            "ese_w": ese_w, "ese_b": ese_b}


# ----------------------------- pure-JAX reference (same bf16-at-matmul rounding) -----------------------------

def hg_block_ref(x, params, *, identity=False):
    bf16 = jnp.bfloat16
    x_bf = x.astype(bf16)
    segs = [x_bf]
    h_bf = x_bf
    for (w9, b) in params["layers"]:
        cin, cout = w9.shape[1], w9.shape[2]
        w_hwio = w9.reshape(3, 3, cin, cout).astype(bf16)
        y = lax.conv_general_dilated(h_bf, w_hwio, (1, 1), "SAME",
                                     dimension_numbers=("NHWC", "HWIO", "NHWC"),
                                     preferred_element_type=jnp.float32)
        h = jnp.maximum(y + b, 0.0)
        h_bf = h.astype(bf16)
        segs.append(h_bf)
    cat = jnp.concatenate(segs, axis=-1)
    agg = jnp.einsum("nhwc,cd->nhwd", cat, params["agg_w"].astype(bf16),
                     preferred_element_type=jnp.float32)
    agg = jnp.maximum(agg + params["agg_b"], 0.0)
    avg = jnp.mean(agg, axis=(1, 2))                                              # (N, C)
    att = jax.nn.sigmoid(avg @ params["ese_w"] + params["ese_b"])                 # (N, C)
    out = agg * att[:, None, None, :]
    if identity:
        out = out + x
    return out


# ----------------------------- main -----------------------------

if __name__ == "__main__":
    key = jax.random.PRNGKey(0)
    k_x, k_p = jax.random.split(key)

    N, H, W = 2, 8, 8
    in_c, mid_c, out_c, layer_num = 16, 16, 16, 3
    use_identity = True                      # in_c == out_c, so the residual add is valid

    # PyTorch module input would be NCHW; transpose to the kernel's NHWC layout.
    x_nchw = jax.random.normal(k_x, (N, in_c, H, W), jnp.float32)
    x = jnp.transpose(x_nchw, (0, 2, 3, 1))

    params = init_hg_block_params(k_p, in_c, mid_c, out_c, layer_num)

    out = hg_block_forward(x, params, identity=use_identity)
    out = jax.block_until_ready(out)

    ref = hg_block_ref(x, params, identity=use_identity)
    err = float(jnp.max(jnp.abs(out - ref)))
    assert jnp.allclose(out, ref, atol=2e-3, rtol=2e-3), f"max abs err = {err}"

    print("KERNEL_OK")
</pallas_src>

<mosaic_0001>
module attributes {stable_mosaic.version = 11 : i64} {
  func.func @_hg_block_kernel(%arg0: i32, %arg1: memref<2x8x8x16xf32, #tpu.memory_space<vmem>>, %arg2: memref<144x16xbf16, #tpu.memory_space<vmem>>, %arg3: memref<1x16xf32, #tpu.memory_space<vmem>>, %arg4: memref<144x16xbf16, #tpu.memory_space<vmem>>, %arg5: memref<1x16xf32, #tpu.memory_space<vmem>>, %arg6: memref<144x16xbf16, #tpu.memory_space<vmem>>, %arg7: memref<1x16xf32, #tpu.memory_space<vmem>>, %arg8: memref<64x16xbf16, #tpu.memory_space<vmem>>, %arg9: memref<1x16xf32, #tpu.memory_space<vmem>>, %arg10: memref<16x16xf32, #tpu.memory_space<vmem>>, %arg11: memref<1x16xf32, #tpu.memory_space<vmem>>, %arg12: memref<2x8x8x16xf32, #tpu.memory_space<vmem>>, %arg13: memref<2x10x10x16xf32, #tpu.memory_space<vmem>>) attributes {dimension_semantics = [#tpu.dimension_semantics<parallel>], iteration_bounds = array<i64: 1>, scalar_prefetch = 0 : i64, scratch_operands = 1 : i64, tpu.core_type = #tpu.core_type<tc>, window_params = [{transform_indices = @transform_0, window_bounds = array<i64: 2, 8, 8, 16>}, {pipeline_mode = #tpu.pipeline_mode<synchronous>, transform_indices = @transform_1, window_bounds = array<i64: 144, 16>}, {pipeline_mode = #tpu.pipeline_mode<synchronous>, transform_indices = @transform_2, window_bounds = array<i64: 1, 16>}, {pipeline_mode = #tpu.pipeline_mode<synchronous>, transform_indices = @transform_3, window_bounds = array<i64: 144, 16>}, {pipeline_mode = #tpu.pipeline_mode<synchronous>, transform_indices = @transform_4, window_bounds = array<i64: 1, 16>}, {pipeline_mode = #tpu.pipeline_mode<synchronous>, transform_indices = @transform_5, window_bounds = array<i64: 144, 16>}, {pipeline_mode = #tpu.pipeline_mode<synchronous>, transform_indices = @transform_6, window_bounds = array<i64: 1, 16>}, {pipeline_mode = #tpu.pipeline_mode<synchronous>, transform_indices = @transform_7, window_bounds = array<i64: 64, 16>}, {pipeline_mode = #tpu.pipeline_mode<synchronous>, transform_indices = @transform_8, window_bounds = array<i64: 1, 16>}, {pipeline_mode = #tpu.pipeline_mode<synchronous>, transform_indices = @transform_9, window_bounds = array<i64: 16, 16>}, {pipeline_mode = #tpu.pipeline_mode<synchronous>, transform_indices = @transform_10, window_bounds = array<i64: 1, 16>}, {transform_indices = @transform_11, window_bounds = array<i64: 2, 8, 8, 16>}]} {
    %c0 = arith.constant 0 : index
    %c0_0 = arith.constant 0 : index
    %c0_1 = arith.constant 0 : index
    %c0_2 = arith.constant 0 : index
    %0 = vector.load %arg1[%c0, %c0_0, %c0_1, %c0_2] : memref<2x8x8x16xf32, #tpu.memory_space<vmem>>, vector<2x8x8x16xf32>
    %cst = arith.constant 0.000000e+00 : f32
    %1 = vector.broadcast %cst : f32 to vector<2x10x10x16xf32>
    %c0_3 = arith.constant 0 : index
    %c0_4 = arith.constant 0 : index
    %c0_5 = arith.constant 0 : index
    %c0_6 = arith.constant 0 : index
    %2 = vector.load %arg13[%c0_3, %c0_4, %c0_5, %c0_6] : memref<2x10x10x16xf32, #tpu.memory_space<vmem>>, vector<2x10x10x16xf32>
    tpu.vector_store %arg13[%c0_3, %c0_4, %c0_5, %c0_6], %1 {strides = array<i32>} : memref<2x10x10x16xf32, #tpu.memory_space<vmem>>, vector<2x10x10x16xf32>,
    %c0_7 = arith.constant 0 : index
    %c1 = arith.constant 1 : index
    %c1_8 = arith.constant 1 : index
    %c0_9 = arith.constant 0 : index
    %3 = vector.load %arg13[%c0_7, %c1, %c1_8, %c0_9] : memref<2x10x10x16xf32, #tpu.memory_space<vmem>>, vector<2x8x8x16xf32>
    tpu.vector_store %arg13[%c0_7, %c1, %c1_8, %c0_9], %0 {strides = array<i32>} : memref<2x10x10x16xf32, #tpu.memory_space<vmem>>, vector<2x8x8x16xf32>,
    %4 = vector.shape_cast %0 : vector<2x8x8x16xf32> to vector<128x16xf32>
    %5 = arith.truncf %4 : vector<128x16xf32> to vector<128x16xbf16>
    %c0_10 = arith.constant 0 : index
    %c0_11 = arith.constant 0 : index
    %c0_12 = arith.constant 0 : index
    %c0_13 = arith.constant 0 : index
    %6 = vector.load %arg13[%c0_10, %c0_11, %c0_12, %c0_13] : memref<2x10x10x16xf32, #tpu.memory_space<vmem>>, vector<2x10x10x16xf32>
    %7 = vector.extract_strided_slice %6 {offsets = [0, 0, 0, 0], sizes = [2, 8, 8, 16], strides = [1, 1, 1, 1]} : vector<2x10x10x16xf32> to vector<2x8x8x16xf32>
    %8 = vector.shape_cast %7 : vector<2x8x8x16xf32> to vector<128x16xf32>
    %9 = vector.extract_strided_slice %6 {offsets = [0, 0, 1, 0], sizes = [2, 8, 8, 16], strides = [1, 1, 1, 1]} : vector<2x10x10x16xf32> to vector<2x8x8x16xf32>
    %10 = vector.shape_cast %9 : vector<2x8x8x16xf32> to vector<128x16xf32>
    %11 = vector.extract_strided_slice %6 {offsets = [0, 0, 2, 0], sizes = [2, 8, 8, 16], strides = [1, 1, 1, 1]} : vector<2x10x10x16xf32> to vector<2x8x8x16xf32>
    %12 = vector.shape_cast %11 : vector<2x8x8x16xf32> to vector<128x16xf32>
    %13 = vector.extract_strided_slice %6 {offsets = [0, 1, 0, 0], sizes = [2, 8, 8, 16], strides = [1, 1, 1, 1]} : vector<2x10x10x16xf32> to vector<2x8x8x16xf32>
    %14 = vector.shape_cast %13 : vector<2x8x8x16xf32> to vector<128x16xf32>
    %15 = vector.extract_strided_slice %6 {offsets = [0, 1, 1, 0], sizes = [2, 8, 8, 16], strides = [1, 1, 1, 1]} : vector<2x10x10x16xf32> to vector<2x8x8x16xf32>
    %16 = vector.shape_cast %15 : vector<2x8x8x16xf32> to vector<128x16xf32>
    %17 = vector.extract_strided_slice %6 {offsets = [0, 1, 2, 0], sizes = [2, 8, 8, 16], strides = [1, 1, 1, 1]} : vector<2x10x10x16xf32> to vector<2x8x8x16xf32>
    %18 = vector.shape_cast %17 : vector<2x8x8x16xf32> to vector<128x16xf32>
    %19 = vector.extract_strided_slice %6 {offsets = [0, 2, 0, 0], sizes = [2, 8, 8, 16], strides = [1, 1, 1, 1]} : vector<2x10x10x16xf32> to vector<2x8x8x16xf32>
    %20 = vector.shape_cast %19 : vector<2x8x8x16xf32> to vector<128x16xf32>
    %21 = vector.extract_strided_slice %6 {offsets = [0, 2, 1, 0], sizes = [2, 8, 8, 16], strides = [1, 1, 1, 1]} : vector<2x10x10x16xf32> to vector<2x8x8x16xf32>
    %22 = vector.shape_cast %21 : vector<2x8x8x16xf32> to vector<128x16xf32>
    %23 = vector.extract_strided_slice %6 {offsets = [0, 2, 2, 0], sizes = [2, 8, 8, 16], strides = [1, 1, 1, 1]} : vector<2x10x10x16xf32> to vector<2x8x8x16xf32>
    %24 = vector.shape_cast %23 : vector<2x8x8x16xf32> to vector<128x16xf32>
    %25 = tpu.concatenate %8, %10, %12, %14, %16, %18, %20, %22, %24 in 1 : vector<128x16xf32>, vector<128x16xf32>, vector<128x16xf32>, vector<128x16xf32>, vector<128x16xf32>, vector<128x16xf32>, vector<128x16xf32>, vector<128x16xf32>, vector<128x16xf32> -> vector<128x144xf32>
    %26 = arith.truncf %25 : vector<128x144xf32> to vector<128x144xbf16>
    %c0_14 = arith.constant 0 : index
    %c0_15 = arith.constant 0 : index
    %27 = vector.load %arg2[%c0_14, %c0_15] : memref<144x16xbf16, #tpu.memory_space<vmem>>, vector<144x16xbf16>
    %cst_16 = arith.constant dense<0.000000e+00> : vector<128x16xf32>
    %28 = tpu.matmul %26, %27, %cst_16 {dimension_numbers = #tpu.dot_dimension_numbers<[1], [0], [0], [1], [0, 0, 1, 1], [], []>} : vector<128x144xbf16>, vector<144x16xbf16>, vector<128x16xf32> -> vector<128x16xf32>
    %c0_17 = arith.constant 0 : index
    %c0_18 = arith.constant 0 : index
    %29 = vector.load %arg3[%c0_17, %c0_18] : memref<1x16xf32, #tpu.memory_space<vmem>>, vector<1x16xf32>
    %30 = vector.broadcast %29 : vector<1x16xf32> to vector<128x16xf32>
    %31 = arith.addf %28, %30 : vector<128x16xf32>
    %cst_19 = arith.constant 0.000000e+00 : f32
    %32 = vector.broadcast %cst_19 : f32 to vector<128x16xf32>
    %33 = arith.maximumf %31, %32 : vector<128x16xf32>
    %34 = arith.truncf %33 : vector<128x16xf32> to vector<128x16xbf16>
    %35 = vector.shape_cast %33 : vector<128x16xf32> to vector<2x8x8x16xf32>
    %c0_20 = arith.constant 0 : index
    %c1_21 = arith.constant 1 : index
    %c1_22 = arith.constant 1 : index
    %c0_23 = arith.constant 0 : index
    %36 = vector.load %arg13[%c0_20, %c1_21, %c1_22, %c0_23] : memref<2x10x10x16xf32, #tpu.memory_space<vmem>>, vector<2x8x8x16xf32>
    tpu.vector_store %arg13[%c0_20, %c1_21, %c1_22, %c0_23], %35 {strides = array<i32>} : memref<2x10x10x16xf32, #tpu.memory_space<vmem>>, vector<2x8x8x16xf32>,
    %c0_24 = arith.constant 0 : index
    %c0_25 = arith.constant 0 : index
    %c0_26 = arith.constant 0 : index
    %c0_27 = arith.constant 0 : index
    %37 = vector.load %arg13[%c0_24, %c0_25, %c0_26, %c0_27] : memref<2x10x10x16xf32, #tpu.memory_space<vmem>>, vector<2x10x10x16xf32>
    %38 = vector.extract_strided_slice %37 {offsets = [0, 0, 0, 0], sizes = [2, 8, 8, 16], strides = [1, 1, 1, 1]} : vector<2x10x10x16xf32> to vector<2x8x8x16xf32>
    %39 = vector.shape_cast %38 : vector<2x8x8x16xf32> to vector<128x16xf32>
    %40 = vector.extract_strided_slice %37 {offsets = [0, 0, 1, 0], sizes = [2, 8, 8, 16], strides = [1, 1, 1, 1]} : vector<2x10x10x16xf32> to vector<2x8x8x16xf32>
    %41 = vector.shape_cast %40 : vector<2x8x8x16xf32> to vector<128x16xf32>
    %42 = vector.extract_strided_slice %37 {offsets = [0, 0, 2, 0], sizes = [2, 8, 8, 16], strides = [1, 1, 1, 1]} : vector<2x10x10x16xf32> to vector<2x8x8x16xf32>
    %43 = vector.shape_cast %42 : vector<2x8x8x16xf32> to vector<128x16xf32>
    %44 = vector.extract_strided_slice %37 {offsets = [0, 1, 0, 0], sizes = [2, 8, 8, 16], strides = [1, 1, 1, 1]} : vector<2x10x10x16xf32> to vector<2x8x8x16xf32>
    %45 = vector.shape_cast %44 : vector<2x8x8x16xf32> to vector<128x16xf32>
    %46 = vector.extract_strided_slice %37 {offsets = [0, 1, 1, 0], sizes = [2, 8, 8, 16], strides = [1, 1, 1, 1]} : vector<2x10x10x16xf32> to vector<2x8x8x16xf32>
    %47 = vector.shape_cast %46 : vector<2x8x8x16xf32> to vector<128x16xf32>
    %48 = vector.extract_strided_slice %37 {offsets = [0, 1, 2, 0], sizes = [2, 8, 8, 16], strides = [1, 1, 1, 1]} : vector<2x10x10x16xf32> to vector<2x8x8x16xf32>
    %49 = vector.shape_cast %48 : vector<2x8x8x16xf32> to vector<128x16xf32>
    %50 = vector.extract_strided_slice %37 {offsets = [0, 2, 0, 0], sizes = [2, 8, 8, 16], strides = [1, 1, 1, 1]} : vector<2x10x10x16xf32> to vector<2x8x8x16xf32>
    %51 = vector.shape_cast %50 : vector<2x8x8x16xf32> to vector<128x16xf32>
    %52 = vector.extract_strided_slice %37 {offsets = [0, 2, 1, 0], sizes = [2, 8, 8, 16], strides = [1, 1, 1, 1]} : vector<2x10x10x16xf32> to vector<2x8x8x16xf32>
    %53 = vector.shape_cast %52 : vector<2x8x8x16xf32> to vector<128x16xf32>
    %54 = vector.extract_strided_slice %37 {offsets = [0, 2, 2, 0], sizes = [2, 8, 8, 16], strides = [1, 1, 1, 1]} : vector<2x10x10x16xf32> to vector<2x8x8x16xf32>
    %55 = vector.shape_cast %54 : vector<2x8x8x16xf32> to vector<128x16xf32>
    %56 = tpu.concatenate %39, %41, %43, %45, %47, %49, %51, %53, %55 in 1 : vector<128x16xf32>, vector<128x16xf32>, vector<128x16xf32>, vector<128x16xf32>, vector<128x16xf32>, vector<128x16xf32>, vector<128x16xf32>, vector<128x16xf32>, vector<128x16xf32> -> vector<128x144xf32>
    %57 = arith.truncf %56 : vector<128x144xf32> to vector<128x144xbf16>
    %c0_28 = arith.constant 0 : index
    %c0_29 = arith.constant 0 : index
    %58 = vector.load %arg4[%c0_28, %c0_29] : memref<144x16xbf16, #tpu.memory_space<vmem>>, vector<144x16xbf16>
    %cst_30 = arith.constant dense<0.000000e+00> : vector<128x16xf32>
    %59 = tpu.matmul %57, %58, %cst_30 {dimension_numbers = #tpu.dot_dimension_numbers<[1], [0], [0], [1], [0, 0, 1, 1], [], []>} : vector<128x144xbf16>, vector<144x16xbf16>, vector<128x16xf32> -> vector<128x16xf32>
    %c0_31 = arith.constant 0 : index
    %c0_32 = arith.constant 0 : index
    %60 = vector.load %arg5[%c0_31, %c0_32] : memref<1x16xf32, #tpu.memory_space<vmem>>, vector<1x16xf32>
    %61 = vector.broadcast %60 : vector<1x16xf32> to vector<128x16xf32>
    %62 = arith.addf %59, %61 : vector<128x16xf32>
    %cst_33 = arith.constant 0.000000e+00 : f32
    %63 = vector.broadcast %cst_33 : f32 to vector<128x16xf32>
    %64 = arith.maximumf %62, %63 : vector<128x16xf32>
    %65 = arith.truncf %64 : vector<128x16xf32> to vector<128x16xbf16>
    %66 = vector.shape_cast %64 : vector<128x16xf32> to vector<2x8x8x16xf32>
    %c0_34 = arith.constant 0 : index
    %c1_35 = arith.constant 1 : index
    %c1_36 = arith.constant 1 : index
    %c0_37 = arith.constant 0 : index
    %67 = vector.load %arg13[%c0_34, %c1_35, %c1_36, %c0_37] : memref<2x10x10x16xf32, #tpu.memory_space<vmem>>, vector<2x8x8x16xf32>
    tpu.vector_store %arg13[%c0_34, %c1_35, %c1_36, %c0_37], %66 {strides = array<i32>} : memref<2x10x10x16xf32, #tpu.memory_space<vmem>>, vector<2x8x8x16xf32>,
    %c0_38 = arith.constant 0 : index
    %c0_39 = arith.constant 0 : index
    %c0_40 = arith.constant 0 : index
    %c0_41 = arith.constant 0 : index
    %68 = vector.load %arg13[%c0_38, %c0_39, %c0_40, %c0_41] : memref<2x10x10x16xf32, #tpu.memory_space<vmem>>, vector<2x10x10x16xf32>
    %69 = vector.extract_strided_slice %68 {offsets = [0, 0, 0, 0], sizes = [2, 8, 8, 16], strides = [1, 1, 1, 1]} : vector<2x10x10x16xf32> to vector<2x8x8x16xf32>
    %70 = vector.shape_cast %69 : vector<2x8x8x16xf32> to vector<128x16xf32>
    %71 = vector.extract_strided_slice %68 {offsets = [0, 0, 1, 0], sizes = [2, 8, 8, 16], strides = [1, 1, 1, 1]} : vector<2x10x10x16xf32> to vector<2x8x8x16xf32>
    %72 = vector.shape_cast %71 : vector<2x8x8x16xf32> to vector<128x16xf32>
    %73 = vector.extract_strided_slice %68 {offsets = [0, 0, 2, 0], sizes = [2, 8, 8, 16], strides = [1, 1, 1, 1]} : vector<2x10x10x16xf32> to vector<2x8x8x16xf32>
    %74 = vector.shape_cast %73 : vector<2x8x8x16xf32> to vector<128x16xf32>
    %75 = vector.extract_strided_slice %68 {offsets = [0, 1, 0, 0], sizes = [2, 8, 8, 16], strides = [1, 1, 1, 1]} : vector<2x10x10x16xf32> to vector<2x8x8x16xf32>
    %76 = vector.shape_cast %75 : vector<2x8x8x16xf32> to vector<128x16xf32>
    %77 = vector.extract_strided_slice %68 {offsets = [0, 1, 1, 0], sizes = [2, 8, 8, 16], strides = [1, 1, 1, 1]} : vector<2x10x10x16xf32> to vector<2x8x8x16xf32>
    %78 = vector.shape_cast %77 : vector<2x8x8x16xf32> to vector<128x16xf32>
    %79 = vector.extract_strided_slice %68 {offsets = [0, 1, 2, 0], sizes = [2, 8, 8, 16], strides = [1, 1, 1, 1]} : vector<2x10x10x16xf32> to vector<2x8x8x16xf32>
    %80 = vector.shape_cast %79 : vector<2x8x8x16xf32> to vector<128x16xf32>
    %81 = vector.extract_strided_slice %68 {offsets = [0, 2, 0, 0], sizes = [2, 8, 8, 16], strides = [1, 1, 1, 1]} : vector<2x10x10x16xf32> to vector<2x8x8x16xf32>
    %82 = vector.shape_cast %81 : vector<2x8x8x16xf32> to vector<128x16xf32>
    %83 = vector.extract_strided_slice %68 {offsets = [0, 2, 1, 0], sizes = [2, 8, 8, 16], strides = [1, 1, 1, 1]} : vector<2x10x10x16xf32> to vector<2x8x8x16xf32>
    %84 = vector.shape_cast %83 : vector<2x8x8x16xf32> to vector<128x16xf32>
    %85 = vector.extract_strided_slice %68 {offsets = [0, 2, 2, 0], sizes = [2, 8, 8, 16], strides = [1, 1, 1, 1]} : vector<2x10x10x16xf32> to vector<2x8x8x16xf32>
    %86 = vector.shape_cast %85 : vector<2x8x8x16xf32> to vector<128x16xf32>
    %87 = tpu.concatenate %70, %72, %74, %76, %78, %80, %82, %84, %86 in 1 : vector<128x16xf32>, vector<128x16xf32>, vector<128x16xf32>, vector<128x16xf32>, vector<128x16xf32>, vector<128x16xf32>, vector<128x16xf32>, vector<128x16xf32>, vector<128x16xf32> -> vector<128x144xf32>
    %88 = arith.truncf %87 : vector<128x144xf32> to vector<128x144xbf16>
    %c0_42 = arith.constant 0 : index
    %c0_43 = arith.constant 0 : index
    %89 = vector.load %arg6[%c0_42, %c0_43] : memref<144x16xbf16, #tpu.memory_space<vmem>>, vector<144x16xbf16>
    %cst_44 = arith.constant dense<0.000000e+00> : vector<128x16xf32>
    %90 = tpu.matmul %88, %89, %cst_44 {dimension_numbers = #tpu.dot_dimension_numbers<[1], [0], [0], [1], [0, 0, 1, 1], [], []>} : vector<128x144xbf16>, vector<144x16xbf16>, vector<128x16xf32> -> vector<128x16xf32>
    %c0_45 = arith.constant 0 : index
    %c0_46 = arith.constant 0 : index
    %91 = vector.load %arg7[%c0_45, %c0_46] : memref<1x16xf32, #tpu.memory_space<vmem>>, vector<1x16xf32>
    %92 = vector.broadcast %91 : vector<1x16xf32> to vector<128x16xf32>
    %93 = arith.addf %90, %92 : vector<128x16xf32>
    %cst_47 = arith.constant 0.000000e+00 : f32
    %94 = vector.broadcast %cst_47 : f32 to vector<128x16xf32>
    %95 = arith.maximumf %93, %94 : vector<128x16xf32>
    %96 = arith.truncf %95 : vector<128x16xf32> to vector<128x16xbf16>
    %97 = tpu.concatenate %5, %34, %65, %96 in 1 : vector<128x16xbf16>, vector<128x16xbf16>, vector<128x16xbf16>, vector<128x16xbf16> -> vector<128x64xbf16>
    %c0_48 = arith.constant 0 : index
    %c0_49 = arith.constant 0 : index
    %98 = vector.load %arg8[%c0_48, %c0_49] : memref<64x16xbf16, #tpu.memory_space<vmem>>, vector<64x16xbf16>
    %cst_50 = arith.constant dense<0.000000e+00> : vector<128x16xf32>
    %99 = tpu.matmul %97, %98, %cst_50 {dimension_numbers = #tpu.dot_dimension_numbers<[1], [0], [0], [1], [0, 0, 1, 1], [], []>} : vector<128x64xbf16>, vector<64x16xbf16>, vector<128x16xf32> -> vector<128x16xf32>
    %c0_51 = arith.constant 0 : index
    %c0_52 = arith.constant 0 : index
    %100 = vector.load %arg9[%c0_51, %c0_52] : memref<1x16xf32, #tpu.memory_space<vmem>>, vector<1x16xf32>
    %101 = vector.broadcast %100 : vector<1x16xf32> to vector<128x16xf32>
    %102 = arith.addf %99, %101 : vector<128x16xf32>
    %cst_53 = arith.constant 0.000000e+00 : f32
    %103 = vector.broadcast %cst_53 : f32 to vector<128x16xf32>
    %104 = arith.maximumf %102, %103 : vector<128x16xf32>
    %105 = vector.shape_cast %104 : vector<128x16xf32> to vector<2x64x16xf32>
    %cst_54 = arith.constant dense<0.000000e+00> : vector<2x16xf32>
    %106 = vector.multi_reduction <add>, %105, %cst_54 [1] : vector<2x64x16xf32> to vector<2x16xf32>
    %cst_55 = arith.constant 6.400000e+01 : f32
    %107 = vector.broadcast %cst_55 : f32 to vector<2x16xf32>
    %108 = arith.divf %106, %107 : vector<2x16xf32>
    %c0_56 = arith.constant 0 : index
    %c0_57 = arith.constant 0 : index
    %109 = vector.load %arg10[%c0_56, %c0_57] : memref<16x16xf32, #tpu.memory_space<vmem>>, vector<16x16xf32>
    %cst_58 = arith.constant dense<0.000000e+00> : vector<2x16xf32>
    %110 = tpu.matmul %108, %109, %cst_58 {dimension_numbers = #tpu.dot_dimension_numbers<[1], [0], [0], [1], [0, 0, 1, 1], [], []>} : vector<2x16xf32>, vector<16x16xf32>, vector<2x16xf32> -> vector<2x16xf32>
    %c0_59 = arith.constant 0 : index
    %c0_60 = arith.constant 0 : index
    %111 = vector.load %arg11[%c0_59, %c0_60] : memref<1x16xf32, #tpu.memory_space<vmem>>, vector<1x16xf32>
    %112 = vector.broadcast %111 : vector<1x16xf32> to vector<2x16xf32>
    %113 = arith.addf %110, %112 : vector<2x16xf32>
    %114 = arith.negf %113 : vector<2x16xf32>
    %115 = math.exp %114 : vector<2x16xf32>
    %cst_61 = arith.constant 1.000000e+00 : f32
    %116 = vector.broadcast %cst_61 : f32 to vector<2x16xf32>
    %117 = arith.addf %116, %115 : vector<2x16xf32>
    %118 = arith.divf %116, %117 : vector<2x16xf32>
    %119 = vector.shape_cast %118 : vector<2x16xf32> to vector<2x1x16xf32>
    %120 = vector.broadcast %119 : vector<2x1x16xf32> to vector<2x64x16xf32>
    %121 = arith.mulf %105, %120 : vector<2x64x16xf32>
    %122 = vector.shape_cast %0 : vector<2x8x8x16xf32> to vector<2x64x16xf32>
    %123 = arith.addf %121, %122 : vector<2x64x16xf32>
    %124 = vector.shape_cast %123 : vector<2x64x16xf32> to vector<2x8x8x16xf32>
    %c0_62 = arith.constant 0 : index
    %c0_63 = arith.constant 0 : index
    %c0_64 = arith.constant 0 : index
    %c0_65 = arith.constant 0 : index
    %125 = vector.load %arg12[%c0_62, %c0_63, %c0_64, %c0_65] : memref<2x8x8x16xf32, #tpu.memory_space<vmem>>, vector<2x8x8x16xf32>
    tpu.vector_store %arg12[%c0_62, %c0_63, %c0_64, %c0_65], %124 {strides = array<i32>} : memref<2x8x8x16xf32, #tpu.memory_space<vmem>>, vector<2x8x8x16xf32>,
    return
  }
  func.func @transform_0(%arg0: i32) -> (i32, i32, i32, i32) {
    %c0_i32 = arith.constant 0 : i32
    %c0_i32_0 = arith.constant 0 : i32
    %c0_i32_1 = arith.constant 0 : i32
    %c0_i32_2 = arith.constant 0 : i32
    return %arg0, %c0_i32, %c0_i32_0, %c0_i32_1 : i32, i32, i32, i32
  }
  func.func @transform_1(%arg0: i32) -> (i32, i32) {
    %c0_i32 = arith.constant 0 : i32
    %c0_i32_0 = arith.constant 0 : i32
    %c0_i32_1 = arith.constant 0 : i32
    return %c0_i32, %c0_i32_0 : i32, i32
  }
  func.func @transform_2(%arg0: i32) -> (i32, i32) {
    %c0_i32 = arith.constant 0 : i32
    %c0_i32_0 = arith.constant 0 : i32
    %c0_i32_1 = arith.constant 0 : i32
    return %c0_i32, %c0_i32_0 : i32, i32
  }
  func.func @transform_3(%arg0: i32) -> (i32, i32) {
    %c0_i32 = arith.constant 0 : i32
    %c0_i32_0 = arith.constant 0 : i32
    %c0_i32_1 = arith.constant 0 : i32
    return %c0_i32, %c0_i32_0 : i32, i32
  }
  func.func @transform_4(%arg0: i32) -> (i32, i32) {
    %c0_i32 = arith.constant 0 : i32
    %c0_i32_0 = arith.constant 0 : i32
    %c0_i32_1 = arith.constant 0 : i32
    return %c0_i32, %c0_i32_0 : i32, i32
  }
  func.func @transform_5(%arg0: i32) -> (i32, i32) {
    %c0_i32 = arith.constant 0 : i32
    %c0_i32_0 = arith.constant 0 : i32
    %c0_i32_1 = arith.constant 0 : i32
    return %c0_i32, %c0_i32_0 : i32, i32
  }
  func.func @transform_6(%arg0: i32) -> (i32, i32) {
    %c0_i32 = arith.constant 0 : i32
    %c0_i32_0 = arith.constant 0 : i32
    %c0_i32_1 = arith.constant 0 : i32
    return %c0_i32, %c0_i32_0 : i32, i32
  }
  func.func @transform_7(%arg0: i32) -> (i32, i32) {
    %c0_i32 = arith.constant 0 : i32
    %c0_i32_0 = arith.constant 0 : i32
    %c0_i32_1 = arith.constant 0 : i32
    return %c0_i32, %c0_i32_0 : i32, i32
  }
  func.func @transform_8(%arg0: i32) -> (i32, i32) {
    %c0_i32 = arith.constant 0 : i32
    %c0_i32_0 = arith.constant 0 : i32
    %c0_i32_1 = arith.constant 0 : i32
    return %c0_i32, %c0_i32_0 : i32, i32
  }
  func.func @transform_9(%arg0: i32) -> (i32, i32) {
    %c0_i32 = arith.constant 0 : i32
    %c0_i32_0 = arith.constant 0 : i32
    %c0_i32_1 = arith.constant 0 : i32
    return %c0_i32, %c0_i32_0 : i32, i32
  }
  func.func @transform_10(%arg0: i32) -> (i32, i32) {
    %c0_i32 = arith.constant 0 : i32
    %c0_i32_0 = arith.constant 0 : i32
    %c0_i32_1 = arith.constant 0 : i32
    return %c0_i32, %c0_i32_0 : i32, i32
  }
  func.func @transform_11(%arg0: i32) -> (i32, i32, i32, i32) {
    %c0_i32 = arith.constant 0 : i32
    %c0_i32_0 = arith.constant 0 : i32
    %c0_i32_1 = arith.constant 0 : i32
    %c0_i32_2 = arith.constant 0 : i32
    return %arg0, %c0_i32, %c0_i32_0, %c0_i32_1 : i32, i32, i32, i32
  }
}

</mosaic_0001>

<llo_original>
// kernel: tpu_custom_call.1
$region0: #{tpu_custom_call.1}
  #allocation0 [shape = 'u32[]', space=smem, size = 0x4, offset = 0x4, fixed_abs, tag = 'smem constant byte address 0x4 - core index']
  #allocation1 [shape = 'u32[144,128]{1,0:T(1,128)}', space=vmem, size = 0x12000, scoped, tag = 'internal scratch']
  #allocation2 [shape = 'f32[2,10,10,16]{3,2,1,0:T(8,128)}', space=vmem, size = 0x28000, scoped, tag = 'scratch operand']
  %s0 = inlined_call_operand.vmem [shape: f32[2,8,8,16], index: 0, kind: input, shape index: {}]
  %s1 = inlined_call_operand.vmem [shape: bf16[144,16], index: 1, kind: input, shape index: {}]
  %s2 = inlined_call_operand.vmem [shape: f32[1,16], index: 2, kind: input, shape index: {}]
  %s3 = inlined_call_operand.vmem [shape: bf16[144,16], index: 3, kind: input, shape index: {}]
  %s4 = inlined_call_operand.vmem [shape: f32[1,16], index: 4, kind: input, shape index: {}]
  %s5 = inlined_call_operand.vmem [shape: bf16[144,16], index: 5, kind: input, shape index: {}]
  %s6 = inlined_call_operand.vmem [shape: f32[1,16], index: 6, kind: input, shape index: {}]
  %s7 = inlined_call_operand.vmem [shape: bf16[64,16], index: 7, kind: input, shape index: {}]
  %s8 = inlined_call_operand.vmem [shape: f32[1,16], index: 8, kind: input, shape index: {}]
  %s9 = inlined_call_operand.vmem [shape: f32[16,16], index: 9, kind: input, shape index: {}]
  %s10 = inlined_call_operand.vmem [shape: f32[1,16], index: 10, kind: input, shape index: {}]
  %s11 = inlined_call_operand.hbm [shape: f32[2,8,8,16], index: 11, kind: output, shape index: {}]
  %s12 = sld [smem:[#allocation0]]
  $region54: #{tpu_custom_call.1} parent=0
    _
  %s14 = ssub.s32 1, %s12
  %s15 = scalar_select 0, %s14, %s12
  $region1: #{tpu_custom_call.1} parent=0
    #allocation3 [shape = 'u8[65536]{0}', space=vmem, size = 0x10000, scoped, tag = 'output window, operand 0, single buffered']
    #allocation4 [shape = 's32[1]{0}', space=sflag, size = 0x4, scoped, tag = 'scoped memory for tpu_custom_call.1']
    %16 = vsyncpa [#allocation4], 0
    // Predicated region
    $region2: #{tpu_custom_call.1} parent=1 // pred_check
      _
    $region3: #{tpu_custom_call.1} parent=1 // pred_check_branch
      %18 = sbr.rel (0) target = $region5
    $region4: #{tpu_custom_call.1} parent=1 // pred_region
      _
    $region5: #{tpu_custom_call.1} parent=1 // pred_fallthru
      _
    // Predicated region
    $region6: #{tpu_custom_call.1} parent=1 // pred_check
      _
    $region7: #{tpu_custom_call.1} parent=1 // pred_check_branch
      %20 = sbr.rel (0) target = $region9
    $region8: #{tpu_custom_call.1} parent=1 // pred_region
      _
    $region9: #{tpu_custom_call.1} parent=1 // pred_fallthru
      _
    // Predicated region
    $region10: #{tpu_custom_call.1} parent=1 // pred_check
      _
    $region11: #{tpu_custom_call.1} parent=1 // pred_check_branch
      %22 = sbr.rel (0) target = $region13
    $region12: #{tpu_custom_call.1} parent=1 // pred_region
      _
    $region13: #{tpu_custom_call.1} parent=1 // pred_fallthru
      _
    // Predicated region
    $region14: #{tpu_custom_call.1} parent=1 // pred_check
      _
    $region15: #{tpu_custom_call.1} parent=1 // pred_check_branch
      %24 = sbr.rel (0) target = $region17
    $region16: #{tpu_custom_call.1} parent=1 // pred_region
      _
    $region17: #{tpu_custom_call.1} parent=1 // pred_fallthru
      _
    // Predicated region
    $region18: #{tpu_custom_call.1} parent=1 // pred_check
      _
    $region19: #{tpu_custom_call.1} parent=1 // pred_check_branch
      %26 = sbr.rel (0) target = $region21
    $region20: #{tpu_custom_call.1} parent=1 // pred_region
      _
    $region21: #{tpu_custom_call.1} parent=1 // pred_fallthru
      _
    // Predicated region
    $region22: #{tpu_custom_call.1} parent=1 // pred_check
      _
    $region23: #{tpu_custom_call.1} parent=1 // pred_check_branch
      %28 = sbr.rel (0) target = $region25
    $region24: #{tpu_custom_call.1} parent=1 // pred_region
      _
    $region25: #{tpu_custom_call.1} parent=1 // pred_fallthru
      _
    // Predicated region
    $region26: #{tpu_custom_call.1} parent=1 // pred_check
      _
    $region27: #{tpu_custom_call.1} parent=1 // pred_check_branch
      %30 = sbr.rel (0) target = $region29
    $region28: #{tpu_custom_call.1} parent=1 // pred_region
      _
    $region29: #{tpu_custom_call.1} parent=1 // pred_fallthru
      _
    // Predicated region
    $region30: #{tpu_custom_call.1} parent=1 // pred_check
      _
    $region31: #{tpu_custom_call.1} parent=1 // pred_check_branch
      %32 = sbr.rel (0) target = $region33
    $region32: #{tpu_custom_call.1} parent=1 // pred_region
      _
    $region33: #{tpu_custom_call.1} parent=1 // pred_fallthru
      _
    // Predicated region
    $region34: #{tpu_custom_call.1} parent=1 // pred_check
      _
    $region35: #{tpu_custom_call.1} parent=1 // pred_check_branch
      %34 = sbr.rel (0) target = $region37
    $region36: #{tpu_custom_call.1} parent=1 // pred_region
      _
    $region37: #{tpu_custom_call.1} parent=1 // pred_fallthru
      _
    // Predicated region
    $region38: #{tpu_custom_call.1} parent=1 // pred_check
      _
    $region39: #{tpu_custom_call.1} parent=1 // pred_check_branch
      %36 = sbr.rel (0) target = $region41
    $region40: #{tpu_custom_call.1} parent=1 // pred_region
      _
    $region41: #{tpu_custom_call.1} parent=1 // pred_fallthru
      _
    // Predicated region
    $region42: #{tpu_custom_call.1} parent=1 // pred_check
      _
    $region43: #{tpu_custom_call.1} parent=1 // pred_check_branch
      %38 = sbr.rel (0) target = $region45
    $region44: #{tpu_custom_call.1} parent=1 // pred_region
      _
    $region45: #{tpu_custom_call.1} parent=1 // pred_fallthru
      _
    %v40 = vld [vmem:[%s0] sm:$0xff]
    %v41 = vld [vmem:[%s0 + $0x8] sm:$0xff]
    %v42 = vld [vmem:[%s0 + $0x10] sm:$0xff]
    %v43 = vld [vmem:[%s0 + $0x18] sm:$0xff]
    %v44 = vld [vmem:[%s0 + $0x20] sm:$0xff]
    %v45 = vld [vmem:[%s0 + $0x28] sm:$0xff]
    %v46 = vld [vmem:[%s0 + $0x30] sm:$0xff]
    %v47 = vld [vmem:[%s0 + $0x38] sm:$0xff]
    %v48 = vld [vmem:[%s0 + $0x40] sm:$0xff]
    %v49 = vld [vmem:[%s0 + $0x48] sm:$0xff]
    %v50 = vld [vmem:[%s0 + $0x50] sm:$0xff]
    %v51 = vld [vmem:[%s0 + $0x58] sm:$0xff]
    %v52 = vld [vmem:[%s0 + $0x60] sm:$0xff]
    %v53 = vld [vmem:[%s0 + $0x68] sm:$0xff]
    %v54 = vld [vmem:[%s0 + $0x70] sm:$0xff]
    %v55 = vld [vmem:[%s0 + $0x78] sm:$0xff]
    %vm56 = vcmask 130048
    %57 = vst.msk [vmem:[#allocation2] sm:$0xff] %vm56, 0.0
    %vm58 = vcmask 123904
    %59 = vst.msk [vmem:[#allocation2 + $0x8] sm:$0x3] %vm58, 0.0
    %60 = vst.msk [vmem:[#allocation2 + $0x10] sm:$0xff] %vm56, 0.0
    %61 = vst.msk [vmem:[#allocation2 + $0x18] sm:$0x3] %vm58, 0.0
    %62 = vst.msk [vmem:[#allocation2 + $0x20] sm:$0xff] %vm56, 0.0
    %63 = vst.msk [vmem:[#allocation2 + $0x28] sm:$0x3] %vm58, 0.0
    %64 = vst.msk [vmem:[#allocation2 + $0x30] sm:$0xff] %vm56, 0.0
    %65 = vst.msk [vmem:[#allocation2 + $0x38] sm:$0x3] %vm58, 0.0
    %66 = vst.msk [vmem:[#allocation2 + $0x40] sm:$0xff] %vm56, 0.0
    %67 = vst.msk [vmem:[#allocation2 + $0x48] sm:$0x3] %vm58, 0.0
    %68 = vst.msk [vmem:[#allocation2 + $0x50] sm:$0xff] %vm56, 0.0
    %69 = vst.msk [vmem:[#allocation2 + $0x58] sm:$0x3] %vm58, 0.0
    %70 = vst.msk [vmem:[#allocation2 + $0x60] sm:$0xff] %vm56, 0.0
    %71 = vst.msk [vmem:[#allocation2 + $0x68] sm:$0x3] %vm58, 0.0
    %72 = vst.msk [vmem:[#allocation2 + $0x70] sm:$0xff] %vm56, 0.0
    %73 = vst.msk [vmem:[#allocation2 + $0x78] sm:$0x3] %vm58, 0.0
    %74 = vst.msk [vmem:[#allocation2 + $0x80] sm:$0xff] %vm56, 0.0
    %75 = vst.msk [vmem:[#allocation2 + $0x88] sm:$0x3] %vm58, 0.0
    %76 = vst.msk [vmem:[#allocation2 + $0x90] sm:$0xff] %vm56, 0.0
    %77 = vst.msk [vmem:[#allocation2 + $0x98] sm:$0x3] %vm58, 0.0
    %78 = vst.msk [vmem:[#allocation2 + $0xa0] sm:$0xff] %vm56, 0.0
    %79 = vst.msk [vmem:[#allocation2 + $0xa8] sm:$0x3] %vm58, 0.0
    %80 = vst.msk [vmem:[#allocation2 + $0xb0] sm:$0xff] %vm56, 0.0
    %81 = vst.msk [vmem:[#allocation2 + $0xb8] sm:$0x3] %vm58, 0.0
    %82 = vst.msk [vmem:[#allocation2 + $0xc0] sm:$0xff] %vm56, 0.0
    %83 = vst.msk [vmem:[#allocation2 + $0xc8] sm:$0x3] %vm58, 0.0
    %84 = vst.msk [vmem:[#allocation2 + $0xd0] sm:$0xff] %vm56, 0.0
    %85 = vst.msk [vmem:[#allocation2 + $0xd8] sm:$0x3] %vm58, 0.0
    %86 = vst.msk [vmem:[#allocation2 + $0xe0] sm:$0xff] %vm56, 0.0
    %87 = vst.msk [vmem:[#allocation2 + $0xe8] sm:$0x3] %vm58, 0.0
    %88 = vst.msk [vmem:[#allocation2 + $0xf0] sm:$0xff] %vm56, 0.0
    %89 = vst.msk [vmem:[#allocation2 + $0xf8] sm:$0x3] %vm58, 0.0
    %90 = vst.msk [vmem:[#allocation2 + $0x100] sm:$0xff] %vm56, 0.0
    %91 = vst.msk [vmem:[#allocation2 + $0x108] sm:$0x3] %vm58, 0.0
    %92 = vst.msk [vmem:[#allocation2 + $0x110] sm:$0xff] %vm56, 0.0
    %93 = vst.msk [vmem:[#allocation2 + $0x118] sm:$0x3] %vm58, 0.0
    %94 = vst.msk [vmem:[#allocation2 + $0x120] sm:$0xff] %vm56, 0.0
    %95 = vst.msk [vmem:[#allocation2 + $0x128] sm:$0x3] %vm58, 0.0
    %96 = vst.msk [vmem:[#allocation2 + $0x130] sm:$0xff] %vm56, 0.0
    %97 = vst.msk [vmem:[#allocation2 + $0x138] sm:$0x3] %vm58, 0.0
    %s98 = scalar_lea.vmem [#allocation2], 16
    %99 = vst.msk [vmem:[%s98 + $0x1] sm:$0xff] %vm56, %v40
    %100 = vst.msk [vmem:[%s98 + $0x11] sm:$0xff] %vm56, %v41
    %101 = vst.msk [vmem:[%s98 + $0x21] sm:$0xff] %vm56, %v42
    %102 = vst.msk [vmem:[%s98 + $0x31] sm:$0xff] %vm56, %v43
    %103 = vst.msk [vmem:[%s98 + $0x41] sm:$0xff] %vm56, %v44
    %104 = vst.msk [vmem:[%s98 + $0x51] sm:$0xff] %vm56, %v45
    %105 = vst.msk [vmem:[%s98 + $0x61] sm:$0xff] %vm56, %v46
    %106 = vst.msk [vmem:[%s98 + $0x71] sm:$0xff] %vm56, %v47
    %107 = vst.msk [vmem:[%s98 + $0xa1] sm:$0xff] %vm56, %v48
    %108 = vst.msk [vmem:[%s98 + $0xb1] sm:$0xff] %vm56, %v49
    %109 = vst.msk [vmem:[%s98 + $0xc1] sm:$0xff] %vm56, %v50
    %110 = vst.msk [vmem:[%s98 + $0xd1] sm:$0xff] %vm56, %v51
    %111 = vst.msk [vmem:[%s98 + $0xe1] sm:$0xff] %vm56, %v52
    %112 = vst.msk [vmem:[%s98 + $0xf1] sm:$0xff] %vm56, %v53
    %113 = vst.msk [vmem:[%s98 + $0x101] sm:$0xff] %vm56, %v54
    %114 = vst.msk [vmem:[%s98 + $0x111] sm:$0xff] %vm56, %v55
    %v115 = vpack.c.bf16 %v41, %v40
    %v116 = vpack.c.bf16 %v43, %v42
    %v117 = vpack.c.bf16 %v45, %v44
    %v118 = vpack.c.bf16 %v47, %v46
    %v119 = vpack.c.bf16 %v49, %v48
    %v120 = vpack.c.bf16 %v51, %v50
    %v121 = vpack.c.bf16 %v53, %v52
    %v122 = vpack.c.bf16 %v55, %v54
    %v123 = vld [vmem:[#allocation2] sm:$0xff]
    %v124 = vld [vmem:[#allocation2 + $0x8] sm:$0x3]
    %v125 = vld [vmem:[#allocation2 + $0x10] sm:$0xff]
    %v126 = vld [vmem:[#allocation2 + $0x18] sm:$0x3]
    %v127 = vld [vmem:[#allocation2 + $0x20] sm:$0xff]
    %v128 = vld [vmem:[#allocation2 + $0x28] sm:$0x3]
    %v129 = vld [vmem:[#allocation2 + $0x30] sm:$0xff]
    %v130 = vld [vmem:[#allocation2 + $0x38] sm:$0x3]
    %v131 = vld [vmem:[#allocation2 + $0x40] sm:$0xff]
    %v132 = vld [vmem:[#allocation2 + $0x48] sm:$0x3]
    %v133 = vld [vmem:[#allocation2 + $0x50] sm:$0xff]
    %v134 = vld [vmem:[#allocation2 + $0x58] sm:$0x3]
    %v135 = vld [vmem:[#allocation2 + $0x60] sm:$0xff]
    %v136 = vld [vmem:[#allocation2 + $0x68] sm:$0x3]
    %v137 = vld [vmem:[#allocation2 + $0x70] sm:$0xff]
    %v138 = vld [vmem:[#allocation2 + $0x78] sm:$0x3]
    %v139 = vld [vmem:[#allocation2 + $0x80] sm:$0xff]
    %v140 = vld [vmem:[#allocation2 + $0x88] sm:$0x3]
    %v141 = vld [vmem:[#allocation2 + $0x90] sm:$0xff]
    %v142 = vld [vmem:[#allocation2 + $0x98] sm:$0x3]
    %v143 = vld [vmem:[#allocation2 + $0xa0] sm:$0xff]
    %v144 = vld [vmem:[#allocation2 + $0xa8] sm:$0x3]
    %v145 = vld [vmem:[#allocation2 + $0xb0] sm:$0xff]
    %v146 = vld [vmem:[#allocation2 + $0xb8] sm:$0x3]
    %v147 = vld [vmem:[#allocation2 + $0xc0] sm:$0xff]
    %v148 = vld [vmem:[#allocation2 + $0xc8] sm:$0x3]
    %v149 = vld [vmem:[#allocation2 + $0xd0] sm:$0xff]
    %v150 = vld [vmem:[#allocation2 + $0xd8] sm:$0x3]
    %v151 = vld [vmem:[#allocation2 + $0xe0] sm:$0xff]
    %v152 = vld [vmem:[#allocation2 + $0xe8] sm:$0x3]
    %v153 = vld [vmem:[#allocation2 + $0xf0] sm:$0xff]
    %v154 = vld [vmem:[#allocation2 + $0xf8] sm:$0x3]
    %v155 = vld [vmem:[#allocation2 + $0x100] sm:$0xff]
    %v156 = vld [vmem:[#allocation2 + $0x108] sm:$0x3]
    %v157 = vld [vmem:[#allocation2 + $0x110] sm:$0xff]
    %v158 = vld [vmem:[#allocation2 + $0x118] sm:$0x3]
    %v159 = vld [vmem:[#allocation2 + $0x120] sm:$0xff]
    %v160 = vld [vmem:[#allocation2 + $0x128] sm:$0x3]
    %v161 = vld [vmem:[#allocation2 + $0x130] sm:$0xff]
    %v162 = vld [vmem:[#allocation2 + $0x138] sm:$0x3]
    %vm195 = vcmask 1046528
    %v196 = vrot.slane %v123, 1
    %v197 = vrot.slane %v124, 1
    %v198 = vsel %vm195, %v196, %v197
    %v199 = vrot.slane %v125, 1
    %v200 = vrot.slane %v126, 1
    %v201 = vsel %vm195, %v199, %v200
    %v202 = vrot.slane %v127, 1
    %v203 = vrot.slane %v128, 1
    %v204 = vsel %vm195, %v202, %v203
    %v205 = vrot.slane %v129, 1
    %v206 = vrot.slane %v130, 1
    %v207 = vsel %vm195, %v205, %v206
    %v208 = vrot.slane %v131, 1
    %v209 = vrot.slane %v132, 1
    %v210 = vsel %vm195, %v208, %v209
    %v211 = vrot.slane %v133, 1
    %v212 = vrot.slane %v134, 1
    %v213 = vsel %vm195, %v211, %v212
    %v214 = vrot.slane %v135, 1
    %v215 = vrot.slane %v136, 1
    %v216 = vsel %vm195, %v214, %v215
    %v217 = vrot.slane %v137, 1
    %v218 = vrot.slane %v138, 1
    %v219 = vsel %vm195, %v217, %v218
    %v220 = vrot.slane %v143, 1
    %v221 = vrot.slane %v144, 1
    %v222 = vsel %vm195, %v220, %v221
    %v223 = vrot.slane %v145, 1
    %v224 = vrot.slane %v146, 1
    %v225 = vsel %vm195, %v223, %v224
    %v226 = vrot.slane %v147, 1
    %v227 = vrot.slane %v148, 1
    %v228 = vsel %vm195, %v226, %v227
    %v229 = vrot.slane %v149, 1
    %v230 = vrot.slane %v150, 1
    %v231 = vsel %vm195, %v229, %v230
    %v232 = vrot.slane %v151, 1
    %v233 = vrot.slane %v152, 1
    %v234 = vsel %vm195, %v232, %v233
    %v235 = vrot.slane %v153, 1
    %v236 = vrot.slane %v154, 1
    %v237 = vsel %vm195, %v235, %v236
    %v238 = vrot.slane %v155, 1
    %v239 = vrot.slane %v156, 1
    %v240 = vsel %vm195, %v238, %v239
    %v241 = vrot.slane %v157, 1
    %v242 = vrot.slane %v158, 1
    %v243 = vsel %vm195, %v241, %v242
    %vm244 = vcmask 1045504
    %v245 = vrot.slane %v123, 2
    %v246 = vrot.slane %v124, 2
    %v247 = vsel %vm244, %v245, %v246
    %v248 = vrot.slane %v125, 2
    %v249 = vrot.slane %v126, 2
    %v250 = vsel %vm244, %v248, %v249
    %v251 = vrot.slane %v127, 2
    %v252 = vrot.slane %v128, 2
    %v253 = vsel %vm244, %v251, %v252
    %v254 = vrot.slane %v129, 2
    %v255 = vrot.slane %v130, 2
    %v256 = vsel %vm244, %v254, %v255
    %v257 = vrot.slane %v131, 2
    %v258 = vrot.slane %v132, 2
    %v259 = vsel %vm244, %v257, %v258
    %v260 = vrot.slane %v133, 2
    %v261 = vrot.slane %v134, 2
    %v262 = vsel %vm244, %v260, %v261
    %v263 = vrot.slane %v135, 2
    %v264 = vrot.slane %v136, 2
    %v265 = vsel %vm244, %v263, %v264
    %v266 = vrot.slane %v137, 2
    %v267 = vrot.slane %v138, 2
    %v268 = vsel %vm244, %v266, %v267
    %v269 = vrot.slane %v143, 2
    %v270 = vrot.slane %v144, 2
    %v271 = vsel %vm244, %v269, %v270
    %v272 = vrot.slane %v145, 2
    %v273 = vrot.slane %v146, 2
    %v274 = vsel %vm244, %v272, %v273
    %v275 = vrot.slane %v147, 2
    %v276 = vrot.slane %v148, 2
    %v277 = vsel %vm244, %v275, %v276
    %v278 = vrot.slane %v149, 2
    %v279 = vrot.slane %v150, 2
    %v280 = vsel %vm244, %v278, %v279
    %v281 = vrot.slane %v151, 2
    %v282 = vrot.slane %v152, 2
    %v283 = vsel %vm244, %v281, %v282
    %v284 = vrot.slane %v153, 2
    %v285 = vrot.slane %v154, 2
    %v286 = vsel %vm244, %v284, %v285
    %v287 = vrot.slane %v155, 2
    %v288 = vrot.slane %v156, 2
    %v289 = vsel %vm244, %v287, %v288
    %v290 = vrot.slane %v157, 2
    %v291 = vrot.slane %v158, 2
    %v292 = vsel %vm244, %v290, %v291
    %v297 = vrot.slane %v139, 1
    %v298 = vrot.slane %v140, 1
    %v299 = vsel %vm195, %v297, %v298
    %v300 = vrot.slane %v159, 1
    %v301 = vrot.slane %v160, 1
    %v302 = vsel %vm195, %v300, %v301
    %v303 = vrot.slane %v139, 2
    %v304 = vrot.slane %v140, 2
    %v305 = vsel %vm244, %v303, %v304
    %v306 = vrot.slane %v159, 2
    %v307 = vrot.slane %v160, 2
    %v308 = vsel %vm244, %v306, %v307
    %v313 = vrot.slane %v141, 1
    %v314 = vrot.slane %v142, 1
    %v315 = vsel %vm195, %v313, %v314
    %v316 = vrot.slane %v161, 1
    %v317 = vrot.slane %v162, 1
    %v318 = vsel %vm195, %v316, %v317
    %v319 = vrot.slane %v141, 2
    %v320 = vrot.slane %v142, 2
    %v321 = vsel %vm244, %v319, %v320
    %v322 = vrot.slane %v161, 2
    %v323 = vrot.slane %v162, 2
    %v324 = vsel %vm244, %v322, %v323
    %341 = vrot.lane.b32.xlu0 %v198, 16
    %v342 = vpop.permute.xlu0 %341
    %343 = vrot.lane.b32.xlu0 %v201, 16
    %v344 = vpop.permute.xlu0 %343
    %345 = vrot.lane.b32.xlu0 %v204, 16
    %v346 = vpop.permute.xlu0 %345
    %347 = vrot.lane.b32.xlu0 %v207, 16
    %v348 = vpop.permute.xlu0 %347
    %349 = vrot.lane.b32.xlu0 %v210, 16
    %v350 = vpop.permute.xlu0 %349
    %351 = vrot.lane.b32.xlu0 %v213, 16
    %v352 = vpop.permute.xlu0 %351
    %353 = vrot.lane.b32.xlu0 %v216, 16
    %v354 = vpop.permute.xlu0 %353
    %355 = vrot.lane.b32.xlu0 %v219, 16
    %v356 = vpop.permute.xlu0 %355
    %357 = vrot.lane.b32.xlu0 %v222, 16
    %v358 = vpop.permute.xlu0 %357
    %359 = vrot.lane.b32.xlu0 %v225, 16
    %v360 = vpop.permute.xlu0 %359
    %361 = vrot.lane.b32.xlu0 %v228, 16
    %v362 = vpop.permute.xlu0 %361
    %363 = vrot.lane.b32.xlu0 %v231, 16
    %v364 = vpop.permute.xlu0 %363
    %365 = vrot.lane.b32.xlu0 %v234, 16
    %v366 = vpop.permute.xlu0 %365
    %367 = vrot.lane.b32.xlu0 %v237, 16
    %v368 = vpop.permute.xlu0 %367
    %369 = vrot.lane.b32.xlu0 %v240, 16
    %v370 = vpop.permute.xlu0 %369
    %371 = vrot.lane.b32.xlu0 %v243, 16
    %v372 = vpop.permute.xlu0 %371
    %389 = vrot.lane.b32.xlu0 %v247, 32
    %v390 = vpop.permute.xlu0 %389
    %391 = vrot.lane.b32.xlu0 %v250, 32
    %v392 = vpop.permute.xlu0 %391
    %393 = vrot.lane.b32.xlu0 %v253, 32
    %v394 = vpop.permute.xlu0 %393
    %395 = vrot.lane.b32.xlu0 %v256, 32
    %v396 = vpop.permute.xlu0 %395
    %397 = vrot.lane.b32.xlu0 %v259, 32
    %v398 = vpop.permute.xlu0 %397
    %399 = vrot.lane.b32.xlu0 %v262, 32
    %v400 = vpop.permute.xlu0 %399
    %401 = vrot.lane.b32.xlu0 %v265, 32
    %v402 = vpop.permute.xlu0 %401
    %403 = vrot.lane.b32.xlu0 %v268, 32
    %v404 = vpop.permute.xlu0 %403
    %405 = vrot.lane.b32.xlu0 %v271, 32
    %v406 = vpop.permute.xlu0 %405
    %407 = vrot.lane.b32.xlu0 %v274, 32
    %v408 = vpop.permute.xlu0 %407
    %409 = vrot.lane.b32.xlu0 %v277, 32
    %v410 = vpop.permute.xlu0 %409
    %411 = vrot.lane.b32.xlu0 %v280, 32
    %v412 = vpop.permute.xlu0 %411
    %413 = vrot.lane.b32.xlu0 %v283, 32
    %v414 = vpop.permute.xlu0 %413
    %415 = vrot.lane.b32.xlu0 %v286, 32
    %v416 = vpop.permute.xlu0 %415
    %417 = vrot.lane.b32.xlu0 %v289, 32
    %v418 = vpop.permute.xlu0 %417
    %419 = vrot.lane.b32.xlu0 %v292, 32
    %v420 = vpop.permute.xlu0 %419
    %437 = vrot.lane.b32.xlu0 %v125, 48
    %v438 = vpop.permute.xlu0 %437
    %439 = vrot.lane.b32.xlu0 %v127, 48
    %v440 = vpop.permute.xlu0 %439
    %441 = vrot.lane.b32.xlu0 %v129, 48
    %v442 = vpop.permute.xlu0 %441
    %443 = vrot.lane.b32.xlu0 %v131, 48
    %v444 = vpop.permute.xlu0 %443
    %445 = vrot.lane.b32.xlu0 %v133, 48
    %v446 = vpop.permute.xlu0 %445
    %447 = vrot.lane.b32.xlu0 %v135, 48
    %v448 = vpop.permute.xlu0 %447
    %449 = vrot.lane.b32.xlu0 %v137, 48
    %v450 = vpop.permute.xlu0 %449
    %451 = vrot.lane.b32.xlu0 %v139, 48
    %v452 = vpop.permute.xlu0 %451
    %453 = vrot.lane.b32.xlu0 %v145, 48
    %v454 = vpop.permute.xlu0 %453
    %455 = vrot.lane.b32.xlu0 %v147, 48
    %v456 = vpop.permute.xlu0 %455
    %457 = vrot.lane.b32.xlu0 %v149, 48
    %v458 = vpop.permute.xlu0 %457
    %459 = vrot.lane.b32.xlu0 %v151, 48
    %v460 = vpop.permute.xlu0 %459
    %461 = vrot.lane.b32.xlu0 %v153, 48
    %v462 = vpop.permute.xlu0 %461
    %463 = vrot.lane.b32.xlu0 %v155, 48
    %v464 = vpop.permute.xlu0 %463
    %465 = vrot.lane.b32.xlu0 %v157, 48
    %v466 = vpop.permute.xlu0 %465
    %467 = vrot.lane.b32.xlu0 %v159, 48
    %v468 = vpop.permute.xlu0 %467
    %485 = vrot.lane.b32.xlu0 %v201, 64
    %v486 = vpop.permute.xlu0 %485
    %487 = vrot.lane.b32.xlu0 %v204, 64
    %v488 = vpop.permute.xlu0 %487
    %489 = vrot.lane.b32.xlu0 %v207, 64
    %v490 = vpop.permute.xlu0 %489
    %491 = vrot.lane.b32.xlu0 %v210, 64
    %v492 = vpop.permute.xlu0 %491
    %493 = vrot.lane.b32.xlu0 %v213, 64
    %v494 = vpop.permute.xlu0 %493
    %495 = vrot.lane.b32.xlu0 %v216, 64
    %v496 = vpop.permute.xlu0 %495
    %497 = vrot.lane.b32.xlu0 %v219, 64
    %v498 = vpop.permute.xlu0 %497
    %499 = vrot.lane.b32.xlu0 %v299, 64
    %v500 = vpop.permute.xlu0 %499
    %501 = vrot.lane.b32.xlu0 %v225, 64
    %v502 = vpop.permute.xlu0 %501
    %503 = vrot.lane.b32.xlu0 %v228, 64
    %v504 = vpop.permute.xlu0 %503
    %505 = vrot.lane.b32.xlu0 %v231, 64
    %v506 = vpop.permute.xlu0 %505
    %507 = vrot.lane.b32.xlu0 %v234, 64
    %v508 = vpop.permute.xlu0 %507
    %509 = vrot.lane.b32.xlu0 %v237, 64
    %v510 = vpop.permute.xlu0 %509
    %511 = vrot.lane.b32.xlu0 %v240, 64
    %v512 = vpop.permute.xlu0 %511
    %513 = vrot.lane.b32.xlu0 %v243, 64
    %v514 = vpop.permute.xlu0 %513
    %515 = vrot.lane.b32.xlu0 %v302, 64
    %v516 = vpop.permute.xlu0 %515
    %533 = vrot.lane.b32.xlu0 %v250, 80
    %v534 = vpop.permute.xlu0 %533
    %535 = vrot.lane.b32.xlu0 %v253, 80
    %v536 = vpop.permute.xlu0 %535
    %537 = vrot.lane.b32.xlu0 %v256, 80
    %v538 = vpop.permute.xlu0 %537
    %539 = vrot.lane.b32.xlu0 %v259, 80
    %v540 = vpop.permute.xlu0 %539
    %541 = vrot.lane.b32.xlu0 %v262, 80
    %v542 = vpop.permute.xlu0 %541
    %543 = vrot.lane.b32.xlu0 %v265, 80
    %v544 = vpop.permute.xlu0 %543
    %545 = vrot.lane.b32.xlu0 %v268, 80
    %v546 = vpop.permute.xlu0 %545
    %547 = vrot.lane.b32.xlu0 %v305, 80
    %v548 = vpop.permute.xlu0 %547
    %549 = vrot.lane.b32.xlu0 %v274, 80
    %v550 = vpop.permute.xlu0 %549
    %551 = vrot.lane.b32.xlu0 %v277, 80
    %v552 = vpop.permute.xlu0 %551
    %553 = vrot.lane.b32.xlu0 %v280, 80
    %v554 = vpop.permute.xlu0 %553
    %555 = vrot.lane.b32.xlu0 %v283, 80
    %v556 = vpop.permute.xlu0 %555
    %557 = vrot.lane.b32.xlu0 %v286, 80
    %v558 = vpop.permute.xlu0 %557
    %559 = vrot.lane.b32.xlu0 %v289, 80
    %v560 = vpop.permute.xlu0 %559
    %561 = vrot.lane.b32.xlu0 %v292, 80
    %v562 = vpop.permute.xlu0 %561
    %563 = vrot.lane.b32.xlu0 %v308, 80
    %v564 = vpop.permute.xlu0 %563
    %581 = vrot.lane.b32.xlu0 %v127, 96
    %v582 = vpop.permute.xlu0 %581
    %583 = vrot.lane.b32.xlu0 %v129, 96
    %v584 = vpop.permute.xlu0 %583
    %585 = vrot.lane.b32.xlu0 %v131, 96
    %v586 = vpop.permute.xlu0 %585
    %587 = vrot.lane.b32.xlu0 %v133, 96
    %v588 = vpop.permute.xlu0 %587
    %589 = vrot.lane.b32.xlu0 %v135, 96
    %v590 = vpop.permute.xlu0 %589
    %591 = vrot.lane.b32.xlu0 %v137, 96
    %v592 = vpop.permute.xlu0 %591
    %593 = vrot.lane.b32.xlu0 %v139, 96
    %v594 = vpop.permute.xlu0 %593
    %595 = vrot.lane.b32.xlu0 %v141, 96
    %v596 = vpop.permute.xlu0 %595
    %597 = vrot.lane.b32.xlu0 %v147, 96
    %v598 = vpop.permute.xlu0 %597
    %599 = vrot.lane.b32.xlu0 %v149, 96
    %v600 = vpop.permute.xlu0 %599
    %601 = vrot.lane.b32.xlu0 %v151, 96
    %v602 = vpop.permute.xlu0 %601
    %603 = vrot.lane.b32.xlu0 %v153, 96
    %v604 = vpop.permute.xlu0 %603
    %605 = vrot.lane.b32.xlu0 %v155, 96
    %v606 = vpop.permute.xlu0 %605
    %607 = vrot.lane.b32.xlu0 %v157, 96
    %v608 = vpop.permute.xlu0 %607
    %609 = vrot.lane.b32.xlu0 %v159, 96
    %v610 = vpop.permute.xlu0 %609
    %611 = vrot.lane.b32.xlu0 %v161, 96
    %v612 = vpop.permute.xlu0 %611
    %629 = vrot.lane.b32.xlu0 %v204, 112
    %v630 = vpop.permute.xlu0 %629
    %631 = vrot.lane.b32.xlu0 %v207, 112
    %v632 = vpop.permute.xlu0 %631
    %633 = vrot.lane.b32.xlu0 %v210, 112
    %v634 = vpop.permute.xlu0 %633
    %635 = vrot.lane.b32.xlu0 %v213, 112
    %v636 = vpop.permute.xlu0 %635
    %637 = vrot.lane.b32.xlu0 %v216, 112
    %v638 = vpop.permute.xlu0 %637
    %639 = vrot.lane.b32.xlu0 %v219, 112
    %v640 = vpop.permute.xlu0 %639
    %641 = vrot.lane.b32.xlu0 %v299, 112
    %v642 = vpop.permute.xlu0 %641
    %643 = vrot.lane.b32.xlu0 %v315, 112
    %v644 = vpop.permute.xlu0 %643
    %645 = vrot.lane.b32.xlu0 %v228, 112
    %v646 = vpop.permute.xlu0 %645
    %647 = vrot.lane.b32.xlu0 %v231, 112
    %v648 = vpop.permute.xlu0 %647
    %649 = vrot.lane.b32.xlu0 %v234, 112
    %v650 = vpop.permute.xlu0 %649
    %651 = vrot.lane.b32.xlu0 %v237, 112
    %v652 = vpop.permute.xlu0 %651
    %653 = vrot.lane.b32.xlu0 %v240, 112
    %v654 = vpop.permute.xlu0 %653
    %655 = vrot.lane.b32.xlu0 %v243, 112
    %v656 = vpop.permute.xlu0 %655
    %657 = vrot.lane.b32.xlu0 %v302, 112
    %v658 = vpop.permute.xlu0 %657
    %659 = vrot.lane.b32.xlu0 %v318, 112
    %v660 = vpop.permute.xlu0 %659
    %v677 = vsel %vm56, %v123, %v342
    %v678 = vsel %vm56, %v125, %v344
    %v679 = vsel %vm56, %v127, %v346
    %v680 = vsel %vm56, %v129, %v348
    %v681 = vsel %vm56, %v131, %v350
    %v682 = vsel %vm56, %v133, %v352
    %v683 = vsel %vm56, %v135, %v354
    %v684 = vsel %vm56, %v137, %v356
    %v685 = vsel %vm56, %v143, %v358
    %v686 = vsel %vm56, %v145, %v360
    %v687 = vsel %vm56, %v147, %v362
    %v688 = vsel %vm56, %v149, %v364
    %v689 = vsel %vm56, %v151, %v366
    %v690 = vsel %vm56, %v153, %v368
    %v691 = vsel %vm56, %v155, %v370
    %v692 = vsel %vm56, %v157, %v372
    %vm693 = vcmask 261120
    %v694 = vsel %vm693, %v677, %v390
    %v695 = vsel %vm693, %v678, %v392
    %v696 = vsel %vm693, %v679, %v394
    %v697 = vsel %vm693, %v680, %v396
    %v698 = vsel %vm693, %v681, %v398
    %v699 = vsel %vm693, %v682, %v400
    %v700 = vsel %vm693, %v683, %v402
    %v701 = vsel %vm693, %v684, %v404
    %v702 = vsel %vm693, %v685, %v406
    %v703 = vsel %vm693, %v686, %v408
    %v704 = vsel %vm693, %v687, %v410
    %v705 = vsel %vm693, %v688, %v412
    %v706 = vsel %vm693, %v689, %v414
    %v707 = vsel %vm693, %v690, %v416
    %v708 = vsel %vm693, %v691, %v418
    %v709 = vsel %vm693, %v692, %v420
    %vm710 = vcmask 392192
    %v711 = vsel %vm710, %v694, %v438
    %v712 = vsel %vm710, %v695, %v440
    %v713 = vsel %vm710, %v696, %v442
    %v714 = vsel %vm710, %v697, %v444
    %v715 = vsel %vm710, %v698, %v446
    %v716 = vsel %vm710, %v699, %v448
    %v717 = vsel %vm710, %v700, %v450
    %v718 = vsel %vm710, %v701, %v452
    %v719 = vsel %vm710, %v702, %v454
    %v720 = vsel %vm710, %v703, %v456
    %v721 = vsel %vm710, %v704, %v458
    %v722 = vsel %vm710, %v705, %v460
    %v723 = vsel %vm710, %v706, %v462
    %v724 = vsel %vm710, %v707, %v464
    %v725 = vsel %vm710, %v708, %v466
    %v726 = vsel %vm710, %v709, %v468
    %vm727 = vcmask 523264
    %v728 = vsel %vm727, %v711, %v486
    %v729 = vsel %vm727, %v712, %v488
    %v730 = vsel %vm727, %v713, %v490
    %v731 = vsel %vm727, %v714, %v492
    %v732 = vsel %vm727, %v715, %v494
    %v733 = vsel %vm727, %v716, %v496
    %v734 = vsel %vm727, %v717, %v498
    %v735 = vsel %vm727, %v718, %v500
    %v736 = vsel %vm727, %v719, %v502
    %v737 = vsel %vm727, %v720, %v504
    %v738 = vsel %vm727, %v721, %v506
    %v739 = vsel %vm727, %v722, %v508
    %v740 = vsel %vm727, %v723, %v510
    %v741 = vsel %vm727, %v724, %v512
    %v742 = vsel %vm727, %v725, %v514
    %v743 = vsel %vm727, %v726, %v516
    %vm744 = vcmask 654336
    %v745 = vsel %vm744, %v728, %v534
    %v746 = vsel %vm744, %v729, %v536
    %v747 = vsel %vm744, %v730, %v538
    %v748 = vsel %vm744, %v731, %v540
    %v749 = vsel %vm744, %v732, %v542
    %v750 = vsel %vm744, %v733, %v544
    %v751 = vsel %vm744, %v734, %v546
    %v752 = vsel %vm744, %v735, %v548
    %v753 = vsel %vm744, %v736, %v550
    %v754 = vsel %vm744, %v737, %v552
    %v755 = vsel %vm744, %v738, %v554
    %v756 = vsel %vm744, %v739, %v556
    %v757 = vsel %vm744, %v740, %v558
    %v758 = vsel %vm744, %v741, %v560
    %v759 = vsel %vm744, %v742, %v562
    %v760 = vsel %vm744, %v743, %v564
    %vm761 = vcmask 785408
    %v762 = vsel %vm761, %v745, %v582
    %v763 = vsel %vm761, %v746, %v584
    %v764 = vsel %vm761, %v747, %v586
    %v765 = vsel %vm761, %v748, %v588
    %v766 = vsel %vm761, %v749, %v590
    %v767 = vsel %vm761, %v750, %v592
    %v768 = vsel %vm761, %v751, %v594
    %v769 = vsel %vm761, %v752, %v596
    %v770 = vsel %vm761, %v753, %v598
    %v771 = vsel %vm761, %v754, %v600
    %v772 = vsel %vm761, %v755, %v602
    %v773 = vsel %vm761, %v756, %v604
    %v774 = vsel %vm761, %v757, %v606
    %v775 = vsel %vm761, %v758, %v608
    %v776 = vsel %vm761, %v759, %v610
    %v777 = vsel %vm761, %v760, %v612
    %vm778 = vcmask 916480
    %v779 = vsel %vm778, %v762, %v630
    %v780 = vsel %vm778, %v763, %v632
    %v781 = vsel %vm778, %v764, %v634
    %v782 = vsel %vm778, %v765, %v636
    %v783 = vsel %vm778, %v766, %v638
    %v784 = vsel %vm778, %v767, %v640
    %v785 = vsel %vm778, %v768, %v642
    %v786 = vsel %vm778, %v769, %v644
    %v787 = vsel %vm778, %v770, %v646
    %v788 = vsel %vm778, %v771, %v648
    %v789 = vsel %vm778, %v772, %v650
    %v790 = vsel %vm778, %v773, %v652
    %v791 = vsel %vm778, %v774, %v654
    %v792 = vsel %vm778, %v775, %v656
    %v793 = vsel %vm778, %v776, %v658
    %v794 = vsel %vm778, %v777, %v660
    %v795 = vpack.c.bf16 %v780, %v779
    %v796 = vpack.c.bf16 %v256, %v253
    %v797 = vpack.c.bf16 %v782, %v781
    %v798 = vpack.c.bf16 %v262, %v259
    %v799 = vpack.c.bf16 %v784, %v783
    %v800 = vpack.c.bf16 %v268, %v265
    %v801 = vpack.c.bf16 %v786, %v785
    %v802 = vpack.c.bf16 %v321, %v305
    %v803 = vpack.c.bf16 %v788, %v787
    %v804 = vpack.c.bf16 %v280, %v277
    %v805 = vpack.c.bf16 %v790, %v789
    %v806 = vpack.c.bf16 %v286, %v283
    %v807 = vpack.c.bf16 %v792, %v791
    %v808 = vpack.c.bf16 %v292, %v289
    %v809 = vpack.c.bf16 %v794, %v793
    %v810 = vpack.c.bf16 %v324, %v308
    %v811 = vld [vmem:[%s1] sm:$0xf]
    %v812 = vld [vmem:[%s1 + $0x4] sm:$0xf]
    %v813 = vld [vmem:[%s1 + $0x8] sm:$0xf]
    %v814 = vld [vmem:[%s1 + $0xc] sm:$0xf]
    %v815 = vld [vmem:[%s1 + $0x10] sm:$0xf]
    %v816 = vld [vmem:[%s1 + $0x14] sm:$0xf]
    %v817 = vld [vmem:[%s1 + $0x18] sm:$0xf]
    %v818 = vld [vmem:[%s1 + $0x1c] sm:$0xf]
    %v819 = vld [vmem:[%s1 + $0x20] sm:$0xf]
    %v820 = vld [vmem:[%s1 + $0x24] sm:$0xf]
    %v821 = vld [vmem:[%s1 + $0x28] sm:$0xf]
    %v822 = vld [vmem:[%s1 + $0x2c] sm:$0xf]
    %v823 = vld [vmem:[%s1 + $0x30] sm:$0xf]
    %v824 = vld [vmem:[%s1 + $0x34] sm:$0xf]
    %v825 = vld [vmem:[%s1 + $0x38] sm:$0xf]
    %v826 = vld [vmem:[%s1 + $0x3c] sm:$0xf]
    %v827 = vld [vmem:[%s1 + $0x40] sm:$0xf]
    %v828 = vld [vmem:[%s1 + $0x44] sm:$0xf]
    %v829 = vld [vmem:[%s2] sm:$0x1]
    %v831 = vlaneseq
    %v832 = vshrl.u32 %v831, 7
    %v833 = vsub.s32 0, %v832
    %v834 = vrot.slane %v829, %v833
    %v854 = vunpack.c.l.b16 %v811
    %v855 = vunpack.c.l.b16 %v812
    %v856 = vunpack.c.l.b16 %v813
    %v857 = vunpack.c.l.b16 %v814
    %v858 = vunpack.c.l.b16 %v815
    %v859 = vunpack.c.l.b16 %v816
    %v860 = vunpack.c.l.b16 %v817
    %v861 = vunpack.c.l.b16 %v818
    %v862 = vunpack.c.l.b16 %v819
    %v863 = vunpack.c.l.b16 %v820
    %v864 = vunpack.c.l.b16 %v821
    %v865 = vunpack.c.l.b16 %v822
    %v866 = vunpack.c.l.b16 %v823
    %v867 = vunpack.c.l.b16 %v824
    %v868 = vunpack.c.l.b16 %v825
    %v869 = vunpack.c.l.b16 %v826
    %v870 = vunpack.c.l.b16 %v827
    %v871 = vunpack.c.l.b16 %v828
    %v872 = vpack.c.b16 %v855, %v854
    %v873 = vpack.c.b16 %v857, %v856
    %v874 = vpack.c.b16 %v859, %v858
    %v875 = vpack.c.b16 %v861, %v860
    %v876 = vpack.c.b16 %v863, %v862
    %v877 = vpack.c.b16 %v865, %v864
    %v878 = vpack.c.b16 %v867, %v866
    %v879 = vpack.c.b16 %v869, %v868
    %v880 = vpack.c.b16 %v871, %v870
    %v891 = vsel %vm56, %v796, 0
    %v894 = vsel %vm56, %v798, 0
    %v897 = vsel %vm56, %v800, 0
    %v900 = vsel %vm56, %v802, 0
    %v903 = vsel %vm56, %v804, 0
    %v906 = vsel %vm56, %v806, 0
    %v909 = vsel %vm56, %v808, 0
    %v912 = vsel %vm56, %v810, 0
    %914 = vmatprep.subr.bf16.mxu0 0
    %915 = vmatpush1.bf16.msra.mxu0 %v879
    %916 = vmatprep.subr.bf16.mxu0 0
    %917 = vmatpush1.bf16.msra.mxu0 %v878
    %918 = vmatprep.subr.bf16.mxu0 0
    %919 = vmatpush1.bf16.msra.mxu0 %v877
    %920 = vmatprep.subr.bf16.mxu0 0
    %921 = vmatpush1.bf16.msra.mxu0 %v876
    %922 = vmatprep.subr.bf16.mxu0 0
    %923 = vmatpush1.bf16.msra.mxu0 %v875
    %924 = vmatprep.subr.bf16.mxu0 0
    %925 = vmatpush1.bf16.msra.mxu0 %v874
    %926 = vmatprep.subr.bf16.mxu0 0
    %927 = vmatpush1.bf16.msra.mxu0 %v873
    %928 = vmatprep.subr.bf16.mxu0 0
    %929 = vmatpush1.bf16.msra.mxu0 %v872
    %930 = vmatprep.subr.bf16.mxu0 0
    %931 = vmatpush2.bf16.msra.mxu0 0
    %932 = vmatprep.subr.bf16.mxu0 0
    %933 = vmatpush2.bf16.msra.mxu0 0
    %934 = vmatprep.subr.bf16.mxu0 0
    %935 = vmatpush2.bf16.msra.mxu0 0
    %936 = vmatprep.subr.bf16.mxu0 0
    %937 = vmatpush2.bf16.msra.mxu0 0
    %938 = vmatprep.subr.bf16.mxu0 0
    %939 = vmatpush2.bf16.msra.mxu0 0
    %940 = vmatprep.subr.bf16.mxu0 0
    %941 = vmatpush2.bf16.msra.mxu0 0
    %942 = vmatprep.subr.bf16.mxu0 0
    %943 = vmatpush2.bf16.msra.mxu0 0
    %944 = vmatprep.subr.bf16.mxu0 0
    %945 = vmatpush2.bf16.msra.mxu0 %v880
    %946 = vmatprep.mubr.bf16.mxu0 %v891
    %947 = vmatmul.mubr.bf16.gmra.mxu0 %v795
    %v948 = vpop.f32.mrf.mxu0
    %v949 = vadd.f32 %v834, %v948
    %v950 = vpop.f32.mrf.mxu0
    %v951 = vpop.f32.mrf.mxu0
    %v952 = vadd.f32 %v834, %v951
    %v953 = vpop.f32.mrf.mxu0
    %954 = vmatprep.mubr.bf16.mxu0 %v894
    %955 = vmatmul.mubr.bf16.gmra.mxu0 %v797
    %v956 = vpop.f32.mrf.mxu0
    %v957 = vadd.f32 %v834, %v956
    %v958 = vpop.f32.mrf.mxu0
    %v959 = vpop.f32.mrf.mxu0
    %v960 = vadd.f32 %v834, %v959
    %v961 = vpop.f32.mrf.mxu0
    %962 = vmatprep.mubr.bf16.mxu0 %v897
    %963 = vmatmul.mubr.bf16.gmra.mxu0 %v799
    %v964 = vpop.f32.mrf.mxu0
    %v965 = vadd.f32 %v834, %v964
    %v966 = vpop.f32.mrf.mxu0
    %v967 = vpop.f32.mrf.mxu0
    %v968 = vadd.f32 %v834, %v967
    %v969 = vpop.f32.mrf.mxu0
    %970 = vmatprep.mubr.bf16.mxu0 %v900
    %971 = vmatmul.mubr.bf16.gmra.mxu0 %v801
    %v972 = vpop.f32.mrf.mxu0
    %v973 = vadd.f32 %v834, %v972
    %v974 = vpop.f32.mrf.mxu0
    %v975 = vpop.f32.mrf.mxu0
    %v976 = vadd.f32 %v834, %v975
    %v977 = vpop.f32.mrf.mxu0
    %978 = vmatprep.mubr.bf16.mxu0 %v903
    %979 = vmatmul.mubr.bf16.gmra.mxu0 %v803
    %v980 = vpop.f32.mrf.mxu0
    %v981 = vadd.f32 %v834, %v980
    %v982 = vpop.f32.mrf.mxu0
    %v983 = vpop.f32.mrf.mxu0
    %v984 = vadd.f32 %v834, %v983
    %v985 = vpop.f32.mrf.mxu0
    %986 = vmatprep.mubr.bf16.mxu0 %v906
    %987 = vmatmul.mubr.bf16.gmra.mxu0 %v805
    %v988 = vpop.f32.mrf.mxu0
    %v989 = vadd.f32 %v834, %v988
    %v990 = vpop.f32.mrf.mxu0
    %v991 = vpop.f32.mrf.mxu0
    %v992 = vadd.f32 %v834, %v991
    %v993 = vpop.f32.mrf.mxu0
    %994 = vmatprep.mubr.bf16.mxu0 %v909
    %995 = vmatmul.mubr.bf16.gmra.mxu0 %v807
    %v996 = vpop.f32.mrf.mxu0
    %v997 = vadd.f32 %v834, %v996
    %v998 = vpop.f32.mrf.mxu0
    %v999 = vpop.f32.mrf.mxu0
    %v1000 = vadd.f32 %v834, %v999
    %v1001 = vpop.f32.mrf.mxu0
    %1002 = vmatprep.mubr.bf16.mxu0 %v912
    %1003 = vmatmul.mubr.bf16.gmra.mxu0 %v809
    %v1004 = vpop.f32.mrf.mxu0
    %v1005 = vadd.f32 %v834, %v1004
    %v1006 = vpop.f32.mrf.mxu0
    %v1007 = vpop.f32.mrf.mxu0
    %v1008 = vadd.f32 %v834, %v1007
    %v1009 = vpop.f32.mrf.mxu0
    %1010 = vdwg.mxu0
    %v1011 = vmax.f32 %v949, 0.0
    %v1012 = vmax.f32 %v952, 0.0
    %v1013 = vmax.f32 %v957, 0.0
    %v1014 = vmax.f32 %v960, 0.0
    %v1015 = vmax.f32 %v965, 0.0
    %v1016 = vmax.f32 %v968, 0.0
    %v1017 = vmax.f32 %v973, 0.0
    %v1018 = vmax.f32 %v976, 0.0
    %v1019 = vmax.f32 %v981, 0.0
    %v1020 = vmax.f32 %v984, 0.0
    %v1021 = vmax.f32 %v989, 0.0
    %v1022 = vmax.f32 %v992, 0.0
    %v1023 = vmax.f32 %v997, 0.0
    %v1024 = vmax.f32 %v1000, 0.0
    %v1025 = vmax.f32 %v1005, 0.0
    %v1026 = vmax.f32 %v1008, 0.0
    %v1027 = vpack.c.bf16 %v1012, %v1011
    %v1028 = vpack.c.bf16 %v1014, %v1013
    %v1029 = vpack.c.bf16 %v1016, %v1015
    %v1030 = vpack.c.bf16 %v1018, %v1017
    %v1031 = vpack.c.bf16 %v1020, %v1019
    %v1032 = vpack.c.bf16 %v1022, %v1021
    %v1033 = vpack.c.bf16 %v1024, %v1023
    %v1034 = vpack.c.bf16 %v1026, %v1025
    %1035 = vst.msk [vmem:[%s98 + $0x1] sm:$0xff] %vm56, %v1011
    %1036 = vst.msk [vmem:[%s98 + $0x11] sm:$0xff] %vm56, %v1012
    %1037 = vst.msk [vmem:[%s98 + $0x21] sm:$0xff] %vm56, %v1013
    %1038 = vst.msk [vmem:[%s98 + $0x31] sm:$0xff] %vm56, %v1014
    %1039 = vst.msk [vmem:[%s98 + $0x41] sm:$0xff] %vm56, %v1015
    %1040 = vst.msk [vmem:[%s98 + $0x51] sm:$0xff] %vm56, %v1016
    %1041 = vst.msk [vmem:[%s98 + $0x61] sm:$0xff] %vm56, %v1017
    %1042 = vst.msk [vmem:[%s98 + $0x71] sm:$0xff] %vm56, %v1018
    %1043 = vst.msk [vmem:[%s98 + $0xa1] sm:$0xff] %vm56, %v1019
    %1044 = vst.msk [vmem:[%s98 + $0xb1] sm:$0xff] %vm56, %v1020
    %1045 = vst.msk [vmem:[%s98 + $0xc1] sm:$0xff] %vm56, %v1021
    %1046 = vst.msk [vmem:[%s98 + $0xd1] sm:$0xff] %vm56, %v1022
    %1047 = vst.msk [vmem:[%s98 + $0xe1] sm:$0xff] %vm56, %v1023
    %1048 = vst.msk [vmem:[%s98 + $0xf1] sm:$0xff] %vm56, %v1024
    %1049 = vst.msk [vmem:[%s98 + $0x101] sm:$0xff] %vm56, %v1025
    %1050 = vst.msk [vmem:[%s98 + $0x111] sm:$0xff] %vm56, %v1026
    %v1051 = vld [vmem:[#allocation2] sm:$0xff]
    %v1052 = vld [vmem:[#allocation2 + $0x8] sm:$0x3]
    %v1053 = vld [vmem:[#allocation2 + $0x10] sm:$0xff]
    %v1054 = vld [vmem:[#allocation2 + $0x18] sm:$0x3]
    %v1055 = vld [vmem:[#allocation2 + $0x20] sm:$0xff]
    %v1056 = vld [vmem:[#allocation2 + $0x28] sm:$0x3]
    %v1057 = vld [vmem:[#allocation2 + $0x30] sm:$0xff]
    %v1058 = vld [vmem:[#allocation2 + $0x38] sm:$0x3]
    %v1059 = vld [vmem:[#allocation2 + $0x40] sm:$0xff]
    %v1060 = vld [vmem:[#allocation2 + $0x48] sm:$0x3]
    %v1061 = vld [vmem:[#allocation2 + $0x50] sm:$0xff]
    %v1062 = vld [vmem:[#allocation2 + $0x58] sm:$0x3]
    %v1063 = vld [vmem:[#allocation2 + $0x60] sm:$0xff]
    %v1064 = vld [vmem:[#allocation2 + $0x68] sm:$0x3]
    %v1065 = vld [vmem:[#allocation2 + $0x70] sm:$0xff]
    %v1066 = vld [vmem:[#allocation2 + $0x78] sm:$0x3]
    %v1067 = vld [vmem:[#allocation2 + $0x80] sm:$0xff]
    %v1068 = vld [vmem:[#allocation2 + $0x88] sm:$0x3]
    %v1069 = vld [vmem:[#allocation2 + $0x90] sm:$0xff]
    %v1070 = vld [vmem:[#allocation2 + $0x98] sm:$0x3]
    %v1071 = vld [vmem:[#allocation2 + $0xa0] sm:$0xff]
    %v1072 = vld [vmem:[#allocation2 + $0xa8] sm:$0x3]
    %v1073 = vld [vmem:[#allocation2 + $0xb0] sm:$0xff]
    %v1074 = vld [vmem:[#allocation2 + $0xb8] sm:$0x3]
    %v1075 = vld [vmem:[#allocation2 + $0xc0] sm:$0xff]
    %v1076 = vld [vmem:[#allocation2 + $0xc8] sm:$0x3]
    %v1077 = vld [vmem:[#allocation2 + $0xd0] sm:$0xff]
    %v1078 = vld [vmem:[#allocation2 + $0xd8] sm:$0x3]
    %v1079 = vld [vmem:[#allocation2 + $0xe0] sm:$0xff]
    %v1080 = vld [vmem:[#allocation2 + $0xe8] sm:$0x3]
    %v1081 = vld [vmem:[#allocation2 + $0xf0] sm:$0xff]
    %v1082 = vld [vmem:[#allocation2 + $0xf8] sm:$0x3]
    %v1083 = vld [vmem:[#allocation2 + $0x100] sm:$0xff]
    %v1084 = vld [vmem:[#allocation2 + $0x108] sm:$0x3]
    %v1085 = vld [vmem:[#allocation2 + $0x110] sm:$0xff]
    %v1086 = vld [vmem:[#allocation2 + $0x118] sm:$0x3]
    %v1087 = vld [vmem:[#allocation2 + $0x120] sm:$0xff]
    %v1088 = vld [vmem:[#allocation2 + $0x128] sm:$0x3]
    %v1089 = vld [vmem:[#allocation2 + $0x130] sm:$0xff]
    %v1090 = vld [vmem:[#allocation2 + $0x138] sm:$0x3]
    %v1123 = vrot.slane %v1051, 1
    %v1124 = vrot.slane %v1052, 1
    %v1125 = vsel %vm195, %v1123, %v1124
    %v1126 = vrot.slane %v1053, 1
    %v1127 = vrot.slane %v1054, 1
    %v1128 = vsel %vm195, %v1126, %v1127
    %v1129 = vrot.slane %v1055, 1
    %v1130 = vrot.slane %v1056, 1
    %v1131 = vsel %vm195, %v1129, %v1130
    %v1132 = vrot.slane %v1057, 1
    %v1133 = vrot.slane %v1058, 1
    %v1134 = vsel %vm195, %v1132, %v1133
    %v1135 = vrot.slane %v1059, 1
    %v1136 = vrot.slane %v1060, 1
    %v1137 = vsel %vm195, %v1135, %v1136
    %v1138 = vrot.slane %v1061, 1
    %v1139 = vrot.slane %v1062, 1
    %v1140 = vsel %vm195, %v1138, %v1139
    %v1141 = vrot.slane %v1063, 1
    %v1142 = vrot.slane %v1064, 1
    %v1143 = vsel %vm195, %v1141, %v1142
    %v1144 = vrot.slane %v1065, 1
    %v1145 = vrot.slane %v1066, 1
    %v1146 = vsel %vm195, %v1144, %v1145
    %v1147 = vrot.slane %v1071, 1
    %v1148 = vrot.slane %v1072, 1
    %v1149 = vsel %vm195, %v1147, %v1148
    %v1150 = vrot.slane %v1073, 1
    %v1151 = vrot.slane %v1074, 1
    %v1152 = vsel %vm195, %v1150, %v1151
    %v1153 = vrot.slane %v1075, 1
    %v1154 = vrot.slane %v1076, 1
    %v1155 = vsel %vm195, %v1153, %v1154
    %v1156 = vrot.slane %v1077, 1
    %v1157 = vrot.slane %v1078, 1
    %v1158 = vsel %vm195, %v1156, %v1157
    %v1159 = vrot.slane %v1079, 1
    %v1160 = vrot.slane %v1080, 1
    %v1161 = vsel %vm195, %v1159, %v1160
    %v1162 = vrot.slane %v1081, 1
    %v1163 = vrot.slane %v1082, 1
    %v1164 = vsel %vm195, %v1162, %v1163
    %v1165 = vrot.slane %v1083, 1
    %v1166 = vrot.slane %v1084, 1
    %v1167 = vsel %vm195, %v1165, %v1166
    %v1168 = vrot.slane %v1085, 1
    %v1169 = vrot.slane %v1086, 1
    %v1170 = vsel %vm195, %v1168, %v1169
    %v1171 = vrot.slane %v1051, 2
    %v1172 = vrot.slane %v1052, 2
    %v1173 = vsel %vm244, %v1171, %v1172
    %v1174 = vrot.slane %v1053, 2
    %v1175 = vrot.slane %v1054, 2
    %v1176 = vsel %vm244, %v1174, %v1175
    %v1177 = vrot.slane %v1055, 2
    %v1178 = vrot.slane %v1056, 2
    %v1179 = vsel %vm244, %v1177, %v1178
    %v1180 = vrot.slane %v1057, 2
    %v1181 = vrot.slane %v1058, 2
    %v1182 = vsel %vm244, %v1180, %v1181
    %v1183 = vrot.slane %v1059, 2
    %v1184 = vrot.slane %v1060, 2
    %v1185 = vsel %vm244, %v1183, %v1184
    %v1186 = vrot.slane %v1061, 2
    %v1187 = vrot.slane %v1062, 2
    %v1188 = vsel %vm244, %v1186, %v1187
    %v1189 = vrot.slane %v1063, 2
    %v1190 = vrot.slane %v1064, 2
    %v1191 = vsel %vm244, %v1189, %v1190
    %v1192 = vrot.slane %v1065, 2
    %v1193 = vrot.slane %v1066, 2
    %v1194 = vsel %vm244, %v1192, %v1193
    %v1195 = vrot.slane %v1071, 2
    %v1196 = vrot.slane %v1072, 2
    %v1197 = vsel %vm244, %v1195, %v1196
    %v1198 = vrot.slane %v1073, 2
    %v1199 = vrot.slane %v1074, 2
    %v1200 = vsel %vm244, %v1198, %v1199
    %v1201 = vrot.slane %v1075, 2
    %v1202 = vrot.slane %v1076, 2
    %v1203 = vsel %vm244, %v1201, %v1202
    %v1204 = vrot.slane %v1077, 2
    %v1205 = vrot.slane %v1078, 2
    %v1206 = vsel %vm244, %v1204, %v1205
    %v1207 = vrot.slane %v1079, 2
    %v1208 = vrot.slane %v1080, 2
    %v1209 = vsel %vm244, %v1207, %v1208
    %v1210 = vrot.slane %v1081, 2
    %v1211 = vrot.slane %v1082, 2
    %v1212 = vsel %vm244, %v1210, %v1211
    %v1213 = vrot.slane %v1083, 2
    %v1214 = vrot.slane %v1084, 2
    %v1215 = vsel %vm244, %v1213, %v1214
    %v1216 = vrot.slane %v1085, 2
    %v1217 = vrot.slane %v1086, 2
    %v1218 = vsel %vm244, %v1216, %v1217
    %v1223 = vrot.slane %v1067, 1
    %v1224 = vrot.slane %v1068, 1
    %v1225 = vsel %vm195, %v1223, %v1224
    %v1226 = vrot.slane %v1087, 1
    %v1227 = vrot.slane %v1088, 1
    %v1228 = vsel %vm195, %v1226, %v1227
    %v1229 = vrot.slane %v1067, 2
    %v1230 = vrot.slane %v1068, 2
    %v1231 = vsel %vm244, %v1229, %v1230
    %v1232 = vrot.slane %v1087, 2
    %v1233 = vrot.slane %v1088, 2
    %v1234 = vsel %vm244, %v1232, %v1233
    %v1239 = vrot.slane %v1069, 1
    %v1240 = vrot.slane %v1070, 1
    %v1241 = vsel %vm195, %v1239, %v1240
    %v1242 = vrot.slane %v1089, 1
    %v1243 = vrot.slane %v1090, 1
    %v1244 = vsel %vm195, %v1242, %v1243
    %v1245 = vrot.slane %v1069, 2
    %v1246 = vrot.slane %v1070, 2
    %v1247 = vsel %vm244, %v1245, %v1246
    %v1248 = vrot.slane %v1089, 2
    %v1249 = vrot.slane %v1090, 2
    %v1250 = vsel %vm244, %v1248, %v1249
    %1267 = vrot.lane.b32.xlu0 %v1125, 16
    %v1268 = vpop.permute.xlu0 %1267
    %1269 = vrot.lane.b32.xlu0 %v1128, 16
    %v1270 = vpop.permute.xlu0 %1269
    %1271 = vrot.lane.b32.xlu0 %v1131, 16
    %v1272 = vpop.permute.xlu0 %1271
    %1273 = vrot.lane.b32.xlu0 %v1134, 16
    %v1274 = vpop.permute.xlu0 %1273
    %1275 = vrot.lane.b32.xlu0 %v1137, 16
    %v1276 = vpop.permute.xlu0 %1275
    %1277 = vrot.lane.b32.xlu0 %v1140, 16
    %v1278 = vpop.permute.xlu0 %1277
    %1279 = vrot.lane.b32.xlu0 %v1143, 16
    %v1280 = vpop.permute.xlu0 %1279
    %1281 = vrot.lane.b32.xlu0 %v1146, 16
    %v1282 = vpop.permute.xlu0 %1281
    %1283 = vrot.lane.b32.xlu0 %v1149, 16
    %v1284 = vpop.permute.xlu0 %1283
    %1285 = vrot.lane.b32.xlu0 %v1152, 16
    %v1286 = vpop.permute.xlu0 %1285
    %1287 = vrot.lane.b32.xlu0 %v1155, 16
    %v1288 = vpop.permute.xlu0 %1287
    %1289 = vrot.lane.b32.xlu0 %v1158, 16
    %v1290 = vpop.permute.xlu0 %1289
    %1291 = vrot.lane.b32.xlu0 %v1161, 16
    %v1292 = vpop.permute.xlu0 %1291
    %1293 = vrot.lane.b32.xlu0 %v1164, 16
    %v1294 = vpop.permute.xlu0 %1293
    %1295 = vrot.lane.b32.xlu0 %v1167, 16
    %v1296 = vpop.permute.xlu0 %1295
    %1297 = vrot.lane.b32.xlu0 %v1170, 16
    %v1298 = vpop.permute.xlu0 %1297
    %1315 = vrot.lane.b32.xlu0 %v1173, 32
    %v1316 = vpop.permute.xlu0 %1315
    %1317 = vrot.lane.b32.xlu0 %v1176, 32
    %v1318 = vpop.permute.xlu0 %1317
    %1319 = vrot.lane.b32.xlu0 %v1179, 32
    %v1320 = vpop.permute.xlu0 %1319
    %1321 = vrot.lane.b32.xlu0 %v1182, 32
    %v1322 = vpop.permute.xlu0 %1321
    %1323 = vrot.lane.b32.xlu0 %v1185, 32
    %v1324 = vpop.permute.xlu0 %1323
    %1325 = vrot.lane.b32.xlu0 %v1188, 32
    %v1326 = vpop.permute.xlu0 %1325
    %1327 = vrot.lane.b32.xlu0 %v1191, 32
    %v1328 = vpop.permute.xlu0 %1327
    %1329 = vrot.lane.b32.xlu0 %v1194, 32
    %v1330 = vpop.permute.xlu0 %1329
    %1331 = vrot.lane.b32.xlu0 %v1197, 32
    %v1332 = vpop.permute.xlu0 %1331
    %1333 = vrot.lane.b32.xlu0 %v1200, 32
    %v1334 = vpop.permute.xlu0 %1333
    %1335 = vrot.lane.b32.xlu0 %v1203, 32
    %v1336 = vpop.permute.xlu0 %1335
    %1337 = vrot.lane.b32.xlu0 %v1206, 32
    %v1338 = vpop.permute.xlu0 %1337
    %1339 = vrot.lane.b32.xlu0 %v1209, 32
    %v1340 = vpop.permute.xlu0 %1339
    %1341 = vrot.lane.b32.xlu0 %v1212, 32
    %v1342 = vpop.permute.xlu0 %1341
    %1343 = vrot.lane.b32.xlu0 %v1215, 32
    %v1344 = vpop.permute.xlu0 %1343
    %1345 = vrot.lane.b32.xlu0 %v1218, 32
    %v1346 = vpop.permute.xlu0 %1345
    %1363 = vrot.lane.b32.xlu0 %v1053, 48
    %v1364 = vpop.permute.xlu0 %1363
    %1365 = vrot.lane.b32.xlu0 %v1055, 48
    %v1366 = vpop.permute.xlu0 %1365
    %1367 = vrot.lane.b32.xlu0 %v1057, 48
    %v1368 = vpop.permute.xlu0 %1367
    %1369 = vrot.lane.b32.xlu0 %v1059, 48
    %v1370 = vpop.permute.xlu0 %1369
    %1371 = vrot.lane.b32.xlu0 %v1061, 48
    %v1372 = vpop.permute.xlu0 %1371
    %1373 = vrot.lane.b32.xlu0 %v1063, 48
    %v1374 = vpop.permute.xlu0 %1373
    %1375 = vrot.lane.b32.xlu0 %v1065, 48
    %v1376 = vpop.permute.xlu0 %1375
    %1377 = vrot.lane.b32.xlu0 %v1067, 48
    %v1378 = vpop.permute.xlu0 %1377
    %1379 = vrot.lane.b32.xlu0 %v1073, 48
    %v1380 = vpop.permute.xlu0 %1379
    %1381 = vrot.lane.b32.xlu0 %v1075, 48
    %v1382 = vpop.permute.xlu0 %1381
    %1383 = vrot.lane.b32.xlu0 %v1077, 48
    %v1384 = vpop.permute.xlu0 %1383
    %1385 = vrot.lane.b32.xlu0 %v1079, 48
    %v1386 = vpop.permute.xlu0 %1385
    %1387 = vrot.lane.b32.xlu0 %v1081, 48
    %v1388 = vpop.permute.xlu0 %1387
    %1389 = vrot.lane.b32.xlu0 %v1083, 48
    %v1390 = vpop.permute.xlu0 %1389
    %1391 = vrot.lane.b32.xlu0 %v1085, 48
    %v1392 = vpop.permute.xlu0 %1391
    %1393 = vrot.lane.b32.xlu0 %v1087, 48
    %v1394 = vpop.permute.xlu0 %1393
    %1411 = vrot.lane.b32.xlu0 %v1128, 64
    %v1412 = vpop.permute.xlu0 %1411
    %1413 = vrot.lane.b32.xlu0 %v1131, 64
    %v1414 = vpop.permute.xlu0 %1413
    %1415 = vrot.lane.b32.xlu0 %v1134, 64
    %v1416 = vpop.permute.xlu0 %1415
    %1417 = vrot.lane.b32.xlu0 %v1137, 64
    %v1418 = vpop.permute.xlu0 %1417
    %1419 = vrot.lane.b32.xlu0 %v1140, 64
    %v1420 = vpop.permute.xlu0 %1419
    %1421 = vrot.lane.b32.xlu0 %v1143, 64
    %v1422 = vpop.permute.xlu0 %1421
    %1423 = vrot.lane.b32.xlu0 %v1146, 64
    %v1424 = vpop.permute.xlu0 %1423
    %1425 = vrot.lane.b32.xlu0 %v1225, 64
    %v1426 = vpop.permute.xlu0 %1425
    %1427 = vrot.lane.b32.xlu0 %v1152, 64
    %v1428 = vpop.permute.xlu0 %1427
    %1429 = vrot.lane.b32.xlu0 %v1155, 64
    %v1430 = vpop.permute.xlu0 %1429
    %1431 = vrot.lane.b32.xlu0 %v1158, 64
    %v1432 = vpop.permute.xlu0 %1431
    %1433 = vrot.lane.b32.xlu0 %v1161, 64
    %v1434 = vpop.permute.xlu0 %1433
    %1435 = vrot.lane.b32.xlu0 %v1164, 64
    %v1436 = vpop.permute.xlu0 %1435
    %1437 = vrot.lane.b32.xlu0 %v1167, 64
    %v1438 = vpop.permute.xlu0 %1437
    %1439 = vrot.lane.b32.xlu0 %v1170, 64
    %v1440 = vpop.permute.xlu0 %1439
    %1441 = vrot.lane.b32.xlu0 %v1228, 64
    %v1442 = vpop.permute.xlu0 %1441
    %1459 = vrot.lane.b32.xlu0 %v1176, 80
    %v1460 = vpop.permute.xlu0 %1459
    %1461 = vrot.lane.b32.xlu0 %v1179, 80
    %v1462 = vpop.permute.xlu0 %1461
    %1463 = vrot.lane.b32.xlu0 %v1182, 80
    %v1464 = vpop.permute.xlu0 %1463
    %1465 = vrot.lane.b32.xlu0 %v1185, 80
    %v1466 = vpop.permute.xlu0 %1465
    %1467 = vrot.lane.b32.xlu0 %v1188, 80
    %v1468 = vpop.permute.xlu0 %1467
    %1469 = vrot.lane.b32.xlu0 %v1191, 80
    %v1470 = vpop.permute.xlu0 %1469
    %1471 = vrot.lane.b32.xlu0 %v1194, 80
    %v1472 = vpop.permute.xlu0 %1471
    %1473 = vrot.lane.b32.xlu0 %v1231, 80
    %v1474 = vpop.permute.xlu0 %1473
    %1475 = vrot.lane.b32.xlu0 %v1200, 80
    %v1476 = vpop.permute.xlu0 %1475
    %1477 = vrot.lane.b32.xlu0 %v1203, 80
    %v1478 = vpop.permute.xlu0 %1477
    %1479 = vrot.lane.b32.xlu0 %v1206, 80
    %v1480 = vpop.permute.xlu0 %1479
    %1481 = vrot.lane.b32.xlu0 %v1209, 80
    %v1482 = vpop.permute.xlu0 %1481
    %1483 = vrot.lane.b32.xlu0 %v1212, 80
    %v1484 = vpop.permute.xlu0 %1483
    %1485 = vrot.lane.b32.xlu0 %v1215, 80
    %v1486 = vpop.permute.xlu0 %1485
    %1487 = vrot.lane.b32.xlu0 %v1218, 80
    %v1488 = vpop.permute.xlu0 %1487
    %1489 = vrot.lane.b32.xlu0 %v1234, 80
    %v1490 = vpop.permute.xlu0 %1489
    %1507 = vrot.lane.b32.xlu0 %v1055, 96
    %v1508 = vpop.permute.xlu0 %1507
    %1509 = vrot.lane.b32.xlu0 %v1057, 96
    %v1510 = vpop.permute.xlu0 %1509
    %1511 = vrot.lane.b32.xlu0 %v1059, 96
    %v1512 = vpop.permute.xlu0 %1511
    %1513 = vrot.lane.b32.xlu0 %v1061, 96
    %v1514 = vpop.permute.xlu0 %1513
    %1515 = vrot.lane.b32.xlu0 %v1063, 96
    %v1516 = vpop.permute.xlu0 %1515
    %1517 = vrot.lane.b32.xlu0 %v1065, 96
    %v1518 = vpop.permute.xlu0 %1517
    %1519 = vrot.lane.b32.xlu0 %v1067, 96
    %v1520 = vpop.permute.xlu0 %1519
    %1521 = vrot.lane.b32.xlu0 %v1069, 96
    %v1522 = vpop.permute.xlu0 %1521
    %1523 = vrot.lane.b32.xlu0 %v1075, 96
    %v1524 = vpop.permute.xlu0 %1523
    %1525 = vrot.lane.b32.xlu0 %v1077, 96
    %v1526 = vpop.permute.xlu0 %1525
    %1527 = vrot.lane.b32.xlu0 %v1079, 96
    %v1528 = vpop.permute.xlu0 %1527
    %1529 = vrot.lane.b32.xlu0 %v1081, 96
    %v1530 = vpop.permute.xlu0 %1529
    %1531 = vrot.lane.b32.xlu0 %v1083, 96
    %v1532 = vpop.permute.xlu0 %1531
    %1533 = vrot.lane.b32.xlu0 %v1085, 96
    %v1534 = vpop.permute.xlu0 %1533
    %1535 = vrot.lane.b32.xlu0 %v1087, 96
    %v1536 = vpop.permute.xlu0 %1535
    %1537 = vrot.lane.b32.xlu0 %v1089, 96
    %v1538 = vpop.permute.xlu0 %1537
    %1555 = vrot.lane.b32.xlu0 %v1131, 112
    %v1556 = vpop.permute.xlu0 %1555
    %1557 = vrot.lane.b32.xlu0 %v1134, 112
    %v1558 = vpop.permute.xlu0 %1557
    %1559 = vrot.lane.b32.xlu0 %v1137, 112
    %v1560 = vpop.permute.xlu0 %1559
    %1561 = vrot.lane.b32.xlu0 %v1140, 112
    %v1562 = vpop.permute.xlu0 %1561
    %1563 = vrot.lane.b32.xlu0 %v1143, 112
    %v1564 = vpop.permute.xlu0 %1563
    %1565 = vrot.lane.b32.xlu0 %v1146, 112
    %v1566 = vpop.permute.xlu0 %1565
    %1567 = vrot.lane.b32.xlu0 %v1225, 112
    %v1568 = vpop.permute.xlu0 %1567
    %1569 = vrot.lane.b32.xlu0 %v1241, 112
    %v1570 = vpop.permute.xlu0 %1569
    %1571 = vrot.lane.b32.xlu0 %v1155, 112
    %v1572 = vpop.permute.xlu0 %1571
    %1573 = vrot.lane.b32.xlu0 %v1158, 112
    %v1574 = vpop.permute.xlu0 %1573
    %1575 = vrot.lane.b32.xlu0 %v1161, 112
    %v1576 = vpop.permute.xlu0 %1575
    %1577 = vrot.lane.b32.xlu0 %v1164, 112
    %v1578 = vpop.permute.xlu0 %1577
    %1579 = vrot.lane.b32.xlu0 %v1167, 112
    %v1580 = vpop.permute.xlu0 %1579
    %1581 = vrot.lane.b32.xlu0 %v1170, 112
    %v1582 = vpop.permute.xlu0 %1581
    %1583 = vrot.lane.b32.xlu0 %v1228, 112
    %v1584 = vpop.permute.xlu0 %1583
    %1585 = vrot.lane.b32.xlu0 %v1244, 112
    %v1586 = vpop.permute.xlu0 %1585
    %v1603 = vsel %vm56, %v1051, %v1268
    %v1604 = vsel %vm56, %v1053, %v1270
    %v1605 = vsel %vm56, %v1055, %v1272
    %v1606 = vsel %vm56, %v1057, %v1274
    %v1607 = vsel %vm56, %v1059, %v1276
    %v1608 = vsel %vm56, %v1061, %v1278
    %v1609 = vsel %vm56, %v1063, %v1280
    %v1610 = vsel %vm56, %v1065, %v1282
    %v1611 = vsel %vm56, %v1071, %v1284
    %v1612 = vsel %vm56, %v1073, %v1286
    %v1613 = vsel %vm56, %v1075, %v1288
    %v1614 = vsel %vm56, %v1077, %v1290
    %v1615 = vsel %vm56, %v1079, %v1292
    %v1616 = vsel %vm56, %v1081, %v1294
    %v1617 = vsel %vm56, %v1083, %v1296
    %v1618 = vsel %vm56, %v1085, %v1298
    %v1619 = vsel %vm693, %v1603, %v1316
    %v1620 = vsel %vm693, %v1604, %v1318
    %v1621 = vsel %vm693, %v1605, %v1320
    %v1622 = vsel %vm693, %v1606, %v1322
    %v1623 = vsel %vm693, %v1607, %v1324
    %v1624 = vsel %vm693, %v1608, %v1326
    %v1625 = vsel %vm693, %v1609, %v1328
    %v1626 = vsel %vm693, %v1610, %v1330
    %v1627 = vsel %vm693, %v1611, %v1332
    %v1628 = vsel %vm693, %v1612, %v1334
    %v1629 = vsel %vm693, %v1613, %v1336
    %v1630 = vsel %vm693, %v1614, %v1338
    %v1631 = vsel %vm693, %v1615, %v1340
    %v1632 = vsel %vm693, %v1616, %v1342
    %v1633 = vsel %vm693, %v1617, %v1344
    %v1634 = vsel %vm693, %v1618, %v1346
    %v1635 = vsel %vm710, %v1619, %v1364
    %v1636 = vsel %vm710, %v1620, %v1366
    %v1637 = vsel %vm710, %v1621, %v1368
    %v1638 = vsel %vm710, %v1622, %v1370
    %v1639 = vsel %vm710, %v1623, %v1372
    %v1640 = vsel %vm710, %v1624, %v1374
    %v1641 = vsel %vm710, %v1625, %v1376
    %v1642 = vsel %vm710, %v1626, %v1378
    %v1643 = vsel %vm710, %v1627, %v1380
    %v1644 = vsel %vm710, %v1628, %v1382
    %v1645 = vsel %vm710, %v1629, %v1384
    %v1646 = vsel %vm710, %v1630, %v1386
    %v1647 = vsel %vm710, %v1631, %v1388
    %v1648 = vsel %vm710, %v1632, %v1390
    %v1649 = vsel %vm710, %v1633, %v1392
    %v1650 = vsel %vm710, %v1634, %v1394
    %v1651 = vsel %vm727, %v1635, %v1412
    %v1652 = vsel %vm727, %v1636, %v1414
    %v1653 = vsel %vm727, %v1637, %v1416
    %v1654 = vsel %vm727, %v1638, %v1418
    %v1655 = vsel %vm727, %v1639, %v1420
    %v1656 = vsel %vm727, %v1640, %v1422
    %v1657 = vsel %vm727, %v1641, %v1424
    %v1658 = vsel %vm727, %v1642, %v1426
    %v1659 = vsel %vm727, %v1643, %v1428
    %v1660 = vsel %vm727, %v1644, %v1430
    %v1661 = vsel %vm727, %v1645, %v1432
    %v1662 = vsel %vm727, %v1646, %v1434
    %v1663 = vsel %vm727, %v1647, %v1436
    %v1664 = vsel %vm727, %v1648, %v1438
    %v1665 = vsel %vm727, %v1649, %v1440
    %v1666 = vsel %vm727, %v1650, %v1442
    %v1667 = vsel %vm744, %v1651, %v1460
    %v1668 = vsel %vm744, %v1652, %v1462
    %v1669 = vsel %vm744, %v1653, %v1464
    %v1670 = vsel %vm744, %v1654, %v1466
    %v1671 = vsel %vm744, %v1655, %v1468
    %v1672 = vsel %vm744, %v1656, %v1470
    %v1673 = vsel %vm744, %v1657, %v1472
    %v1674 = vsel %vm744, %v1658, %v1474
    %v1675 = vsel %vm744, %v1659, %v1476
    %v1676 = vsel %vm744, %v1660, %v1478
    %v1677 = vsel %vm744, %v1661, %v1480
    %v1678 = vsel %vm744, %v1662, %v1482
    %v1679 = vsel %vm744, %v1663, %v1484
    %v1680 = vsel %vm744, %v1664, %v1486
    %v1681 = vsel %vm744, %v1665, %v1488
    %v1682 = vsel %vm744, %v1666, %v1490
    %v1683 = vsel %vm761, %v1667, %v1508
    %v1684 = vsel %vm761, %v1668, %v1510
    %v1685 = vsel %vm761, %v1669, %v1512
    %v1686 = vsel %vm761, %v1670, %v1514
    %v1687 = vsel %vm761, %v1671, %v1516
    %v1688 = vsel %vm761, %v1672, %v1518
    %v1689 = vsel %vm761, %v1673, %v1520
    %v1690 = vsel %vm761, %v1674, %v1522
    %v1691 = vsel %vm761, %v1675, %v1524
    %v1692 = vsel %vm761, %v1676, %v1526
    %v1693 = vsel %vm761, %v1677, %v1528
    %v1694 = vsel %vm761, %v1678, %v1530
    %v1695 = vsel %vm761, %v1679, %v1532
    %v1696 = vsel %vm761, %v1680, %v1534
    %v1697 = vsel %vm761, %v1681, %v1536
    %v1698 = vsel %vm761, %v1682, %v1538
    %v1699 = vsel %vm778, %v1683, %v1556
    %v1700 = vsel %vm778, %v1684, %v1558
    %v1701 = vsel %vm778, %v1685, %v1560
    %v1702 = vsel %vm778, %v1686, %v1562
    %v1703 = vsel %vm778, %v1687, %v1564
    %v1704 = vsel %vm778, %v1688, %v1566
    %v1705 = vsel %vm778, %v1689, %v1568
    %v1706 = vsel %vm778, %v1690, %v1570
    %v1707 = vsel %vm778, %v1691, %v1572
    %v1708 = vsel %vm778, %v1692, %v1574
    %v1709 = vsel %vm778, %v1693, %v1576
    %v1710 = vsel %vm778, %v1694, %v1578
    %v1711 = vsel %vm778, %v1695, %v1580
    %v1712 = vsel %vm778, %v1696, %v1582
    %v1713 = vsel %vm778, %v1697, %v1584
    %v1714 = vsel %vm778, %v1698, %v1586
    %v1715 = vpack.c.bf16 %v1700, %v1699
    %v1716 = vpack.c.bf16 %v1182, %v1179
    %v1717 = vpack.c.bf16 %v1702, %v1701
    %v1718 = vpack.c.bf16 %v1188, %v1185
    %v1719 = vpack.c.bf16 %v1704, %v1703
    %v1720 = vpack.c.bf16 %v1194, %v1191
    %v1721 = vpack.c.bf16 %v1706, %v1705
    %v1722 = vpack.c.bf16 %v1247, %v1231
    %v1723 = vpack.c.bf16 %v1708, %v1707
    %v1724 = vpack.c.bf16 %v1206, %v1203
    %v1725 = vpack.c.bf16 %v1710, %v1709
    %v1726 = vpack.c.bf16 %v1212, %v1209
    %v1727 = vpack.c.bf16 %v1712, %v1711
    %v1728 = vpack.c.bf16 %v1218, %v1215
    %v1729 = vpack.c.bf16 %v1714, %v1713
    %v1730 = vpack.c.bf16 %v1250, %v1234
    %v1731 = vld [vmem:[%s3] sm:$0xf]
    %v1732 = vld [vmem:[%s3 + $0x4] sm:$0xf]
    %v1733 = vld [vmem:[%s3 + $0x8] sm:$0xf]
    %v1734 = vld [vmem:[%s3 + $0xc] sm:$0xf]
    %v1735 = vld [vmem:[%s3 + $0x10] sm:$0xf]
    %v1736 = vld [vmem:[%s3 + $0x14] sm:$0xf]
    %v1737 = vld [vmem:[%s3 + $0x18] sm:$0xf]
    %v1738 = vld [vmem:[%s3 + $0x1c] sm:$0xf]
    %v1739 = vld [vmem:[%s3 + $0x20] sm:$0xf]
    %v1740 = vld [vmem:[%s3 + $0x24] sm:$0xf]
    %v1741 = vld [vmem:[%s3 + $0x28] sm:$0xf]
    %v1742 = vld [vmem:[%s3 + $0x2c] sm:$0xf]
    %v1743 = vld [vmem:[%s3 + $0x30] sm:$0xf]
    %v1744 = vld [vmem:[%s3 + $0x34] sm:$0xf]
    %v1745 = vld [vmem:[%s3 + $0x38] sm:$0xf]
    %v1746 = vld [vmem:[%s3 + $0x3c] sm:$0xf]
    %v1747 = vld [vmem:[%s3 + $0x40] sm:$0xf]
    %v1748 = vld [vmem:[%s3 + $0x44] sm:$0xf]
    %v1749 = vld [vmem:[%s4] sm:$0x1]
    %v1751 = vlaneseq
    %v1752 = vshrl.u32 %v1751, 7
    %v1753 = vsub.s32 0, %v1752
    %v1754 = vrot.slane %v1749, %v1753
    %v1774 = vunpack.c.l.b16 %v1731
    %v1775 = vunpack.c.l.b16 %v1732
    %v1776 = vunpack.c.l.b16 %v1733
    %v1777 = vunpack.c.l.b16 %v1734
    %v1778 = vunpack.c.l.b16 %v1735
    %v1779 = vunpack.c.l.b16 %v1736
    %v1780 = vunpack.c.l.b16 %v1737
    %v1781 = vunpack.c.l.b16 %v1738
    %v1782 = vunpack.c.l.b16 %v1739
    %v1783 = vunpack.c.l.b16 %v1740
    %v1784 = vunpack.c.l.b16 %v1741
    %v1785 = vunpack.c.l.b16 %v1742
    %v1786 = vunpack.c.l.b16 %v1743
    %v1787 = vunpack.c.l.b16 %v1744
    %v1788 = vunpack.c.l.b16 %v1745
    %v1789 = vunpack.c.l.b16 %v1746
    %v1790 = vunpack.c.l.b16 %v1747
    %v1791 = vunpack.c.l.b16 %v1748
    %v1792 = vpack.c.b16 %v1775, %v1774
    %v1793 = vpack.c.b16 %v1777, %v1776
    %v1794 = vpack.c.b16 %v1779, %v1778
    %v1795 = vpack.c.b16 %v1781, %v1780
    %v1796 = vpack.c.b16 %v1783, %v1782
    %v1797 = vpack.c.b16 %v1785, %v1784
    %v1798 = vpack.c.b16 %v1787, %v1786
    %v1799 = vpack.c.b16 %v1789, %v1788
    %v1800 = vpack.c.b16 %v1791, %v1790
    %v1811 = vsel %vm56, %v1716, 0
    %v1814 = vsel %vm56, %v1718, 0
    %v1817 = vsel %vm56, %v1720, 0
    %v1820 = vsel %vm56, %v1722, 0
    %v1823 = vsel %vm56, %v1724, 0
    %v1826 = vsel %vm56, %v1726, 0
    %v1829 = vsel %vm56, %v1728, 0
    %v1832 = vsel %vm56, %v1730, 0
    %1834 = vmatprep.subr.bf16.mxu0 0
    %1835 = vmatpush1.bf16.msra.mxu0 %v1799
    %1836 = vmatprep.subr.bf16.mxu0 0
    %1837 = vmatpush1.bf16.msra.mxu0 %v1798
    %1838 = vmatprep.subr.bf16.mxu0 0
    %1839 = vmatpush1.bf16.msra.mxu0 %v1797
    %1840 = vmatprep.subr.bf16.mxu0 0
    %1841 = vmatpush1.bf16.msra.mxu0 %v1796
    %1842 = vmatprep.subr.bf16.mxu0 0
    %1843 = vmatpush1.bf16.msra.mxu0 %v1795
    %1844 = vmatprep.subr.bf16.mxu0 0
    %1845 = vmatpush1.bf16.msra.mxu0 %v1794
    %1846 = vmatprep.subr.bf16.mxu0 0
    %1847 = vmatpush1.bf16.msra.mxu0 %v1793
    %1848 = vmatprep.subr.bf16.mxu0 0
    %1849 = vmatpush1.bf16.msra.mxu0 %v1792
    %1850 = vmatprep.subr.bf16.mxu0 0
    %1851 = vmatpush2.bf16.msra.mxu0 0
    %1852 = vmatprep.subr.bf16.mxu0 0
    %1853 = vmatpush2.bf16.msra.mxu0 0
    %1854 = vmatprep.subr.bf16.mxu0 0
    %1855 = vmatpush2.bf16.msra.mxu0 0
    %1856 = vmatprep.subr.bf16.mxu0 0
    %1857 = vmatpush2.bf16.msra.mxu0 0
    %1858 = vmatprep.subr.bf16.mxu0 0
    %1859 = vmatpush2.bf16.msra.mxu0 0
    %1860 = vmatprep.subr.bf16.mxu0 0
    %1861 = vmatpush2.bf16.msra.mxu0 0
    %1862 = vmatprep.subr.bf16.mxu0 0
    %1863 = vmatpush2.bf16.msra.mxu0 0
    %1864 = vmatprep.subr.bf16.mxu0 0
    %1865 = vmatpush2.bf16.msra.mxu0 %v1800
    %1866 = vmatprep.mubr.bf16.mxu0 %v1811
    %1867 = vmatmul.mubr.bf16.gmra.mxu0 %v1715
    %v1868 = vpop.f32.mrf.mxu0
    %v1869 = vadd.f32 %v1754, %v1868
    %v1870 = vpop.f32.mrf.mxu0
    %v1871 = vpop.f32.mrf.mxu0
    %v1872 = vadd.f32 %v1754, %v1871
    %v1873 = vpop.f32.mrf.mxu0
    %1874 = vmatprep.mubr.bf16.mxu0 %v1814
    %1875 = vmatmul.mubr.bf16.gmra.mxu0 %v1717
    %v1876 = vpop.f32.mrf.mxu0
    %v1877 = vadd.f32 %v1754, %v1876
    %v1878 = vpop.f32.mrf.mxu0
    %v1879 = vpop.f32.mrf.mxu0
    %v1880 = vadd.f32 %v1754, %v1879
    %v1881 = vpop.f32.mrf.mxu0
    %1882 = vmatprep.mubr.bf16.mxu0 %v1817
    %1883 = vmatmul.mubr.bf16.gmra.mxu0 %v1719
    %v1884 = vpop.f32.mrf.mxu0
    %v1885 = vadd.f32 %v1754, %v1884
    %v1886 = vpop.f32.mrf.mxu0
    %v1887 = vpop.f32.mrf.mxu0
    %v1888 = vadd.f32 %v1754, %v1887
    %v1889 = vpop.f32.mrf.mxu0
    %1890 = vmatprep.mubr.bf16.mxu0 %v1820
    %1891 = vmatmul.mubr.bf16.gmra.mxu0 %v1721
    %v1892 = vpop.f32.mrf.mxu0
    %v1893 = vadd.f32 %v1754, %v1892
    %v1894 = vpop.f32.mrf.mxu0
    %v1895 = vpop.f32.mrf.mxu0
    %v1896 = vadd.f32 %v1754, %v1895
    %v1897 = vpop.f32.mrf.mxu0
    %1898 = vmatprep.mubr.bf16.mxu0 %v1823
    %1899 = vmatmul.mubr.bf16.gmra.mxu0 %v1723
    %v1900 = vpop.f32.mrf.mxu0
    %v1901 = vadd.f32 %v1754, %v1900
    %v1902 = vpop.f32.mrf.mxu0
    %v1903 = vpop.f32.mrf.mxu0
    %v1904 = vadd.f32 %v1754, %v1903
    %v1905 = vpop.f32.mrf.mxu0
    %1906 = vmatprep.mubr.bf16.mxu0 %v1826
    %1907 = vmatmul.mubr.bf16.gmra.mxu0 %v1725
    %v1908 = vpop.f32.mrf.mxu0
    %v1909 = vadd.f32 %v1754, %v1908
    %v1910 = vpop.f32.mrf.mxu0
    %v1911 = vpop.f32.mrf.mxu0
    %v1912 = vadd.f32 %v1754, %v1911
    %v1913 = vpop.f32.mrf.mxu0
    %1914 = vmatprep.mubr.bf16.mxu0 %v1829
    %1915 = vmatmul.mubr.bf16.gmra.mxu0 %v1727
    %v1916 = vpop.f32.mrf.mxu0
    %v1917 = vadd.f32 %v1754, %v1916
    %v1918 = vpop.f32.mrf.mxu0
    %v1919 = vpop.f32.mrf.mxu0
    %v1920 = vadd.f32 %v1754, %v1919
    %v1921 = vpop.f32.mrf.mxu0
    %1922 = vmatprep.mubr.bf16.mxu0 %v1832
    %1923 = vmatmul.mubr.bf16.gmra.mxu0 %v1729
    %v1924 = vpop.f32.mrf.mxu0
    %v1925 = vadd.f32 %v1754, %v1924
    %v1926 = vpop.f32.mrf.mxu0
    %v1927 = vpop.f32.mrf.mxu0
    %v1928 = vadd.f32 %v1754, %v1927
    %v1929 = vpop.f32.mrf.mxu0
    %1930 = vdwg.mxu0
    %v1931 = vmax.f32 %v1869, 0.0
    %v1932 = vmax.f32 %v1872, 0.0
    %v1933 = vmax.f32 %v1877, 0.0
    %v1934 = vmax.f32 %v1880, 0.0
    %v1935 = vmax.f32 %v1885, 0.0
    %v1936 = vmax.f32 %v1888, 0.0
    %v1937 = vmax.f32 %v1893, 0.0
    %v1938 = vmax.f32 %v1896, 0.0
    %v1939 = vmax.f32 %v1901, 0.0
    %v1940 = vmax.f32 %v1904, 0.0
    %v1941 = vmax.f32 %v1909, 0.0
    %v1942 = vmax.f32 %v1912, 0.0
    %v1943 = vmax.f32 %v1917, 0.0
    %v1944 = vmax.f32 %v1920, 0.0
    %v1945 = vmax.f32 %v1925, 0.0
    %v1946 = vmax.f32 %v1928, 0.0
    %v1947 = vpack.c.bf16 %v1932, %v1931
    %v1948 = vpack.c.bf16 %v1934, %v1933
    %v1949 = vpack.c.bf16 %v1936, %v1935
    %v1950 = vpack.c.bf16 %v1938, %v1937
    %v1951 = vpack.c.bf16 %v1940, %v1939
    %v1952 = vpack.c.bf16 %v1942, %v1941
    %v1953 = vpack.c.bf16 %v1944, %v1943
    %v1954 = vpack.c.bf16 %v1946, %v1945
    %1955 = vst.msk [vmem:[%s98 + $0x1] sm:$0xff] %vm56, %v1931
    %1956 = vst.msk [vmem:[%s98 + $0x11] sm:$0xff] %vm56, %v1932
    %1957 = vst.msk [vmem:[%s98 + $0x21] sm:$0xff] %vm56, %v1933
    %1958 = vst.msk [vmem:[%s98 + $0x31] sm:$0xff] %vm56, %v1934
    %1959 = vst.msk [vmem:[%s98 + $0x41] sm:$0xff] %vm56, %v1935
    %1960 = vst.msk [vmem:[%s98 + $0x51] sm:$0xff] %vm56, %v1936
    %1961 = vst.msk [vmem:[%s98 + $0x61] sm:$0xff] %vm56, %v1937
    %1962 = vst.msk [vmem:[%s98 + $0x71] sm:$0xff] %vm56, %v1938
    %1963 = vst.msk [vmem:[%s98 + $0xa1] sm:$0xff] %vm56, %v1939
    %1964 = vst.msk [vmem:[%s98 + $0xb1] sm:$0xff] %vm56, %v1940
    %1965 = vst.msk [vmem:[%s98 + $0xc1] sm:$0xff] %vm56, %v1941
    %1966 = vst.msk [vmem:[%s98 + $0xd1] sm:$0xff] %vm56, %v1942
    %1967 = vst.msk [vmem:[%s98 + $0xe1] sm:$0xff] %vm56, %v1943
    %1968 = vst.msk [vmem:[%s98 + $0xf1] sm:$0xff] %vm56, %v1944
    %1969 = vst.msk [vmem:[%s98 + $0x101] sm:$0xff] %vm56, %v1945
    %1970 = vst.msk [vmem:[%s98 + $0x111] sm:$0xff] %vm56, %v1946
    %v1971 = vld [vmem:[#allocation2] sm:$0xff]
    %v1972 = vld [vmem:[#allocation2 + $0x8] sm:$0x3]
    %v1973 = vld [vmem:[#allocation2 + $0x10] sm:$0xff]
    %v1974 = vld [vmem:[#allocation2 + $0x18] sm:$0x3]
    %v1975 = vld [vmem:[#allocation2 + $0x20] sm:$0xff]
    %v1976 = vld [vmem:[#allocation2 + $0x28] sm:$0x3]
    %v1977 = vld [vmem:[#allocation2 + $0x30] sm:$0xff]
    %v1978 = vld [vmem:[#allocation2 + $0x38] sm:$0x3]
    %v1979 = vld [vmem:[#allocation2 + $0x40] sm:$0xff]
    %v1980 = vld [vmem:[#allocation2 + $0x48] sm:$0x3]
    %v1981 = vld [vmem:[#allocation2 + $0x50] sm:$0xff]
    %v1982 = vld [vmem:[#allocation2 + $0x58] sm:$0x3]
    %v1983 = vld [vmem:[#allocation2 + $0x60] sm:$0xff]
    %v1984 = vld [vmem:[#allocation2 + $0x68] sm:$0x3]
    %v1985 = vld [vmem:[#allocation2 + $0x70] sm:$0xff]
    %v1986 = vld [vmem:[#allocation2 + $0x78] sm:$0x3]
    %v1987 = vld [vmem:[#allocation2 + $0x80] sm:$0xff]
    %v1988 = vld [vmem:[#allocation2 + $0x88] sm:$0x3]
    %v1989 = vld [vmem:[#allocation2 + $0x90] sm:$0xff]
    %v1990 = vld [vmem:[#allocation2 + $0x98] sm:$0x3]
    %v1991 = vld [vmem:[#allocation2 + $0xa0] sm:$0xff]
    %v1992 = vld [vmem:[#allocation2 + $0xa8] sm:$0x3]
    %v1993 = vld [vmem:[#allocation2 + $0xb0] sm:$0xff]
    %v1994 = vld [vmem:[#allocation2 + $0xb8] sm:$0x3]
    %v1995 = vld [vmem:[#allocation2 + $0xc0] sm:$0xff]
    %v1996 = vld [vmem:[#allocation2 + $0xc8] sm:$0x3]
    %v1997 = vld [vmem:[#allocation2 + $0xd0] sm:$0xff]
    %v1998 = vld [vmem:[#allocation2 + $0xd8] sm:$0x3]
    %v1999 = vld [vmem:[#allocation2 + $0xe0] sm:$0xff]
    %v2000 = vld [vmem:[#allocation2 + $0xe8] sm:$0x3]
    %v2001 = vld [vmem:[#allocation2 + $0xf0] sm:$0xff]
    %v2002 = vld [vmem:[#allocation2 + $0xf8] sm:$0x3]
    %v2003 = vld [vmem:[#allocation2 + $0x100] sm:$0xff]
    %v2004 = vld [vmem:[#allocation2 + $0x108] sm:$0x3]
    %v2005 = vld [vmem:[#allocation2 + $0x110] sm:$0xff]
    %v2006 = vld [vmem:[#allocation2 + $0x118] sm:$0x3]
    %v2007 = vld [vmem:[#allocation2 + $0x120] sm:$0xff]
    %v2008 = vld [vmem:[#allocation2 + $0x128] sm:$0x3]
    %v2009 = vld [vmem:[#allocation2 + $0x130] sm:$0xff]
    %v2010 = vld [vmem:[#allocation2 + $0x138] sm:$0x3]
    %v2043 = vrot.slane %v1971, 1
    %v2044 = vrot.slane %v1972, 1
    %v2045 = vsel %vm195, %v2043, %v2044
    %v2046 = vrot.slane %v1973, 1
    %v2047 = vrot.slane %v1974, 1
    %v2048 = vsel %vm195, %v2046, %v2047
    %v2049 = vrot.slane %v1975, 1
    %v2050 = vrot.slane %v1976, 1
    %v2051 = vsel %vm195, %v2049, %v2050
    %v2052 = vrot.slane %v1977, 1
    %v2053 = vrot.slane %v1978, 1
    %v2054 = vsel %vm195, %v2052, %v2053
    %v2055 = vrot.slane %v1979, 1
    %v2056 = vrot.slane %v1980, 1
    %v2057 = vsel %vm195, %v2055, %v2056
    %v2058 = vrot.slane %v1981, 1
    %v2059 = vrot.slane %v1982, 1
    %v2060 = vsel %vm195, %v2058, %v2059
    %v2061 = vrot.slane %v1983, 1
    %v2062 = vrot.slane %v1984, 1
    %v2063 = vsel %vm195, %v2061, %v2062
    %v2064 = vrot.slane %v1985, 1
    %v2065 = vrot.slane %v1986, 1
    %v2066 = vsel %vm195, %v2064, %v2065
    %v2067 = vrot.slane %v1991, 1
    %v2068 = vrot.slane %v1992, 1
    %v2069 = vsel %vm195, %v2067, %v2068
    %v2070 = vrot.slane %v1993, 1
    %v2071 = vrot.slane %v1994, 1
    %v2072 = vsel %vm195, %v2070, %v2071
    %v2073 = vrot.slane %v1995, 1
    %v2074 = vrot.slane %v1996, 1
    %v2075 = vsel %vm195, %v2073, %v2074
    %v2076 = vrot.slane %v1997, 1
    %v2077 = vrot.slane %v1998, 1
    %v2078 = vsel %vm195, %v2076, %v2077
    %v2079 = vrot.slane %v1999, 1
    %v2080 = vrot.slane %v2000, 1
    %v2081 = vsel %vm195, %v2079, %v2080
    %v2082 = vrot.slane %v2001, 1
    %v2083 = vrot.slane %v2002, 1
    %v2084 = vsel %vm195, %v2082, %v2083
    %v2085 = vrot.slane %v2003, 1
    %v2086 = vrot.slane %v2004, 1
    %v2087 = vsel %vm195, %v2085, %v2086
    %v2088 = vrot.slane %v2005, 1
    %v2089 = vrot.slane %v2006, 1
    %v2090 = vsel %vm195, %v2088, %v2089
    %v2091 = vrot.slane %v1971, 2
    %v2092 = vrot.slane %v1972, 2
    %v2093 = vsel %vm244, %v2091, %v2092
    %v2094 = vrot.slane %v1973, 2
    %v2095 = vrot.slane %v1974, 2
    %v2096 = vsel %vm244, %v2094, %v2095
    %v2097 = vrot.slane %v1975, 2
    %v2098 = vrot.slane %v1976, 2
    %v2099 = vsel %vm244, %v2097, %v2098
    %v2100 = vrot.slane %v1977, 2
    %v2101 = vrot.slane %v1978, 2
    %v2102 = vsel %vm244, %v2100, %v2101
    %v2103 = vrot.slane %v1979, 2
    %v2104 = vrot.slane %v1980, 2
    %v2105 = vsel %vm244, %v2103, %v2104
    %v2106 = vrot.slane %v1981, 2
    %v2107 = vrot.slane %v1982, 2
    %v2108 = vsel %vm244, %v2106, %v2107
    %v2109 = vrot.slane %v1983, 2
    %v2110 = vrot.slane %v1984, 2
    %v2111 = vsel %vm244, %v2109, %v2110
    %v2112 = vrot.slane %v1985, 2
    %v2113 = vrot.slane %v1986, 2
    %v2114 = vsel %vm244, %v2112, %v2113
    %v2115 = vrot.slane %v1991, 2
    %v2116 = vrot.slane %v1992, 2
    %v2117 = vsel %vm244, %v2115, %v2116
    %v2118 = vrot.slane %v1993, 2
    %v2119 = vrot.slane %v1994, 2
    %v2120 = vsel %vm244, %v2118, %v2119
    %v2121 = vrot.slane %v1995, 2
    %v2122 = vrot.slane %v1996, 2
    %v2123 = vsel %vm244, %v2121, %v2122
    %v2124 = vrot.slane %v1997, 2
    %v2125 = vrot.slane %v1998, 2
    %v2126 = vsel %vm244, %v2124, %v2125
    %v2127 = vrot.slane %v1999, 2
    %v2128 = vrot.slane %v2000, 2
    %v2129 = vsel %vm244, %v2127, %v2128
    %v2130 = vrot.slane %v2001, 2
    %v2131 = vrot.slane %v2002, 2
    %v2132 = vsel %vm244, %v2130, %v2131
    %v2133 = vrot.slane %v2003, 2
    %v2134 = vrot.slane %v2004, 2
    %v2135 = vsel %vm244, %v2133, %v2134
    %v2136 = vrot.slane %v2005, 2
    %v2137 = vrot.slane %v2006, 2
    %v2138 = vsel %vm244, %v2136, %v2137
    %v2143 = vrot.slane %v1987, 1
    %v2144 = vrot.slane %v1988, 1
    %v2145 = vsel %vm195, %v2143, %v2144
    %v2146 = vrot.slane %v2007, 1
    %v2147 = vrot.slane %v2008, 1
    %v2148 = vsel %vm195, %v2146, %v2147
    %v2149 = vrot.slane %v1987, 2
    %v2150 = vrot.slane %v1988, 2
    %v2151 = vsel %vm244, %v2149, %v2150
    %v2152 = vrot.slane %v2007, 2
    %v2153 = vrot.slane %v2008, 2
    %v2154 = vsel %vm244, %v2152, %v2153
    %v2159 = vrot.slane %v1989, 1
    %v2160 = vrot.slane %v1990, 1
    %v2161 = vsel %vm195, %v2159, %v2160
    %v2162 = vrot.slane %v2009, 1
    %v2163 = vrot.slane %v2010, 1
    %v2164 = vsel %vm195, %v2162, %v2163
    %v2165 = vrot.slane %v1989, 2
    %v2166 = vrot.slane %v1990, 2
    %v2167 = vsel %vm244, %v2165, %v2166
    %v2168 = vrot.slane %v2009, 2
    %v2169 = vrot.slane %v2010, 2
    %v2170 = vsel %vm244, %v2168, %v2169
    %2187 = vrot.lane.b32.xlu0 %v2045, 16
    %v2188 = vpop.permute.xlu0 %2187
    %2189 = vrot.lane.b32.xlu0 %v2048, 16
    %v2190 = vpop.permute.xlu0 %2189
    %2191 = vrot.lane.b32.xlu0 %v2051, 16
    %v2192 = vpop.permute.xlu0 %2191
    %2193 = vrot.lane.b32.xlu0 %v2054, 16
    %v2194 = vpop.permute.xlu0 %2193
    %2195 = vrot.lane.b32.xlu0 %v2057, 16
    %v2196 = vpop.permute.xlu0 %2195
    %2197 = vrot.lane.b32.xlu0 %v2060, 16
    %v2198 = vpop.permute.xlu0 %2197
    %2199 = vrot.lane.b32.xlu0 %v2063, 16
    %v2200 = vpop.permute.xlu0 %2199
    %2201 = vrot.lane.b32.xlu0 %v2066, 16
    %v2202 = vpop.permute.xlu0 %2201
    %2203 = vrot.lane.b32.xlu0 %v2069, 16
    %v2204 = vpop.permute.xlu0 %2203
    %2205 = vrot.lane.b32.xlu0 %v2072, 16
    %v2206 = vpop.permute.xlu0 %2205
    %2207 = vrot.lane.b32.xlu0 %v2075, 16
    %v2208 = vpop.permute.xlu0 %2207
    %2209 = vrot.lane.b32.xlu0 %v2078, 16
    %v2210 = vpop.permute.xlu0 %2209
    %2211 = vrot.lane.b32.xlu0 %v2081, 16
    %v2212 = vpop.permute.xlu0 %2211
    %2213 = vrot.lane.b32.xlu0 %v2084, 16
    %v2214 = vpop.permute.xlu0 %2213
    %2215 = vrot.lane.b32.xlu0 %v2087, 16
    %v2216 = vpop.permute.xlu0 %2215
    %2217 = vrot.lane.b32.xlu0 %v2090, 16
    %v2218 = vpop.permute.xlu0 %2217
    %2235 = vrot.lane.b32.xlu0 %v2093, 32
    %v2236 = vpop.permute.xlu0 %2235
    %2237 = vrot.lane.b32.xlu0 %v2096, 32
    %v2238 = vpop.permute.xlu0 %2237
    %2239 = vrot.lane.b32.xlu0 %v2099, 32
    %v2240 = vpop.permute.xlu0 %2239
    %2241 = vrot.lane.b32.xlu0 %v2102, 32
    %v2242 = vpop.permute.xlu0 %2241
    %2243 = vrot.lane.b32.xlu0 %v2105, 32
    %v2244 = vpop.permute.xlu0 %2243
    %2245 = vrot.lane.b32.xlu0 %v2108, 32
    %v2246 = vpop.permute.xlu0 %2245
    %2247 = vrot.lane.b32.xlu0 %v2111, 32
    %v2248 = vpop.permute.xlu0 %2247
    %2249 = vrot.lane.b32.xlu0 %v2114, 32
    %v2250 = vpop.permute.xlu0 %2249
    %2251 = vrot.lane.b32.xlu0 %v2117, 32
    %v2252 = vpop.permute.xlu0 %2251
    %2253 = vrot.lane.b32.xlu0 %v2120, 32
    %v2254 = vpop.permute.xlu0 %2253
    %2255 = vrot.lane.b32.xlu0 %v2123, 32
    %v2256 = vpop.permute.xlu0 %2255
    %2257 = vrot.lane.b32.xlu0 %v2126, 32
    %v2258 = vpop.permute.xlu0 %2257
    %2259 = vrot.lane.b32.xlu0 %v2129, 32
    %v2260 = vpop.permute.xlu0 %2259
    %2261 = vrot.lane.b32.xlu0 %v2132, 32
    %v2262 = vpop.permute.xlu0 %2261
    %2263 = vrot.lane.b32.xlu0 %v2135, 32
    %v2264 = vpop.permute.xlu0 %2263
    %2265 = vrot.lane.b32.xlu0 %v2138, 32
    %v2266 = vpop.permute.xlu0 %2265
    %2283 = vrot.lane.b32.xlu0 %v1973, 48
    %v2284 = vpop.permute.xlu0 %2283
    %2285 = vrot.lane.b32.xlu0 %v1975, 48
    %v2286 = vpop.permute.xlu0 %2285
    %2287 = vrot.lane.b32.xlu0 %v1977, 48
    %v2288 = vpop.permute.xlu0 %2287
    %2289 = vrot.lane.b32.xlu0 %v1979, 48
    %v2290 = vpop.permute.xlu0 %2289
    %2291 = vrot.lane.b32.xlu0 %v1981, 48
    %v2292 = vpop.permute.xlu0 %2291
    %2293 = vrot.lane.b32.xlu0 %v1983, 48
    %v2294 = vpop.permute.xlu0 %2293
    %2295 = vrot.lane.b32.xlu0 %v1985, 48
    %v2296 = vpop.permute.xlu0 %2295
    %2297 = vrot.lane.b32.xlu0 %v1987, 48
    %v2298 = vpop.permute.xlu0 %2297
    %2299 = vrot.lane.b32.xlu0 %v1993, 48
    %v2300 = vpop.permute.xlu0 %2299
    %2301 = vrot.lane.b32.xlu0 %v1995, 48
    %v2302 = vpop.permute.xlu0 %2301
    %2303 = vrot.lane.b32.xlu0 %v1997, 48
    %v2304 = vpop.permute.xlu0 %2303
    %2305 = vrot.lane.b32.xlu0 %v1999, 48
    %v2306 = vpop.permute.xlu0 %2305
    %2307 = vrot.lane.b32.xlu0 %v2001, 48
    %v2308 = vpop.permute.xlu0 %2307
    %2309 = vrot.lane.b32.xlu0 %v2003, 48
    %v2310 = vpop.permute.xlu0 %2309
    %2311 = vrot.lane.b32.xlu0 %v2005, 48
    %v2312 = vpop.permute.xlu0 %2311
    %2313 = vrot.lane.b32.xlu0 %v2007, 48
    %v2314 = vpop.permute.xlu0 %2313
    %2331 = vrot.lane.b32.xlu0 %v2048, 64
    %v2332 = vpop.permute.xlu0 %2331
    %2333 = vrot.lane.b32.xlu0 %v2051, 64
    %v2334 = vpop.permute.xlu0 %2333
    %2335 = vrot.lane.b32.xlu0 %v2054, 64
    %v2336 = vpop.permute.xlu0 %2335
    %2337 = vrot.lane.b32.xlu0 %v2057, 64
    %v2338 = vpop.permute.xlu0 %2337
    %2339 = vrot.lane.b32.xlu0 %v2060, 64
    %v2340 = vpop.permute.xlu0 %2339
    %2341 = vrot.lane.b32.xlu0 %v2063, 64
    %v2342 = vpop.permute.xlu0 %2341
    %2343 = vrot.lane.b32.xlu0 %v2066, 64
    %v2344 = vpop.permute.xlu0 %2343
    %2345 = vrot.lane.b32.xlu0 %v2145, 64
    %v2346 = vpop.permute.xlu0 %2345
    %2347 = vrot.lane.b32.xlu0 %v2072, 64
    %v2348 = vpop.permute.xlu0 %2347
    %2349 = vrot.lane.b32.xlu0 %v2075, 64
    %v2350 = vpop.permute.xlu0 %2349
    %2351 = vrot.lane.b32.xlu0 %v2078, 64
    %v2352 = vpop.permute.xlu0 %2351
    %2353 = vrot.lane.b32.xlu0 %v2081, 64
    %v2354 = vpop.permute.xlu0 %2353
    %2355 = vrot.lane.b32.xlu0 %v2084, 64
    %v2356 = vpop.permute.xlu0 %2355
    %2357 = vrot.lane.b32.xlu0 %v2087, 64
    %v2358 = vpop.permute.xlu0 %2357
    %2359 = vrot.lane.b32.xlu0 %v2090, 64
    %v2360 = vpop.permute.xlu0 %2359
    %2361 = vrot.lane.b32.xlu0 %v2148, 64
    %v2362 = vpop.permute.xlu0 %2361
    %2379 = vrot.lane.b32.xlu0 %v2096, 80
    %v2380 = vpop.permute.xlu0 %2379
    %2381 = vrot.lane.b32.xlu0 %v2099, 80
    %v2382 = vpop.permute.xlu0 %2381
    %2383 = vrot.lane.b32.xlu0 %v2102, 80
    %v2384 = vpop.permute.xlu0 %2383
    %2385 = vrot.lane.b32.xlu0 %v2105, 80
    %v2386 = vpop.permute.xlu0 %2385
    %2387 = vrot.lane.b32.xlu0 %v2108, 80
    %v2388 = vpop.permute.xlu0 %2387
    %2389 = vrot.lane.b32.xlu0 %v2111, 80
    %v2390 = vpop.permute.xlu0 %2389
    %2391 = vrot.lane.b32.xlu0 %v2114, 80
    %v2392 = vpop.permute.xlu0 %2391
    %2393 = vrot.lane.b32.xlu0 %v2151, 80
    %v2394 = vpop.permute.xlu0 %2393
    %2395 = vrot.lane.b32.xlu0 %v2120, 80
    %v2396 = vpop.permute.xlu0 %2395
    %2397 = vrot.lane.b32.xlu0 %v2123, 80
    %v2398 = vpop.permute.xlu0 %2397
    %2399 = vrot.lane.b32.xlu0 %v2126, 80
    %v2400 = vpop.permute.xlu0 %2399
    %2401 = vrot.lane.b32.xlu0 %v2129, 80
    %v2402 = vpop.permute.xlu0 %2401
    %2403 = vrot.lane.b32.xlu0 %v2132, 80
    %v2404 = vpop.permute.xlu0 %2403
    %2405 = vrot.lane.b32.xlu0 %v2135, 80
    %v2406 = vpop.permute.xlu0 %2405
    %2407 = vrot.lane.b32.xlu0 %v2138, 80
    %v2408 = vpop.permute.xlu0 %2407
    %2409 = vrot.lane.b32.xlu0 %v2154, 80
    %v2410 = vpop.permute.xlu0 %2409
    %2427 = vrot.lane.b32.xlu0 %v1975, 96
    %v2428 = vpop.permute.xlu0 %2427
    %2429 = vrot.lane.b32.xlu0 %v1977, 96
    %v2430 = vpop.permute.xlu0 %2429
    %2431 = vrot.lane.b32.xlu0 %v1979, 96
    %v2432 = vpop.permute.xlu0 %2431
    %2433 = vrot.lane.b32.xlu0 %v1981, 96
    %v2434 = vpop.permute.xlu0 %2433
    %2435 = vrot.lane.b32.xlu0 %v1983, 96
    %v2436 = vpop.permute.xlu0 %2435
    %2437 = vrot.lane.b32.xlu0 %v1985, 96
    %v2438 = vpop.permute.xlu0 %2437
    %2439 = vrot.lane.b32.xlu0 %v1987, 96
    %v2440 = vpop.permute.xlu0 %2439
    %2441 = vrot.lane.b32.xlu0 %v1989, 96
    %v2442 = vpop.permute.xlu0 %2441
    %2443 = vrot.lane.b32.xlu0 %v1995, 96
    %v2444 = vpop.permute.xlu0 %2443
    %2445 = vrot.lane.b32.xlu0 %v1997, 96
    %v2446 = vpop.permute.xlu0 %2445
    %2447 = vrot.lane.b32.xlu0 %v1999, 96
    %v2448 = vpop.permute.xlu0 %2447
    %2449 = vrot.lane.b32.xlu0 %v2001, 96
    %v2450 = vpop.permute.xlu0 %2449
    %2451 = vrot.lane.b32.xlu0 %v2003, 96
    %v2452 = vpop.permute.xlu0 %2451
    %2453 = vrot.lane.b32.xlu0 %v2005, 96
    %v2454 = vpop.permute.xlu0 %2453
    %2455 = vrot.lane.b32.xlu0 %v2007, 96
    %v2456 = vpop.permute.xlu0 %2455
    %2457 = vrot.lane.b32.xlu0 %v2009, 96
    %v2458 = vpop.permute.xlu0 %2457
    %2475 = vrot.lane.b32.xlu0 %v2051, 112
    %v2476 = vpop.permute.xlu0 %2475
    %2477 = vrot.lane.b32.xlu0 %v2054, 112
    %v2478 = vpop.permute.xlu0 %2477
    %2479 = vrot.lane.b32.xlu0 %v2057, 112
    %v2480 = vpop.permute.xlu0 %2479
    %2481 = vrot.lane.b32.xlu0 %v2060, 112
    %v2482 = vpop.permute.xlu0 %2481
    %2483 = vrot.lane.b32.xlu0 %v2063, 112
    %v2484 = vpop.permute.xlu0 %2483
    %2485 = vrot.lane.b32.xlu0 %v2066, 112
    %v2486 = vpop.permute.xlu0 %2485
    %2487 = vrot.lane.b32.xlu0 %v2145, 112
    %v2488 = vpop.permute.xlu0 %2487
    %2489 = vrot.lane.b32.xlu0 %v2161, 112
    %v2490 = vpop.permute.xlu0 %2489
    %2491 = vrot.lane.b32.xlu0 %v2075, 112
    %v2492 = vpop.permute.xlu0 %2491
    %2493 = vrot.lane.b32.xlu0 %v2078, 112
    %v2494 = vpop.permute.xlu0 %2493
    %2495 = vrot.lane.b32.xlu0 %v2081, 112
    %v2496 = vpop.permute.xlu0 %2495
    %2497 = vrot.lane.b32.xlu0 %v2084, 112
    %v2498 = vpop.permute.xlu0 %2497
    %2499 = vrot.lane.b32.xlu0 %v2087, 112
    %v2500 = vpop.permute.xlu0 %2499
    %2501 = vrot.lane.b32.xlu0 %v2090, 112
    %v2502 = vpop.permute.xlu0 %2501
    %2503 = vrot.lane.b32.xlu0 %v2148, 112
    %v2504 = vpop.permute.xlu0 %2503
    %2505 = vrot.lane.b32.xlu0 %v2164, 112
    %v2506 = vpop.permute.xlu0 %2505
    %v2523 = vsel %vm56, %v1971, %v2188
    %v2524 = vsel %vm56, %v1973, %v2190
    %v2525 = vsel %vm56, %v1975, %v2192
    %v2526 = vsel %vm56, %v1977, %v2194
    %v2527 = vsel %vm56, %v1979, %v2196
    %v2528 = vsel %vm56, %v1981, %v2198
    %v2529 = vsel %vm56, %v1983, %v2200
    %v2530 = vsel %vm56, %v1985, %v2202
    %v2531 = vsel %vm56, %v1991, %v2204
    %v2532 = vsel %vm56, %v1993, %v2206
    %v2533 = vsel %vm56, %v1995, %v2208
    %v2534 = vsel %vm56, %v1997, %v2210
    %v2535 = vsel %vm56, %v1999, %v2212
    %v2536 = vsel %vm56, %v2001, %v2214
    %v2537 = vsel %vm56, %v2003, %v2216
    %v2538 = vsel %vm56, %v2005, %v2218
    %v2539 = vsel %vm693, %v2523, %v2236
    %v2540 = vsel %vm693, %v2524, %v2238
    %v2541 = vsel %vm693, %v2525, %v2240
    %v2542 = vsel %vm693, %v2526, %v2242
    %v2543 = vsel %vm693, %v2527, %v2244
    %v2544 = vsel %vm693, %v2528, %v2246
    %v2545 = vsel %vm693, %v2529, %v2248
    %v2546 = vsel %vm693, %v2530, %v2250
    %v2547 = vsel %vm693, %v2531, %v2252
    %v2548 = vsel %vm693, %v2532, %v2254
    %v2549 = vsel %vm693, %v2533, %v2256
    %v2550 = vsel %vm693, %v2534, %v2258
    %v2551 = vsel %vm693, %v2535, %v2260
    %v2552 = vsel %vm693, %v2536, %v2262
    %v2553 = vsel %vm693, %v2537, %v2264
    %v2554 = vsel %vm693, %v2538, %v2266
    %v2555 = vsel %vm710, %v2539, %v2284
    %v2556 = vsel %vm710, %v2540, %v2286
    %v2557 = vsel %vm710, %v2541, %v2288
    %v2558 = vsel %vm710, %v2542, %v2290
    %v2559 = vsel %vm710, %v2543, %v2292
    %v2560 = vsel %vm710, %v2544, %v2294
    %v2561 = vsel %vm710, %v2545, %v2296
    %v2562 = vsel %vm710, %v2546, %v2298
    %v2563 = vsel %vm710, %v2547, %v2300
    %v2564 = vsel %vm710, %v2548, %v2302
    %v2565 = vsel %vm710, %v2549, %v2304
    %v2566 = vsel %vm710, %v2550, %v2306
    %v2567 = vsel %vm710, %v2551, %v2308
    %v2568 = vsel %vm710, %v2552, %v2310
    %v2569 = vsel %vm710, %v2553, %v2312
    %v2570 = vsel %vm710, %v2554, %v2314
    %v2571 = vsel %vm727, %v2555, %v2332
    %v2572 = vsel %vm727, %v2556, %v2334
    %v2573 = vsel %vm727, %v2557, %v2336
    %v2574 = vsel %vm727, %v2558, %v2338
    %v2575 = vsel %vm727, %v2559, %v2340
    %v2576 = vsel %vm727, %v2560, %v2342
    %v2577 = vsel %vm727, %v2561, %v2344
    %v2578 = vsel %vm727, %v2562, %v2346
    %v2579 = vsel %vm727, %v2563, %v2348
    %v2580 = vsel %vm727, %v2564, %v2350
    %v2581 = vsel %vm727, %v2565, %v2352
    %v2582 = vsel %vm727, %v2566, %v2354
    %v2583 = vsel %vm727, %v2567, %v2356
    %v2584 = vsel %vm727, %v2568, %v2358
    %v2585 = vsel %vm727, %v2569, %v2360
    %v2586 = vsel %vm727, %v2570, %v2362
    %v2587 = vsel %vm744, %v2571, %v2380
    %v2588 = vsel %vm744, %v2572, %v2382
    %v2589 = vsel %vm744, %v2573, %v2384
    %v2590 = vsel %vm744, %v2574, %v2386
    %v2591 = vsel %vm744, %v2575, %v2388
    %v2592 = vsel %vm744, %v2576, %v2390
    %v2593 = vsel %vm744, %v2577, %v2392
    %v2594 = vsel %vm744, %v2578, %v2394
    %v2595 = vsel %vm744, %v2579, %v2396
    %v2596 = vsel %vm744, %v2580, %v2398
    %v2597 = vsel %vm744, %v2581, %v2400
    %v2598 = vsel %vm744, %v2582, %v2402
    %v2599 = vsel %vm744, %v2583, %v2404
    %v2600 = vsel %vm744, %v2584, %v2406
    %v2601 = vsel %vm744, %v2585, %v2408
    %v2602 = vsel %vm744, %v2586, %v2410
    %v2603 = vsel %vm761, %v2587, %v2428
    %v2604 = vsel %vm761, %v2588, %v2430
    %v2605 = vsel %vm761, %v2589, %v2432
    %v2606 = vsel %vm761, %v2590, %v2434
    %v2607 = vsel %vm761, %v2591, %v2436
    %v2608 = vsel %vm761, %v2592, %v2438
    %v2609 = vsel %vm761, %v2593, %v2440
    %v2610 = vsel %vm761, %v2594, %v2442
    %v2611 = vsel %vm761, %v2595, %v2444
    %v2612 = vsel %vm761, %v2596, %v2446
    %v2613 = vsel %vm761, %v2597, %v2448
    %v2614 = vsel %vm761, %v2598, %v2450
    %v2615 = vsel %vm761, %v2599, %v2452
    %v2616 = vsel %vm761, %v2600, %v2454
    %v2617 = vsel %vm761, %v2601, %v2456
    %v2618 = vsel %vm761, %v2602, %v2458
    %v2619 = vsel %vm778, %v2603, %v2476
    %v2620 = vsel %vm778, %v2604, %v2478
    %v2621 = vsel %vm778, %v2605, %v2480
    %v2622 = vsel %vm778, %v2606, %v2482
    %v2623 = vsel %vm778, %v2607, %v2484
    %v2624 = vsel %vm778, %v2608, %v2486
    %v2625 = vsel %vm778, %v2609, %v2488
    %v2626 = vsel %vm778, %v2610, %v2490
    %v2627 = vsel %vm778, %v2611, %v2492
    %v2628 = vsel %vm778, %v2612, %v2494
    %v2629 = vsel %vm778, %v2613, %v2496
    %v2630 = vsel %vm778, %v2614, %v2498
    %v2631 = vsel %vm778, %v2615, %v2500
    %v2632 = vsel %vm778, %v2616, %v2502
    %v2633 = vsel %vm778, %v2617, %v2504
    %v2634 = vsel %vm778, %v2618, %v2506
    %v2635 = vpack.c.bf16 %v2620, %v2619
    %v2636 = vpack.c.bf16 %v2102, %v2099
    %v2637 = vpack.c.bf16 %v2622, %v2621
    %v2638 = vpack.c.bf16 %v2108, %v2105
    %v2639 = vpack.c.bf16 %v2624, %v2623
    %v2640 = vpack.c.bf16 %v2114, %v2111
    %v2641 = vpack.c.bf16 %v2626, %v2625
    %v2642 = vpack.c.bf16 %v2167, %v2151
    %v2643 = vpack.c.bf16 %v2628, %v2627
    %v2644 = vpack.c.bf16 %v2126, %v2123
    %v2645 = vpack.c.bf16 %v2630, %v2629
    %v2646 = vpack.c.bf16 %v2132, %v2129
    %v2647 = vpack.c.bf16 %v2632, %v2631
    %v2648 = vpack.c.bf16 %v2138, %v2135
    %v2649 = vpack.c.bf16 %v2634, %v2633
    %v2650 = vpack.c.bf16 %v2170, %v2154
    %v2651 = vld [vmem:[%s5] sm:$0xf]
    %v2652 = vld [vmem:[%s5 + $0x4] sm:$0xf]
    %v2653 = vld [vmem:[%s5 + $0x8] sm:$0xf]
    %v2654 = vld [vmem:[%s5 + $0xc] sm:$0xf]
    %v2655 = vld [vmem:[%s5 + $0x10] sm:$0xf]
    %v2656 = vld [vmem:[%s5 + $0x14] sm:$0xf]
    %v2657 = vld [vmem:[%s5 + $0x18] sm:$0xf]
    %v2658 = vld [vmem:[%s5 + $0x1c] sm:$0xf]
    %v2659 = vld [vmem:[%s5 + $0x20] sm:$0xf]
    %v2660 = vld [vmem:[%s5 + $0x24] sm:$0xf]
    %v2661 = vld [vmem:[%s5 + $0x28] sm:$0xf]
    %v2662 = vld [vmem:[%s5 + $0x2c] sm:$0xf]
    %v2663 = vld [vmem:[%s5 + $0x30] sm:$0xf]
    %v2664 = vld [vmem:[%s5 + $0x34] sm:$0xf]
    %v2665 = vld [vmem:[%s5 + $0x38] sm:$0xf]
    %v2666 = vld [vmem:[%s5 + $0x3c] sm:$0xf]
    %v2667 = vld [vmem:[%s5 + $0x40] sm:$0xf]
    %v2668 = vld [vmem:[%s5 + $0x44] sm:$0xf]
    %v2669 = vld [vmem:[%s6] sm:$0x1]
    %v2671 = vlaneseq
    %v2672 = vshrl.u32 %v2671, 7
    %v2673 = vsub.s32 0, %v2672
    %v2674 = vrot.slane %v2669, %v2673
    %v2694 = vunpack.c.l.b16 %v2651
    %v2695 = vunpack.c.l.b16 %v2652
    %v2696 = vunpack.c.l.b16 %v2653
    %v2697 = vunpack.c.l.b16 %v2654
    %v2698 = vunpack.c.l.b16 %v2655
    %v2699 = vunpack.c.l.b16 %v2656
    %v2700 = vunpack.c.l.b16 %v2657
    %v2701 = vunpack.c.l.b16 %v2658
    %v2702 = vunpack.c.l.b16 %v2659
    %v2703 = vunpack.c.l.b16 %v2660
    %v2704 = vunpack.c.l.b16 %v2661
    %v2705 = vunpack.c.l.b16 %v2662
    %v2706 = vunpack.c.l.b16 %v2663
    %v2707 = vunpack.c.l.b16 %v2664
    %v2708 = vunpack.c.l.b16 %v2665
    %v2709 = vunpack.c.l.b16 %v2666
    %v2710 = vunpack.c.l.b16 %v2667
    %v2711 = vunpack.c.l.b16 %v2668
    %v2712 = vpack.c.b16 %v2695, %v2694
    %v2713 = vpack.c.b16 %v2697, %v2696
    %v2714 = vpack.c.b16 %v2699, %v2698
    %v2715 = vpack.c.b16 %v2701, %v2700
    %v2716 = vpack.c.b16 %v2703, %v2702
    %v2717 = vpack.c.b16 %v2705, %v2704
    %v2718 = vpack.c.b16 %v2707, %v2706
    %v2719 = vpack.c.b16 %v2709, %v2708
    %v2720 = vpack.c.b16 %v2711, %v2710
    %v2731 = vsel %vm56, %v2636, 0
    %v2734 = vsel %vm56, %v2638, 0
    %v2737 = vsel %vm56, %v2640, 0
    %v2740 = vsel %vm56, %v2642, 0
    %v2743 = vsel %vm56, %v2644, 0
    %v2746 = vsel %vm56, %v2646, 0
    %v2749 = vsel %vm56, %v2648, 0
    %v2752 = vsel %vm56, %v2650, 0
    %2754 = vmatprep.subr.bf16.mxu0 0
    %2755 = vmatpush1.bf16.msra.mxu0 %v2719
    %2756 = vmatprep.subr.bf16.mxu0 0
    %2757 = vmatpush1.bf16.msra.mxu0 %v2718
    %2758 = vmatprep.subr.bf16.mxu0 0
    %2759 = vmatpush1.bf16.msra.mxu0 %v2717
    %2760 = vmatprep.subr.bf16.mxu0 0
    %2761 = vmatpush1.bf16.msra.mxu0 %v2716
    %2762 = vmatprep.subr.bf16.mxu0 0
    %2763 = vmatpush1.bf16.msra.mxu0 %v2715
    %2764 = vmatprep.subr.bf16.mxu0 0
    %2765 = vmatpush1.bf16.msra.mxu0 %v2714
    %2766 = vmatprep.subr.bf16.mxu0 0
    %2767 = vmatpush1.bf16.msra.mxu0 %v2713
    %2768 = vmatprep.subr.bf16.mxu0 0
    %2769 = vmatpush1.bf16.msra.mxu0 %v2712
    %2770 = vmatprep.subr.bf16.mxu0 0
    %2771 = vmatpush2.bf16.msra.mxu0 0
    %2772 = vmatprep.subr.bf16.mxu0 0
    %2773 = vmatpush2.bf16.msra.mxu0 0
    %2774 = vmatprep.subr.bf16.mxu0 0
    %2775 = vmatpush2.bf16.msra.mxu0 0
    %2776 = vmatprep.subr.bf16.mxu0 0
    %2777 = vmatpush2.bf16.msra.mxu0 0
    %2778 = vmatprep.subr.bf16.mxu0 0
    %2779 = vmatpush2.bf16.msra.mxu0 0
    %2780 = vmatprep.subr.bf16.mxu0 0
    %2781 = vmatpush2.bf16.msra.mxu0 0
    %2782 = vmatprep.subr.bf16.mxu0 0
    %2783 = vmatpush2.bf16.msra.mxu0 0
    %2784 = vmatprep.subr.bf16.mxu0 0
    %2785 = vmatpush2.bf16.msra.mxu0 %v2720
    %2786 = vmatprep.mubr.bf16.mxu0 %v2731
    %2787 = vmatmul.mubr.bf16.gmra.mxu0 %v2635
    %v2788 = vpop.f32.mrf.mxu0
    %v2789 = vadd.f32 %v2674, %v2788
    %v2790 = vpop.f32.mrf.mxu0
    %v2791 = vpop.f32.mrf.mxu0
    %v2792 = vadd.f32 %v2674, %v2791
    %v2793 = vpop.f32.mrf.mxu0
    %2794 = vmatprep.mubr.bf16.mxu0 %v2734
    %2795 = vmatmul.mubr.bf16.gmra.mxu0 %v2637
    %v2796 = vpop.f32.mrf.mxu0
    %v2797 = vadd.f32 %v2674, %v2796
    %v2798 = vpop.f32.mrf.mxu0
    %v2799 = vpop.f32.mrf.mxu0
    %v2800 = vadd.f32 %v2674, %v2799
    %v2801 = vpop.f32.mrf.mxu0
    %2802 = vmatprep.mubr.bf16.mxu0 %v2737
    %2803 = vmatmul.mubr.bf16.gmra.mxu0 %v2639
    %v2804 = vpop.f32.mrf.mxu0
    %v2805 = vadd.f32 %v2674, %v2804
    %v2806 = vpop.f32.mrf.mxu0
    %v2807 = vpop.f32.mrf.mxu0
    %v2808 = vadd.f32 %v2674, %v2807
    %v2809 = vpop.f32.mrf.mxu0
    %2810 = vmatprep.mubr.bf16.mxu0 %v2740
    %2811 = vmatmul.mubr.bf16.gmra.mxu0 %v2641
    %v2812 = vpop.f32.mrf.mxu0
    %v2813 = vadd.f32 %v2674, %v2812
    %v2814 = vpop.f32.mrf.mxu0
    %v2815 = vpop.f32.mrf.mxu0
    %v2816 = vadd.f32 %v2674, %v2815
    %v2817 = vpop.f32.mrf.mxu0
    %2818 = vmatprep.mubr.bf16.mxu0 %v2743
    %2819 = vmatmul.mubr.bf16.gmra.mxu0 %v2643
    %v2820 = vpop.f32.mrf.mxu0
    %v2821 = vadd.f32 %v2674, %v2820
    %v2822 = vpop.f32.mrf.mxu0
    %v2823 = vpop.f32.mrf.mxu0
    %v2824 = vadd.f32 %v2674, %v2823
    %v2825 = vpop.f32.mrf.mxu0
    %2826 = vmatprep.mubr.bf16.mxu0 %v2746
    %2827 = vmatmul.mubr.bf16.gmra.mxu0 %v2645
    %v2828 = vpop.f32.mrf.mxu0
    %v2829 = vadd.f32 %v2674, %v2828
    %v2830 = vpop.f32.mrf.mxu0
    %v2831 = vpop.f32.mrf.mxu0
    %v2832 = vadd.f32 %v2674, %v2831
    %v2833 = vpop.f32.mrf.mxu0
    %2834 = vmatprep.mubr.bf16.mxu0 %v2749
    %2835 = vmatmul.mubr.bf16.gmra.mxu0 %v2647
    %v2836 = vpop.f32.mrf.mxu0
    %v2837 = vadd.f32 %v2674, %v2836
    %v2838 = vpop.f32.mrf.mxu0
    %v2839 = vpop.f32.mrf.mxu0
    %v2840 = vadd.f32 %v2674, %v2839
    %v2841 = vpop.f32.mrf.mxu0
    %2842 = vmatprep.mubr.bf16.mxu0 %v2752
    %2843 = vmatmul.mubr.bf16.gmra.mxu0 %v2649
    %v2844 = vpop.f32.mrf.mxu0
    %v2845 = vadd.f32 %v2674, %v2844
    %v2846 = vpop.f32.mrf.mxu0
    %v2847 = vpop.f32.mrf.mxu0
    %v2848 = vadd.f32 %v2674, %v2847
    %v2849 = vpop.f32.mrf.mxu0
    %2850 = vdwg.mxu0
    %v2851 = vmax.f32 %v2789, 0.0
    %v2852 = vmax.f32 %v2792, 0.0
    %v2853 = vmax.f32 %v2797, 0.0
    %v2854 = vmax.f32 %v2800, 0.0
    %v2855 = vmax.f32 %v2805, 0.0
    %v2856 = vmax.f32 %v2808, 0.0
    %v2857 = vmax.f32 %v2813, 0.0
    %v2858 = vmax.f32 %v2816, 0.0
    %v2859 = vmax.f32 %v2821, 0.0
    %v2860 = vmax.f32 %v2824, 0.0
    %v2861 = vmax.f32 %v2829, 0.0
    %v2862 = vmax.f32 %v2832, 0.0
    %v2863 = vmax.f32 %v2837, 0.0
    %v2864 = vmax.f32 %v2840, 0.0
    %v2865 = vmax.f32 %v2845, 0.0
    %v2866 = vmax.f32 %v2848, 0.0
    %v2867 = vpack.c.bf16 %v2852, %v2851
    %v2868 = vpack.c.bf16 %v2854, %v2853
    %v2869 = vpack.c.bf16 %v2856, %v2855
    %v2870 = vpack.c.bf16 %v2858, %v2857
    %v2871 = vpack.c.bf16 %v2860, %v2859
    %v2872 = vpack.c.bf16 %v2862, %v2861
    %v2873 = vpack.c.bf16 %v2864, %v2863
    %v2874 = vpack.c.bf16 %v2866, %v2865
    %2883 = vrot.lane.b32.xlu0 %v1027, 16
    %v2884 = vpop.permute.xlu0 %2883
    %2885 = vrot.lane.b32.xlu0 %v1028, 16
    %v2886 = vpop.permute.xlu0 %2885
    %2887 = vrot.lane.b32.xlu0 %v1029, 16
    %v2888 = vpop.permute.xlu0 %2887
    %2889 = vrot.lane.b32.xlu0 %v1030, 16
    %v2890 = vpop.permute.xlu0 %2889
    %2891 = vrot.lane.b32.xlu0 %v1031, 16
    %v2892 = vpop.permute.xlu0 %2891
    %2893 = vrot.lane.b32.xlu0 %v1032, 16
    %v2894 = vpop.permute.xlu0 %2893
    %2895 = vrot.lane.b32.xlu0 %v1033, 16
    %v2896 = vpop.permute.xlu0 %2895
    %2897 = vrot.lane.b32.xlu0 %v1034, 16
    %v2898 = vpop.permute.xlu0 %2897
    %2907 = vrot.lane.b32.xlu0 %v1947, 32
    %v2908 = vpop.permute.xlu0 %2907
    %2909 = vrot.lane.b32.xlu0 %v1948, 32
    %v2910 = vpop.permute.xlu0 %2909
    %2911 = vrot.lane.b32.xlu0 %v1949, 32
    %v2912 = vpop.permute.xlu0 %2911
    %2913 = vrot.lane.b32.xlu0 %v1950, 32
    %v2914 = vpop.permute.xlu0 %2913
    %2915 = vrot.lane.b32.xlu0 %v1951, 32
    %v2916 = vpop.permute.xlu0 %2915
    %2917 = vrot.lane.b32.xlu0 %v1952, 32
    %v2918 = vpop.permute.xlu0 %2917
    %2919 = vrot.lane.b32.xlu0 %v1953, 32
    %v2920 = vpop.permute.xlu0 %2919
    %2921 = vrot.lane.b32.xlu0 %v1954, 32
    %v2922 = vpop.permute.xlu0 %2921
    %2931 = vrot.lane.b32.xlu0 %v2867, 48
    %v2932 = vpop.permute.xlu0 %2931
    %2933 = vrot.lane.b32.xlu0 %v2868, 48
    %v2934 = vpop.permute.xlu0 %2933
    %2935 = vrot.lane.b32.xlu0 %v2869, 48
    %v2936 = vpop.permute.xlu0 %2935
    %2937 = vrot.lane.b32.xlu0 %v2870, 48
    %v2938 = vpop.permute.xlu0 %2937
    %2939 = vrot.lane.b32.xlu0 %v2871, 48
    %v2940 = vpop.permute.xlu0 %2939
    %2941 = vrot.lane.b32.xlu0 %v2872, 48
    %v2942 = vpop.permute.xlu0 %2941
    %2943 = vrot.lane.b32.xlu0 %v2873, 48
    %v2944 = vpop.permute.xlu0 %2943
    %2945 = vrot.lane.b32.xlu0 %v2874, 48
    %v2946 = vpop.permute.xlu0 %2945
    %v2949 = vsel %vm56, %v115, %v2884
    %v2952 = vsel %vm56, %v116, %v2886
    %v2955 = vsel %vm56, %v117, %v2888
    %v2958 = vsel %vm56, %v118, %v2890
    %v2961 = vsel %vm56, %v119, %v2892
    %v2964 = vsel %vm56, %v120, %v2894
    %v2967 = vsel %vm56, %v121, %v2896
    %v2970 = vsel %vm56, %v122, %v2898
    %v2972 = vsel %vm693, %v2949, %v2908
    %v2974 = vsel %vm693, %v2952, %v2910
    %v2976 = vsel %vm693, %v2955, %v2912
    %v2978 = vsel %vm693, %v2958, %v2914
    %v2980 = vsel %vm693, %v2961, %v2916
    %v2982 = vsel %vm693, %v2964, %v2918
    %v2984 = vsel %vm693, %v2967, %v2920
    %v2986 = vsel %vm693, %v2970, %v2922
    %v2988 = vsel %vm710, %v2972, %v2932
    %v2990 = vsel %vm710, %v2974, %v2934
    %v2992 = vsel %vm710, %v2976, %v2936
    %v2994 = vsel %vm710, %v2978, %v2938
    %v2996 = vsel %vm710, %v2980, %v2940
    %v2998 = vsel %vm710, %v2982, %v2942
    %v3000 = vsel %vm710, %v2984, %v2944
    %v3002 = vsel %vm710, %v2986, %v2946
    %v3003 = vld [vmem:[%s7] sm:$0xf]
    %v3004 = vld [vmem:[%s7 + $0x4] sm:$0xf]
    %v3005 = vld [vmem:[%s7 + $0x8] sm:$0xf]
    %v3006 = vld [vmem:[%s7 + $0xc] sm:$0xf]
    %v3007 = vld [vmem:[%s7 + $0x10] sm:$0xf]
    %v3008 = vld [vmem:[%s7 + $0x14] sm:$0xf]
    %v3009 = vld [vmem:[%s7 + $0x18] sm:$0xf]
    %v3010 = vld [vmem:[%s7 + $0x1c] sm:$0xf]
    %v3011 = vld [vmem:[%s8] sm:$0x1]
    %v3013 = vlaneseq
    %v3014 = vshrl.u32 %v3013, 7
    %v3015 = vsub.s32 0, %v3014
    %v3016 = vrot.slane %v3011, %v3015
    %v3026 = vunpack.c.l.b16 %v3003
    %v3027 = vunpack.c.l.b16 %v3004
    %v3028 = vunpack.c.l.b16 %v3005
    %v3029 = vunpack.c.l.b16 %v3006
    %v3030 = vunpack.c.l.b16 %v3007
    %v3031 = vunpack.c.l.b16 %v3008
    %v3032 = vunpack.c.l.b16 %v3009
    %v3033 = vunpack.c.l.b16 %v3010
    %v3034 = vpack.c.b16 %v3027, %v3026
    %v3035 = vpack.c.b16 %v3029, %v3028
    %v3036 = vpack.c.b16 %v3031, %v3030
    %v3037 = vpack.c.b16 %v3033, %v3032
    %v3042 = vsel %vm727, %v2988, 0
    %v3044 = vsel %vm727, %v2990, 0
    %v3046 = vsel %vm727, %v2992, 0
    %v3048 = vsel %vm727, %v2994, 0
    %v3050 = vsel %vm727, %v2996, 0
    %v3052 = vsel %vm727, %v2998, 0
    %v3054 = vsel %vm727, %v3000, 0
    %v3056 = vsel %vm727, %v3002, 0
    %3058 = vmatprep.subr.bf16.mxu0 0
    %3059 = vmatpush1.bf16.msra.mxu0 0
    %3060 = vmatprep.subr.bf16.mxu0 0
    %3061 = vmatpush1.bf16.msra.mxu0 0
    %3062 = vmatprep.subr.bf16.mxu0 0
    %3063 = vmatpush1.bf16.msra.mxu0 0
    %3064 = vmatprep.subr.bf16.mxu0 0
    %3065 = vmatpush1.bf16.msra.mxu0 0
    %3066 = vmatprep.subr.bf16.mxu0 0
    %3067 = vmatpush1.bf16.msra.mxu0 %v3037
    %3068 = vmatprep.subr.bf16.mxu0 0
    %3069 = vmatpush1.bf16.msra.mxu0 %v3036
    %3070 = vmatprep.subr.bf16.mxu0 0
    %3071 = vmatpush1.bf16.msra.mxu0 %v3035
    %3072 = vmatprep.subr.bf16.mxu0 0
    %3073 = vmatpush1.bf16.msra.mxu0 %v3034
    %3074 = vmatprep.subr.bf16.mxu0 0
    %3075 = vmatpush2.bf16.msra.mxu0 0
    %3076 = vmatprep.subr.bf16.mxu0 0
    %3077 = vmatpush2.bf16.msra.mxu0 0
    %3078 = vmatprep.subr.bf16.mxu0 0
    %3079 = vmatpush2.bf16.msra.mxu0 0
    %3080 = vmatprep.subr.bf16.mxu0 0
    %3081 = vmatpush2.bf16.msra.mxu0 0
    %3082 = vmatprep.subr.bf16.mxu0 0
    %3083 = vmatpush2.bf16.msra.mxu0 0
    %3084 = vmatprep.subr.bf16.mxu0 0
    %3085 = vmatpush2.bf16.msra.mxu0 0
    %3086 = vmatprep.subr.bf16.mxu0 0
    %3087 = vmatpush2.bf16.msra.mxu0 0
    %3088 = vmatprep.subr.bf16.mxu0 0
    %3089 = vmatpush2.bf16.msra.mxu0 0
    %3090 = vmatprep.mubr.bf16.mxu0 0
    %3091 = vmatmul.mubr.bf16.gmra.mxu0 %v3042
    %v3092 = vpop.f32.mrf.mxu0
    %v3093 = vadd.f32 %v3016, %v3092
    %v3094 = vpop.f32.mrf.mxu0
    %v3095 = vpop.f32.mrf.mxu0
    %v3096 = vadd.f32 %v3016, %v3095
    %v3097 = vpop.f32.mrf.mxu0
    %3098 = vmatprep.mubr.bf16.mxu0 0
    %3099 = vmatmul.mubr.bf16.gmra.mxu0 %v3044
    %v3100 = vpop.f32.mrf.mxu0
    %v3101 = vadd.f32 %v3016, %v3100
    %v3102 = vpop.f32.mrf.mxu0
    %v3103 = vpop.f32.mrf.mxu0
    %v3104 = vadd.f32 %v3016, %v3103
    %v3105 = vpop.f32.mrf.mxu0
    %3106 = vmatprep.mubr.bf16.mxu0 0
    %3107 = vmatmul.mubr.bf16.gmra.mxu0 %v3046
    %v3108 = vpop.f32.mrf.mxu0
    %v3109 = vadd.f32 %v3016, %v3108
    %v3110 = vpop.f32.mrf.mxu0
    %v3111 = vpop.f32.mrf.mxu0
    %v3112 = vadd.f32 %v3016, %v3111
    %v3113 = vpop.f32.mrf.mxu0
    %3114 = vmatprep.mubr.bf16.mxu0 0
    %3115 = vmatmul.mubr.bf16.gmra.mxu0 %v3048
    %v3116 = vpop.f32.mrf.mxu0
    %v3117 = vadd.f32 %v3016, %v3116
    %v3118 = vpop.f32.mrf.mxu0
    %v3119 = vpop.f32.mrf.mxu0
    %v3120 = vadd.f32 %v3016, %v3119
    %v3121 = vpop.f32.mrf.mxu0
    %3122 = vmatprep.mubr.bf16.mxu0 0
    %3123 = vmatmul.mubr.bf16.gmra.mxu0 %v3050
    %v3124 = vpop.f32.mrf.mxu0
    %v3125 = vadd.f32 %v3016, %v3124
    %v3126 = vpop.f32.mrf.mxu0
    %v3127 = vpop.f32.mrf.mxu0
    %v3128 = vadd.f32 %v3016, %v3127
    %v3129 = vpop.f32.mrf.mxu0
    %3130 = vmatprep.mubr.bf16.mxu0 0
    %3131 = vmatmul.mubr.bf16.gmra.mxu0 %v3052
    %v3132 = vpop.f32.mrf.mxu0
    %v3133 = vadd.f32 %v3016, %v3132
    %v3134 = vpop.f32.mrf.mxu0
    %v3135 = vpop.f32.mrf.mxu0
    %v3136 = vadd.f32 %v3016, %v3135
    %v3137 = vpop.f32.mrf.mxu0
    %3138 = vmatprep.mubr.bf16.mxu0 0
    %3139 = vmatmul.mubr.bf16.gmra.mxu0 %v3054
    %v3140 = vpop.f32.mrf.mxu0
    %v3141 = vadd.f32 %v3016, %v3140
    %v3142 = vpop.f32.mrf.mxu0
    %v3143 = vpop.f32.mrf.mxu0
    %v3144 = vadd.f32 %v3016, %v3143
    %v3145 = vpop.f32.mrf.mxu0
    %3146 = vmatprep.mubr.bf16.mxu0 0
    %3147 = vmatmul.mubr.bf16.gmra.mxu0 %v3056
    %v3148 = vpop.f32.mrf.mxu0
    %v3149 = vadd.f32 %v3016, %v3148
    %v3150 = vpop.f32.mrf.mxu0
    %v3151 = vpop.f32.mrf.mxu0
    %v3152 = vadd.f32 %v3016, %v3151
    %v3153 = vpop.f32.mrf.mxu0
    %3154 = vdwg.mxu0
    %v3155 = vmax.f32 %v3093, 0.0
    %v3156 = vmax.f32 %v3096, 0.0
    %v3157 = vmax.f32 %v3101, 0.0
    %v3158 = vmax.f32 %v3104, 0.0
    %v3159 = vmax.f32 %v3109, 0.0
    %v3160 = vmax.f32 %v3112, 0.0
    %v3161 = vmax.f32 %v3117, 0.0
    %v3162 = vmax.f32 %v3120, 0.0
    %v3163 = vmax.f32 %v3125, 0.0
    %v3164 = vmax.f32 %v3128, 0.0
    %v3165 = vmax.f32 %v3133, 0.0
    %v3166 = vmax.f32 %v3136, 0.0
    %v3167 = vmax.f32 %v3141, 0.0
    %v3168 = vmax.f32 %v3144, 0.0
    %v3169 = vmax.f32 %v3149, 0.0
    %v3170 = vmax.f32 %v3152, 0.0
    %v3171 = vsel %vm56, %v3155, 0.0
    %v3172 = vsel %vm56, %v3156, 0.0
    %v3173 = vadd.f32 %v3171, %v3172
    %v3174 = vsel %vm56, %v3157, 0.0
    %v3175 = vadd.f32 %v3173, %v3174
    %v3176 = vsel %vm56, %v3158, 0.0
    %v3177 = vadd.f32 %v3175, %v3176
    %v3178 = vsel %vm56, %v3159, 0.0
    %v3179 = vadd.f32 %v3177, %v3178
    %v3180 = vsel %vm56, %v3160, 0.0
    %v3181 = vadd.f32 %v3179, %v3180
    %v3182 = vsel %vm56, %v3161, 0.0
    %v3183 = vadd.f32 %v3181, %v3182
    %v3184 = vsel %vm56, %v3162, 0.0
    %v3185 = vadd.f32 %v3183, %v3184
    %v3186 = vrot.slane %v3185, 4
    %v3187 = vadd.f32 %v3185, %v3186
    %v3188 = vrot.slane %v3187, 2
    %v3189 = vadd.f32 %v3187, %v3188
    %v3190 = vrot.slane %v3189, 1
    %v3191 = vadd.f32 %v3189, %v3190
    %v3192 = vsel %vm56, %v3163, 0.0
    %v3193 = vsel %vm56, %v3164, 0.0
    %v3194 = vadd.f32 %v3192, %v3193
    %v3195 = vsel %vm56, %v3165, 0.0
    %v3196 = vadd.f32 %v3194, %v3195
    %v3197 = vsel %vm56, %v3166, 0.0
    %v3198 = vadd.f32 %v3196, %v3197
    %v3199 = vsel %vm56, %v3167, 0.0
    %v3200 = vadd.f32 %v3198, %v3199
    %v3201 = vsel %vm56, %v3168, 0.0
    %v3202 = vadd.f32 %v3200, %v3201
    %v3203 = vsel %vm56, %v3169, 0.0
    %v3204 = vadd.f32 %v3202, %v3203
    %v3205 = vsel %vm56, %v3170, 0.0
    %v3206 = vadd.f32 %v3204, %v3205
    %v3207 = vrot.slane %v3206, 4
    %v3208 = vadd.f32 %v3206, %v3207
    %v3209 = vrot.slane %v3208, 2
    %v3210 = vadd.f32 %v3208, %v3209
    %v3211 = vrot.slane %v3210, 1
    %v3212 = vadd.f32 %v3210, %v3211
    %v3213 = vrcp.pop 64.0
    %v3214 = vmul.f32 %v3191, %v3213
    %v3215 = vmul.f32 %v3212, %v3213
    %v3216 = vld [vmem:[%s9] sm:$0xff]
    %v3217 = vld [vmem:[%s9 + $0x8] sm:$0xff]
    %v3218 = vld [vmem:[%s10] sm:$0x1]
    %v3220 = vlaneseq
    %v3221 = vshrl.u32 %v3220, 7
    %v3222 = vsub.s32 0, %v3221
    %v3223 = vrot.slane %v3218, %v3222
    %vm3227 = vcmask 1041409
    %v3228 = vsel %vm3227, %v3215, %v3214
    %v3229 = vsel %vm56, %v3228, 0
    %3231 = vmatprep.subr.mxu0 0.0
    %3232 = vmatpush1.msra.mxu0 0.0
    %3233 = vmatprep.subr.mxu0 0.0
    %3234 = vmatpush1.msra.mxu0 0.0
    %3235 = vmatprep.subr.mxu0 0.0
    %3236 = vmatpush1.msra.mxu0 0.0
    %3237 = vmatprep.subr.mxu0 0.0
    %3238 = vmatpush1.msra.mxu0 0.0
    %3239 = vmatprep.subr.mxu0 0.0
    %3240 = vmatpush1.msra.mxu0 0.0
    %3241 = vmatprep.subr.mxu0 0.0
    %3242 = vmatpush1.msra.mxu0 0.0
    %3243 = vmatprep.subr.mxu0 0.0
    %3244 = vmatpush1.msra.mxu0 0.0
    %3245 = vmatprep.subr.mxu0 0.0
    %3246 = vmatpush1.msra.mxu0 0.0
    %3247 = vmatprep.subr.mxu0 0.0
    %3248 = vmatpush1.msra.mxu0 0.0
    %3249 = vmatprep.subr.mxu0 0.0
    %3250 = vmatpush1.msra.mxu0 0.0
    %3251 = vmatprep.subr.mxu0 0.0
    %3252 = vmatpush1.msra.mxu0 0.0
    %3253 = vmatprep.subr.mxu0 0.0
    %3254 = vmatpush1.msra.mxu0 0.0
    %3255 = vmatprep.subr.mxu0 0.0
    %3256 = vmatpush1.msra.mxu0 0.0
    %3257 = vmatprep.subr.mxu0 0.0
    %3258 = vmatpush1.msra.mxu0 0.0
    %3259 = vmatprep.subr.mxu0 0.0
    %3260 = vmatpush1.msra.mxu0 %v3217
    %3261 = vmatprep.subr.mxu0 0.0
    %3262 = vmatpush1.msra.mxu0 %v3216
    %3263 = vmatprep.subr.mxu0 0.0
    %3264 = vmatpush2.msra.mxu0 0.0
    %3265 = vmatprep.subr.mxu0 0.0
    %3266 = vmatpush2.msra.mxu0 0.0
    %3267 = vmatprep.subr.mxu0 0.0
    %3268 = vmatpush2.msra.mxu0 0.0
    %3269 = vmatprep.subr.mxu0 0.0
    %3270 = vmatpush2.msra.mxu0 0.0
    %3271 = vmatprep.subr.mxu0 0.0
    %3272 = vmatpush2.msra.mxu0 0.0
    %3273 = vmatprep.subr.mxu0 0.0
    %3274 = vmatpush2.msra.mxu0 0.0
    %3275 = vmatprep.subr.mxu0 0.0
    %3276 = vmatpush2.msra.mxu0 0.0
    %3277 = vmatprep.subr.mxu0 0.0
    %3278 = vmatpush2.msra.mxu0 0.0
    %3279 = vmatprep.subr.mxu0 0.0
    %3280 = vmatpush2.msra.mxu0 0.0
    %3281 = vmatprep.subr.mxu0 0.0
    %3282 = vmatpush2.msra.mxu0 0.0
    %3283 = vmatprep.subr.mxu0 0.0
    %3284 = vmatpush2.msra.mxu0 0.0
    %3285 = vmatprep.subr.mxu0 0.0
    %3286 = vmatpush2.msra.mxu0 0.0
    %3287 = vmatprep.subr.mxu0 0.0
    %3288 = vmatpush2.msra.mxu0 0.0
    %3289 = vmatprep.subr.mxu0 0.0
    %3290 = vmatpush2.msra.mxu0 0.0
    %3291 = vmatprep.subr.mxu0 0.0
    %3292 = vmatpush2.msra.mxu0 0.0
    %3293 = vmatprep.subr.mxu0 0.0
    %3294 = vmatpush2.msra.mxu0 0.0
    %3295 = vmatprep.mubr.f32.mxu0 0.0
    %3296 = vmatmul.mubr.f32.gmra.mxu0 %v3229
    %v3297 = vpop.f32.mrf.mxu0
    %v3298 = vadd.f32 %v3223, %v3297
    %v3299 = vpop.f32.mrf.mxu0
    %3300 = vdwg.mxu0
    %v3301 = vxor.u32 %v3298, 2147483648
    %v3302 = vmul.f32 %v3301, 1.442695
    %v3303 = vpow.pop %v3302
    %v3304 = vadd.f32 %v3303, 1.0
    %v3305 = vrcp.pop %v3304
    %v3306 = vmul.f32 1.0, %v3305
    %v3309 = vunpack.c.l.s4 1966171168
    %v3310 = vunpack.c.0.s8 %v3309
    %v3311 = vlaneseq
    %v3312 = vshrl.u32 %v3311, 7
    %v3313 = vsub.s32 %v3310, %v3312
    %v3314 = vrot.slane %v3306, %v3313
    %v3315 = vcombine.high %v3314, %v3314
    %v3317 = vunpack.c.l.s4 1966171168
    %v3318 = vunpack.c.0.s8 %v3317
    %v3319 = vlaneseq
    %v3320 = vshrl.u32 %v3319, 7
    %v3321 = vsub.s32 %v3318, %v3320
    %v3322 = vrot.slane %v3314, %v3321
    %v3324 = vunpack.c.l.s4 1966171168
    %v3325 = vunpack.c.0.s8 %v3324
    %v3326 = vlaneseq
    %v3327 = vshrl.u32 %v3326, 7
    %v3328 = vsub.s32 %v3325, %v3327
    %v3329 = vrot.slane %v3315, %v3328
    %v3330 = vlaneseq
    %v3331 = vshrl.u32 %v3330, 7
    %v3332 = vsub.s32 0, %v3331
    %v3333 = vrot.slane %v3322, %v3332
    %v3334 = vlaneseq
    %v3335 = vshrl.u32 %v3334, 7
    %v3336 = vsub.s32 0, %v3335
    %v3337 = vrot.slane %v3329, %v3336
    %v3340 = vmul.f32 %v3155, %v3333
    %v3341 = vmul.f32 %v3156, %v3333
    %v3342 = vmul.f32 %v3157, %v3333
    %v3343 = vmul.f32 %v3158, %v3333
    %v3344 = vmul.f32 %v3159, %v3333
    %v3345 = vmul.f32 %v3160, %v3333
    %v3346 = vmul.f32 %v3161, %v3333
    %v3347 = vmul.f32 %v3162, %v3333
    %v3348 = vmul.f32 %v3163, %v3337
    %v3349 = vmul.f32 %v3164, %v3337
    %v3350 = vmul.f32 %v3165, %v3337
    %v3351 = vmul.f32 %v3166, %v3337
    %v3352 = vmul.f32 %v3167, %v3337
    %v3353 = vmul.f32 %v3168, %v3337
    %v3354 = vmul.f32 %v3169, %v3337
    %v3355 = vmul.f32 %v3170, %v3337
    %v3356 = vadd.f32 %v3340, %v40
    %v3357 = vadd.f32 %v3341, %v41
    %v3358 = vadd.f32 %v3342, %v42
    %v3359 = vadd.f32 %v3343, %v43
    %v3360 = vadd.f32 %v3344, %v44
    %v3361 = vadd.f32 %v3345, %v45
    %v3362 = vadd.f32 %v3346, %v46
    %v3363 = vadd.f32 %v3347, %v47
    %v3364 = vadd.f32 %v3348, %v48
    %v3365 = vadd.f32 %v3349, %v49
    %v3366 = vadd.f32 %v3350, %v50
    %v3367 = vadd.f32 %v3351, %v51
    %v3368 = vadd.f32 %v3352, %v52
    %v3369 = vadd.f32 %v3353, %v53
    %v3370 = vadd.f32 %v3354, %v54
    %v3371 = vadd.f32 %v3355, %v55
    %3372 = vst.msk [vmem:[#allocation3] sm:$0xff] %vm56, %v3356
    %3373 = vst.msk [vmem:[#allocation3 + $0x8] sm:$0xff] %vm56, %v3357
    %3374 = vst.msk [vmem:[#allocation3 + $0x10] sm:$0xff] %vm56, %v3358
    %3375 = vst.msk [vmem:[#allocation3 + $0x18] sm:$0xff] %vm56, %v3359
    %3376 = vst.msk [vmem:[#allocation3 + $0x20] sm:$0xff] %vm56, %v3360
    %3377 = vst.msk [vmem:[#allocation3 + $0x28] sm:$0xff] %vm56, %v3361
    %3378 = vst.msk [vmem:[#allocation3 + $0x30] sm:$0xff] %vm56, %v3362
    %3379 = vst.msk [vmem:[#allocation3 + $0x38] sm:$0xff] %vm56, %v3363
    %3380 = vst.msk [vmem:[#allocation3 + $0x40] sm:$0xff] %vm56, %v3364
    %3381 = vst.msk [vmem:[#allocation3 + $0x48] sm:$0xff] %vm56, %v3365
    %3382 = vst.msk [vmem:[#allocation3 + $0x50] sm:$0xff] %vm56, %v3366
    %3383 = vst.msk [vmem:[#allocation3 + $0x58] sm:$0xff] %vm56, %v3367
    %3384 = vst.msk [vmem:[#allocation3 + $0x60] sm:$0xff] %vm56, %v3368
    %3385 = vst.msk [vmem:[#allocation3 + $0x68] sm:$0xff] %vm56, %v3369
    %3386 = vst.msk [vmem:[#allocation3 + $0x70] sm:$0xff] %vm56, %v3370
    %3387 = vst.msk [vmem:[#allocation3 + $0x78] sm:$0xff] %vm56, %v3371
    // Predicated region
    $region46: #{tpu_custom_call.1} parent=1 // pred_check
      _
    $region47: #{tpu_custom_call.1} parent=1 // pred_check_branch
      %3389 = sbr.rel (0) target = $region49
    $region48: #{tpu_custom_call.1} parent=1 // pred_region
      %s3391 = ssub.s32 2048, 2048
      %3392 = vsyncadd [#allocation4], %s3391
      %s3393 = sshll.u32 [#allocation3], 4
      %s3394 = int_to_ptr.vmem [resolvable:$true] %s3393
      %3399 = dma.vmem_to_hbm [thread:$0]  %s3394, 2048, %s11, [#allocation4], 128, 128, 8
    $region49: #{tpu_custom_call.1} parent=1 // pred_fallthru
      _
    // Predicated region
    $region50: #{tpu_custom_call.1} parent=1 // pred_check
      _
    $region51: #{tpu_custom_call.1} parent=1 // pred_check_branch
      %3401 = sbr.rel (0) target = $region53
    $region52: #{tpu_custom_call.1} parent=1 // pred_region
      %3402 = dma.done [#allocation4], 2048
    $region53: #{tpu_custom_call.1} parent=1 // pred_fallthru
      _
    %3403 = vsyncpa [#allocation4], 1

</llo_original>
